<compile_context>
chip_gen: v6e
topology: v6e:2x2x1
jax: 0.10.0
libtpu: 0.0.40
codegen_flags: <defaults>
</compile_context>

<pallas_src>
import numpy as np
import jax
import jax.numpy as jnp
from jax import lax
from jax.experimental import pallas as pl
from jax.experimental.pallas import tpu as pltpu

# ---- ToyACmem.BASE_CONFIG ----
MEM_SIZE = 16          # memory_size
EMB = 12               # expanded_memory_emb_size
STATE_SIZE = 4         # state_size
SUMM_HID = 200         # summarizer_hidden_size
SHARED_HID = 200       # shared_AC_hidden_size
PROC_HID = 100         # processor_hidden_size
N_ACTIONS = 5
CONCAT = True          # config['concat']


def _toy_ac_mem_kernel(
    # data
    state_ref, mem_ref, pe_ref,
    # embedder
    emb_w, emb_b,
    # fused reader|writer Summarizer MLP:
    #   rw_w1 (12,400) = [rd_w1 | wr_w1],  rw_b1 (1,400)
    #   rw_w2 (400,17) block-diag: rows 0:200 -> col 16 (reader), rows 200:400 -> cols 0:16 (writer)
    rw_w1, rw_b1, rw_w2, rw_b2,
    # shared layer split into row blocks of the original (24,200) weight
    sh_w_st, sh_w_ms, sh_b,
    # fused actor|critic head (200,6): cols 0:5 actor, col 5 critic
    ac_cr_w, ac_cr_b,
    # processor L1 split into row blocks of the original (30,100) weight
    pr_w1_st, pr_w1_ms, pr_w1_pr, pr_w1_vl, pr_b1,
    # processor L2
    pr_w2, pr_b2,
    # outputs
    pv_ref, newmem_ref,
):
    f32 = jnp.float32
    bs = state_ref.shape[0]

    def dot(a, b):
        return jnp.dot(a, b, preferred_element_type=f32)

    def dotc0(a, b):
        # contract dim 0 of both operands: out[j, d] = sum_p a[p, j] * b[p, d]
        return lax.dot_general(a, b, (((0,), (0,)), ((), ())),
                               preferred_element_type=f32)

    # ---- invariant loads (hoisted once, live across the unrolled loop) ----
    pe = pe_ref[...]                                   # (16, 12)
    W1, B1 = rw_w1[...], rw_b1[...]
    W2, B2 = rw_w2[...], rw_b2[...]
    shW_ms, shB = sh_w_ms[...], sh_b[...]
    acrW, acrB = ac_cr_w[...], ac_cr_b[...]
    prW_ms, prW_pr, prW_vl, prB1 = pr_w1_ms[...], pr_w1_pr[...], pr_w1_vl[...], pr_b1[...]
    prW2, prB2 = pr_w2[...], pr_b2[...]

    # ---- batch-level work hoisted out of the recurrent loop (memory-independent) ----
    st_all = dot(state_ref[...], emb_w[...]) + emb_b[...]      # embedder          (bs, 12)
    h_st_all = jnp.maximum(dot(st_all, W1) + B1, 0.0)          # summarizer L1(st) (bs, 400)
    l_st_all = dot(h_st_all, W2) + B2                          # summarizer L2(st) (bs, 17)
    out_st_all = dot(st_all, sh_w_st[...])                     # shared partial    (bs, 200)
    proc_st_all = dot(st_all, pr_w1_st[...])                   # processor partial (bs, 100)

    memory = mem_ref[...]                                      # (16, 12) recurrent carry
    pv_rows = []

    # bs is small & static: full Python unroll gives the scheduler cross-step visibility
    for i in range(bs):
        st = st_all[i:i + 1, :]                                # (1, 12)
        l_st = l_st_all[i:i + 1, :]                            # (1, 17)

        pe_mem = memory + pe                                   # positional_encoder(new_memory)
        h_mem = jnp.maximum(dot(pe_mem, W1) + B1, 0.0)         # (16, 400)  shared by reader+writer
        l_mem = dot(h_mem, W2) + B2                            # (16, 17)

        # -------- reader Summarizer: column softmax over the 17 rows [st ; PE(mem)] --------
        r_st = l_st[:, MEM_SIZE:MEM_SIZE + 1]                  # (1, 1)
        r_mem = l_mem[:, MEM_SIZE:MEM_SIZE + 1]                # (16, 1)
        m_r = jnp.maximum(jnp.max(r_mem, axis=0, keepdims=True), r_st)
        e_st_r = jnp.exp(r_st - m_r)
        e_mem_r = jnp.exp(r_mem - m_r)
        inv_r = pl.reciprocal(jnp.sum(e_mem_r, axis=0, keepdims=True) + e_st_r,
                              approx=True)
        mem_state = (e_st_r * inv_r) * st + dotc0(e_mem_r * inv_r, pe_mem)    # (1, 12)

        # -------- shared + fused actor|critic heads (split-weight dots, no lane concat) ---
        out = jnp.maximum(out_st_all[i:i + 1, :] + dot(mem_state, shW_ms) + shB, 0.0)  # (1, 200)
        log6 = dot(out, acrW) + acrB                           # (1, 6)
        logits = log6[:, 0:N_ACTIONS]                          # (1, 5)
        value = log6[:, N_ACTIONS:N_ACTIONS + 1]               # (1, 1)
        le = jnp.exp(logits - jnp.max(logits, axis=-1, keepdims=True))
        probs = le * pl.reciprocal(jnp.sum(le, axis=-1, keepdims=True), approx=True)   # (1, 5)

        # -------- processor MLP (30 -> 100 -> 12) as partial dots on W1 row blocks -------
        ph = jnp.maximum(proc_st_all[i:i + 1, :] + dot(mem_state, prW_ms)
                         + dot(probs, prW_pr) + value * prW_vl + prB1, 0.0)            # (1, 100)
        mem_state2 = dot(ph, prW2) + prB2                      # (1, 12)

        # -------- writer Summarizer: softmax over 18 rows [st ; mem_state2 ; PE(mem)] ----
        h_ms2 = jnp.maximum(dot(mem_state2, W1) + B1, 0.0)     # (1, 400)
        l_ms2 = dot(h_ms2, W2) + B2                            # (1, 17)
        wl_st = l_st[:, 0:MEM_SIZE]                            # (1, 16)
        wl_ms2 = l_ms2[:, 0:MEM_SIZE]                          # (1, 16)
        wl_mem = l_mem[:, 0:MEM_SIZE]                          # (16, 16)
        m_w = jnp.maximum(jnp.maximum(jnp.max(wl_mem, axis=0, keepdims=True), wl_st), wl_ms2)
        e_st_w = jnp.exp(wl_st - m_w)
        e_ms2_w = jnp.exp(wl_ms2 - m_w)
        e_mem_w = jnp.exp(wl_mem - m_w)
        inv_w = pl.reciprocal(jnp.sum(e_mem_w, axis=0, keepdims=True) + e_st_w + e_ms2_w,
                              approx=True)                     # (1, 16)
        new_mem = (dotc0(e_st_w * inv_w, st)
                   + dotc0(e_ms2_w * inv_w, mem_state2)
                   + dotc0(e_mem_w * inv_w, pe_mem))           # (16, 12)

        # per-slot min/max normalization over the embedding dim (no epsilon, as in reference)
        new_mem = new_mem - jnp.min(new_mem, axis=-1, keepdims=True)
        new_mem = new_mem * pl.reciprocal(jnp.max(new_mem, axis=-1, keepdims=True),
                                          approx=True)

        memory = new_mem
        pv_rows.append(jnp.concatenate([probs, value], axis=-1))   # (1, 6)

    # single store of all per-batch outputs; memory written once at the end
    pv_ref[...] = jnp.concatenate(pv_rows, axis=0)                 # (bs, 6)
    newmem_ref[...] = memory


def toy_ac_mem_forward(state, memory, pe, fused_params):
    """Returns (action_probs (bs,5), state_values (bs,1), updated memory (16,12))."""
    bs = state.shape[0]
    flat_in = [state, memory, pe] + list(fused_params)
    vmem = pl.BlockSpec(memory_space=pltpu.MemorySpace.VMEM)
    pv, new_memory = pl.pallas_call(
        _toy_ac_mem_kernel,
        out_shape=(
            jax.ShapeDtypeStruct((bs, N_ACTIONS + 1), jnp.float32),
            jax.ShapeDtypeStruct((MEM_SIZE, EMB), jnp.float32),
        ),
        in_specs=[vmem] * len(flat_in),
        out_specs=(vmem, vmem),
    )(*flat_in)
    return pv[:, 0:N_ACTIONS], pv[:, N_ACTIONS:N_ACTIONS + 1], new_memory


# ------------------------- parameter construction -------------------------

def _linear_init(key, fan_in, fan_out):
    # PyTorch nn.Linear default: U(-1/sqrt(fan_in), 1/sqrt(fan_in)) for W and b.
    k1, k2 = jax.random.split(key)
    bound = 1.0 / np.sqrt(fan_in)
    w = jax.random.uniform(k1, (fan_in, fan_out), jnp.float32, -bound, bound)
    b = jax.random.uniform(k2, (1, fan_out), jnp.float32, -bound, bound)
    return w, b


def init_params(key):
    keys = jax.random.split(key, 10)
    emb = _linear_init(keys[0], STATE_SIZE, EMB)                    # embedder 4 -> 12
    rd1 = _linear_init(keys[1], EMB, SUMM_HID)                      # reader mlp 12 -> 200
    rd2 = _linear_init(keys[2], SUMM_HID, 1)                        # reader mlp 200 -> 1
    wr1 = _linear_init(keys[3], EMB, SUMM_HID)                      # writer mlp 12 -> 200
    wr2 = _linear_init(keys[4], SUMM_HID, MEM_SIZE)                 # writer mlp 200 -> 16
    fstate = 2 * EMB if CONCAT else EMB
    sh = _linear_init(keys[5], fstate, SHARED_HID)                  # shared 24 -> 200
    ac = _linear_init(keys[6], SHARED_HID, N_ACTIONS)               # actor 200 -> 5
    cr = _linear_init(keys[7], SHARED_HID, 1)                       # critic 200 -> 1
    pr1 = _linear_init(keys[8], N_ACTIONS + 1 + 2 * EMB, PROC_HID)  # processor 30 -> 100
    pr2 = _linear_init(keys[9], PROC_HID, EMB)                      # processor 100 -> 12
    return (emb[0], emb[1],
            rd1[0], rd1[1], rd2[0], rd2[1],
            wr1[0], wr1[1], wr2[0], wr2[1],
            sh[0], sh[1], ac[0], ac[1], cr[0], cr[1],
            pr1[0], pr1[1], pr2[0], pr2[1])


def prepare_params(params):
    """Fuse / split the raw PyTorch-layout weights for the optimized kernel (done once)."""
    (emb_w, emb_b,
     rd_w1, rd_b1, rd_w2, rd_b2,
     wr_w1, wr_b1, wr_w2, wr_b2,
     sh_w, sh_b, ac_w, ac_b, cr_w, cr_b,
     pr_w1, pr_b1, pr_w2, pr_b2) = params

    # fused reader|writer summarizer first layer
    rw_w1 = jnp.concatenate([rd_w1, wr_w1], axis=1)                 # (12, 400)
    rw_b1 = jnp.concatenate([rd_b1, wr_b1], axis=1)                 # (1, 400)
    # block-diagonal second layer: reader-hidden -> col 16, writer-hidden -> cols 0:16
    rw_w2 = jnp.zeros((2 * SUMM_HID, MEM_SIZE + 1), jnp.float32)
    rw_w2 = rw_w2.at[:SUMM_HID, MEM_SIZE:MEM_SIZE + 1].set(rd_w2)
    rw_w2 = rw_w2.at[SUMM_HID:, :MEM_SIZE].set(wr_w2)
    rw_b2 = jnp.concatenate([wr_b2, rd_b2], axis=1)                 # (1, 17)

    # shared layer split along its input (st | mem_state)
    sh_w_st, sh_w_ms = sh_w[:EMB], sh_w[EMB:]                       # (12,200) each

    # fused actor|critic heads
    ac_cr_w = jnp.concatenate([ac_w, cr_w], axis=1)                 # (200, 6)
    ac_cr_b = jnp.concatenate([ac_b, cr_b], axis=1)                 # (1, 6)

    # processor first layer split along its input (st | mem_state | probs | value)
    pr_w1_st = pr_w1[:EMB]                                          # (12, 100)
    pr_w1_ms = pr_w1[EMB:2 * EMB]                                   # (12, 100)
    pr_w1_pr = pr_w1[2 * EMB:2 * EMB + N_ACTIONS]                   # (5, 100)
    pr_w1_vl = pr_w1[2 * EMB + N_ACTIONS:]                          # (1, 100)

    return (emb_w, emb_b,
            rw_w1, rw_b1, rw_w2, rw_b2,
            sh_w_st, sh_w_ms, sh_b,
            ac_cr_w, ac_cr_b,
            pr_w1_st, pr_w1_ms, pr_w1_pr, pr_w1_vl, pr_b1,
            pr_w2, pr_b2)


def positional_encoding_table(n_pos, d_model):
    pos = np.arange(n_pos, dtype=np.float32)[:, None]
    div = np.exp(np.arange(0, d_model, 2, dtype=np.float32)
                 * (-np.log(10000.0) / d_model))
    pe = np.zeros((n_pos, d_model), np.float32)
    pe[:, 0::2] = np.sin(pos * div)
    pe[:, 1::2] = np.cos(pos * div)
    return jnp.asarray(pe)


if __name__ == "__main__":
    key = jax.random.PRNGKey(0)
    k_state, k_mem, k_params = jax.random.split(key, 3)

    bs = 2
    state = jax.random.uniform(k_state, (bs, STATE_SIZE), jnp.float32)      # (2, 4)
    memory = jax.random.uniform(k_mem, (MEM_SIZE, EMB), jnp.float32)        # buffer U(0,1)
    pe = positional_encoding_table(MEM_SIZE, EMB)
    fused_params = prepare_params(init_params(k_params))

    fwd = jax.jit(toy_ac_mem_forward)
    action_probs, state_values, new_memory = fwd(state, memory, pe, fused_params)
    jax.block_until_ready((action_probs, state_values, new_memory))

    assert action_probs.shape == (bs, N_ACTIONS)
    assert state_values.shape == (bs, 1)
    assert new_memory.shape == (MEM_SIZE, EMB)
    print("KERNEL_OK")
</pallas_src>

<mosaic_0001>
module attributes {stable_mosaic.version = 11 : i64} {
  func.func @_toy_ac_mem_kernel(%arg0: memref<2x4xf32, #tpu.memory_space<vmem>>, %arg1: memref<16x12xf32, #tpu.memory_space<vmem>>, %arg2: memref<16x12xf32, #tpu.memory_space<vmem>>, %arg3: memref<4x12xf32, #tpu.memory_space<vmem>>, %arg4: memref<1x12xf32, #tpu.memory_space<vmem>>, %arg5: memref<12x400xf32, #tpu.memory_space<vmem>>, %arg6: memref<1x400xf32, #tpu.memory_space<vmem>>, %arg7: memref<400x17xf32, #tpu.memory_space<vmem>>, %arg8: memref<1x17xf32, #tpu.memory_space<vmem>>, %arg9: memref<12x200xf32, #tpu.memory_space<vmem>>, %arg10: memref<12x200xf32, #tpu.memory_space<vmem>>, %arg11: memref<1x200xf32, #tpu.memory_space<vmem>>, %arg12: memref<200x6xf32, #tpu.memory_space<vmem>>, %arg13: memref<1x6xf32, #tpu.memory_space<vmem>>, %arg14: memref<12x100xf32, #tpu.memory_space<vmem>>, %arg15: memref<12x100xf32, #tpu.memory_space<vmem>>, %arg16: memref<5x100xf32, #tpu.memory_space<vmem>>, %arg17: memref<1x100xf32, #tpu.memory_space<vmem>>, %arg18: memref<1x100xf32, #tpu.memory_space<vmem>>, %arg19: memref<100x12xf32, #tpu.memory_space<vmem>>, %arg20: memref<1x12xf32, #tpu.memory_space<vmem>>, %arg21: memref<2x6xf32, #tpu.memory_space<vmem>>, %arg22: memref<16x12xf32, #tpu.memory_space<vmem>>) attributes {dimension_semantics = [], scalar_prefetch = 0 : i64, scratch_operands = 0 : i64, tpu.core_type = #tpu.core_type<tc>} {
    %c0 = arith.constant 0 : index
    %c0_0 = arith.constant 0 : index
    %0 = vector.load %arg2[%c0, %c0_0] : memref<16x12xf32, #tpu.memory_space<vmem>>, vector<16x12xf32>
    %c0_1 = arith.constant 0 : index
    %c0_2 = arith.constant 0 : index
    %1 = vector.load %arg5[%c0_1, %c0_2] : memref<12x400xf32, #tpu.memory_space<vmem>>, vector<12x400xf32>
    %c0_3 = arith.constant 0 : index
    %c0_4 = arith.constant 0 : index
    %2 = vector.load %arg6[%c0_3, %c0_4] : memref<1x400xf32, #tpu.memory_space<vmem>>, vector<1x400xf32>
    %c0_5 = arith.constant 0 : index
    %c0_6 = arith.constant 0 : index
    %3 = vector.load %arg7[%c0_5, %c0_6] : memref<400x17xf32, #tpu.memory_space<vmem>>, vector<400x17xf32>
    %c0_7 = arith.constant 0 : index
    %c0_8 = arith.constant 0 : index
    %4 = vector.load %arg8[%c0_7, %c0_8] : memref<1x17xf32, #tpu.memory_space<vmem>>, vector<1x17xf32>
    %c0_9 = arith.constant 0 : index
    %c0_10 = arith.constant 0 : index
    %5 = vector.load %arg10[%c0_9, %c0_10] : memref<12x200xf32, #tpu.memory_space<vmem>>, vector<12x200xf32>
    %c0_11 = arith.constant 0 : index
    %c0_12 = arith.constant 0 : index
    %6 = vector.load %arg11[%c0_11, %c0_12] : memref<1x200xf32, #tpu.memory_space<vmem>>, vector<1x200xf32>
    %c0_13 = arith.constant 0 : index
    %c0_14 = arith.constant 0 : index
    %7 = vector.load %arg12[%c0_13, %c0_14] : memref<200x6xf32, #tpu.memory_space<vmem>>, vector<200x6xf32>
    %c0_15 = arith.constant 0 : index
    %c0_16 = arith.constant 0 : index
    %8 = vector.load %arg13[%c0_15, %c0_16] : memref<1x6xf32, #tpu.memory_space<vmem>>, vector<1x6xf32>
    %c0_17 = arith.constant 0 : index
    %c0_18 = arith.constant 0 : index
    %9 = vector.load %arg15[%c0_17, %c0_18] : memref<12x100xf32, #tpu.memory_space<vmem>>, vector<12x100xf32>
    %c0_19 = arith.constant 0 : index
    %c0_20 = arith.constant 0 : index
    %10 = vector.load %arg16[%c0_19, %c0_20] : memref<5x100xf32, #tpu.memory_space<vmem>>, vector<5x100xf32>
    %c0_21 = arith.constant 0 : index
    %c0_22 = arith.constant 0 : index
    %11 = vector.load %arg17[%c0_21, %c0_22] : memref<1x100xf32, #tpu.memory_space<vmem>>, vector<1x100xf32>
    %c0_23 = arith.constant 0 : index
    %c0_24 = arith.constant 0 : index
    %12 = vector.load %arg18[%c0_23, %c0_24] : memref<1x100xf32, #tpu.memory_space<vmem>>, vector<1x100xf32>
    %c0_25 = arith.constant 0 : index
    %c0_26 = arith.constant 0 : index
    %13 = vector.load %arg19[%c0_25, %c0_26] : memref<100x12xf32, #tpu.memory_space<vmem>>, vector<100x12xf32>
    %c0_27 = arith.constant 0 : index
    %c0_28 = arith.constant 0 : index
    %14 = vector.load %arg20[%c0_27, %c0_28] : memref<1x12xf32, #tpu.memory_space<vmem>>, vector<1x12xf32>
    %c0_29 = arith.constant 0 : index
    %c0_30 = arith.constant 0 : index
    %15 = vector.load %arg0[%c0_29, %c0_30] : memref<2x4xf32, #tpu.memory_space<vmem>>, vector<2x4xf32>
    %c0_31 = arith.constant 0 : index
    %c0_32 = arith.constant 0 : index
    %16 = vector.load %arg3[%c0_31, %c0_32] : memref<4x12xf32, #tpu.memory_space<vmem>>, vector<4x12xf32>
    %cst = arith.constant dense<0.000000e+00> : vector<2x12xf32>
    %17 = tpu.matmul %15, %16, %cst {dimension_numbers = #tpu.dot_dimension_numbers<[1], [0], [0], [1], [0, 0, 1, 1], [], []>} : vector<2x4xf32>, vector<4x12xf32>, vector<2x12xf32> -> vector<2x12xf32>
    %c0_33 = arith.constant 0 : index
    %c0_34 = arith.constant 0 : index
    %18 = vector.load %arg4[%c0_33, %c0_34] : memref<1x12xf32, #tpu.memory_space<vmem>>, vector<1x12xf32>
    %19 = vector.broadcast %18 : vector<1x12xf32> to vector<2x12xf32>
    %20 = arith.addf %17, %19 : vector<2x12xf32>
    %cst_35 = arith.constant dense<0.000000e+00> : vector<2x400xf32>
    %21 = tpu.matmul %20, %1, %cst_35 {dimension_numbers = #tpu.dot_dimension_numbers<[1], [0], [0], [1], [0, 0, 1, 1], [], []>} : vector<2x12xf32>, vector<12x400xf32>, vector<2x400xf32> -> vector<2x400xf32>
    %22 = vector.broadcast %2 : vector<1x400xf32> to vector<2x400xf32>
    %23 = arith.addf %21, %22 : vector<2x400xf32>
    %cst_36 = arith.constant 0.000000e+00 : f32
    %24 = vector.broadcast %cst_36 : f32 to vector<2x400xf32>
    %25 = arith.maximumf %23, %24 : vector<2x400xf32>
    %cst_37 = arith.constant dense<0.000000e+00> : vector<2x17xf32>
    %26 = tpu.matmul %25, %3, %cst_37 {dimension_numbers = #tpu.dot_dimension_numbers<[1], [0], [0], [1], [0, 0, 1, 1], [], []>} : vector<2x400xf32>, vector<400x17xf32>, vector<2x17xf32> -> vector<2x17xf32>
    %27 = vector.broadcast %4 : vector<1x17xf32> to vector<2x17xf32>
    %28 = arith.addf %26, %27 : vector<2x17xf32>
    %c0_38 = arith.constant 0 : index
    %c0_39 = arith.constant 0 : index
    %29 = vector.load %arg9[%c0_38, %c0_39] : memref<12x200xf32, #tpu.memory_space<vmem>>, vector<12x200xf32>
    %cst_40 = arith.constant dense<0.000000e+00> : vector<2x200xf32>
    %30 = tpu.matmul %20, %29, %cst_40 {dimension_numbers = #tpu.dot_dimension_numbers<[1], [0], [0], [1], [0, 0, 1, 1], [], []>} : vector<2x12xf32>, vector<12x200xf32>, vector<2x200xf32> -> vector<2x200xf32>
    %c0_41 = arith.constant 0 : index
    %c0_42 = arith.constant 0 : index
    %31 = vector.load %arg14[%c0_41, %c0_42] : memref<12x100xf32, #tpu.memory_space<vmem>>, vector<12x100xf32>
    %cst_43 = arith.constant dense<0.000000e+00> : vector<2x100xf32>
    %32 = tpu.matmul %20, %31, %cst_43 {dimension_numbers = #tpu.dot_dimension_numbers<[1], [0], [0], [1], [0, 0, 1, 1], [], []>} : vector<2x12xf32>, vector<12x100xf32>, vector<2x100xf32> -> vector<2x100xf32>
    %c0_44 = arith.constant 0 : index
    %c0_45 = arith.constant 0 : index
    %33 = vector.load %arg1[%c0_44, %c0_45] : memref<16x12xf32, #tpu.memory_space<vmem>>, vector<16x12xf32>
    %34 = vector.extract_strided_slice %20 {offsets = [0, 0], sizes = [1, 12], strides = [1, 1]} : vector<2x12xf32> to vector<1x12xf32>
    %35 = vector.extract_strided_slice %28 {offsets = [0, 0], sizes = [1, 17], strides = [1, 1]} : vector<2x17xf32> to vector<1x17xf32>
    %36 = arith.addf %33, %0 : vector<16x12xf32>
    %cst_46 = arith.constant dense<0.000000e+00> : vector<16x400xf32>
    %37 = tpu.matmul %36, %1, %cst_46 {dimension_numbers = #tpu.dot_dimension_numbers<[1], [0], [0], [1], [0, 0, 1, 1], [], []>} : vector<16x12xf32>, vector<12x400xf32>, vector<16x400xf32> -> vector<16x400xf32>
    %38 = vector.broadcast %2 : vector<1x400xf32> to vector<16x400xf32>
    %39 = arith.addf %37, %38 : vector<16x400xf32>
    %cst_47 = arith.constant 0.000000e+00 : f32
    %40 = vector.broadcast %cst_47 : f32 to vector<16x400xf32>
    %41 = arith.maximumf %39, %40 : vector<16x400xf32>
    %cst_48 = arith.constant dense<0.000000e+00> : vector<16x17xf32>
    %42 = tpu.matmul %41, %3, %cst_48 {dimension_numbers = #tpu.dot_dimension_numbers<[1], [0], [0], [1], [0, 0, 1, 1], [], []>} : vector<16x400xf32>, vector<400x17xf32>, vector<16x17xf32> -> vector<16x17xf32>
    %43 = vector.broadcast %4 : vector<1x17xf32> to vector<16x17xf32>
    %44 = arith.addf %42, %43 : vector<16x17xf32>
    %45 = vector.extract_strided_slice %35 {offsets = [0, 16], sizes = [1, 1], strides = [1, 1]} : vector<1x17xf32> to vector<1x1xf32>
    %46 = vector.extract_strided_slice %44 {offsets = [0, 16], sizes = [16, 1], strides = [1, 1]} : vector<16x17xf32> to vector<16x1xf32>
    %cst_49 = arith.constant dense<0xFF800000> : vector<1xf32>
    %47 = vector.multi_reduction <maximumf>, %46, %cst_49 [0] : vector<16x1xf32> to vector<1xf32>
    %48 = vector.shape_cast %47 : vector<1xf32> to vector<1x1xf32>
    %49 = arith.maximumf %48, %45 : vector<1x1xf32>
    %50 = arith.subf %45, %49 : vector<1x1xf32>
    %51 = math.exp %50 : vector<1x1xf32>
    %52 = vector.broadcast %49 : vector<1x1xf32> to vector<16x1xf32>
    %53 = arith.subf %46, %52 : vector<16x1xf32>
    %54 = math.exp %53 : vector<16x1xf32>
    %cst_50 = arith.constant dense<0.000000e+00> : vector<1xf32>
    %55 = vector.multi_reduction <add>, %54, %cst_50 [0] : vector<16x1xf32> to vector<1xf32>
    %56 = vector.shape_cast %55 : vector<1xf32> to vector<1x1xf32>
    %57 = arith.addf %56, %51 : vector<1x1xf32>
    %58 = tpu.reciprocal %57 {approx = true} : vector<1x1xf32> -> vector<1x1xf32>
    %59 = arith.mulf %51, %58 : vector<1x1xf32>
    %60 = vector.broadcast %59 : vector<1x1xf32> to vector<1x12xf32>
    %61 = arith.mulf %60, %34 : vector<1x12xf32>
    %62 = vector.broadcast %58 : vector<1x1xf32> to vector<16x1xf32>
    %63 = arith.mulf %54, %62 : vector<16x1xf32>
    %cst_51 = arith.constant dense<0.000000e+00> : vector<1x12xf32>
    %64 = tpu.matmul %63, %36, %cst_51 {dimension_numbers = #tpu.dot_dimension_numbers<[0], [0], [1], [1], [0, 1, 1, 1], [], []>} : vector<16x1xf32>, vector<16x12xf32>, vector<1x12xf32> -> vector<1x12xf32>
    %65 = arith.addf %61, %64 : vector<1x12xf32>
    %66 = vector.extract_strided_slice %30 {offsets = [0, 0], sizes = [1, 200], strides = [1, 1]} : vector<2x200xf32> to vector<1x200xf32>
    %cst_52 = arith.constant dense<0.000000e+00> : vector<1x200xf32>
    %67 = tpu.matmul %65, %5, %cst_52 {dimension_numbers = #tpu.dot_dimension_numbers<[1], [0], [0], [1], [0, 0, 1, 1], [], []>} : vector<1x12xf32>, vector<12x200xf32>, vector<1x200xf32> -> vector<1x200xf32>
    %68 = arith.addf %66, %67 : vector<1x200xf32>
    %69 = arith.addf %68, %6 : vector<1x200xf32>
    %cst_53 = arith.constant 0.000000e+00 : f32
    %70 = vector.broadcast %cst_53 : f32 to vector<1x200xf32>
    %71 = arith.maximumf %69, %70 : vector<1x200xf32>
    %cst_54 = arith.constant dense<0.000000e+00> : vector<1x6xf32>
    %72 = tpu.matmul %71, %7, %cst_54 {dimension_numbers = #tpu.dot_dimension_numbers<[1], [0], [0], [1], [0, 0, 1, 1], [], []>} : vector<1x200xf32>, vector<200x6xf32>, vector<1x6xf32> -> vector<1x6xf32>
    %73 = arith.addf %72, %8 : vector<1x6xf32>
    %74 = vector.extract_strided_slice %73 {offsets = [0, 0], sizes = [1, 5], strides = [1, 1]} : vector<1x6xf32> to vector<1x5xf32>
    %75 = vector.extract_strided_slice %73 {offsets = [0, 5], sizes = [1, 1], strides = [1, 1]} : vector<1x6xf32> to vector<1x1xf32>
    %cst_55 = arith.constant dense<0xFF800000> : vector<1xf32>
    %76 = vector.multi_reduction <maximumf>, %74, %cst_55 [1] : vector<1x5xf32> to vector<1xf32>
    %77 = vector.shape_cast %76 : vector<1xf32> to vector<1x1xf32>
    %78 = vector.broadcast %77 : vector<1x1xf32> to vector<1x5xf32>
    %79 = arith.subf %74, %78 : vector<1x5xf32>
    %80 = math.exp %79 : vector<1x5xf32>
    %cst_56 = arith.constant dense<0.000000e+00> : vector<1xf32>
    %81 = vector.multi_reduction <add>, %80, %cst_56 [1] : vector<1x5xf32> to vector<1xf32>
    %82 = vector.shape_cast %81 : vector<1xf32> to vector<1x1xf32>
    %83 = tpu.reciprocal %82 {approx = true} : vector<1x1xf32> -> vector<1x1xf32>
    %84 = vector.broadcast %83 : vector<1x1xf32> to vector<1x5xf32>
    %85 = arith.mulf %80, %84 : vector<1x5xf32>
    %86 = vector.extract_strided_slice %32 {offsets = [0, 0], sizes = [1, 100], strides = [1, 1]} : vector<2x100xf32> to vector<1x100xf32>
    %cst_57 = arith.constant dense<0.000000e+00> : vector<1x100xf32>
    %87 = tpu.matmul %65, %9, %cst_57 {dimension_numbers = #tpu.dot_dimension_numbers<[1], [0], [0], [1], [0, 0, 1, 1], [], []>} : vector<1x12xf32>, vector<12x100xf32>, vector<1x100xf32> -> vector<1x100xf32>
    %88 = arith.addf %86, %87 : vector<1x100xf32>
    %cst_58 = arith.constant dense<0.000000e+00> : vector<1x100xf32>
    %89 = tpu.matmul %85, %10, %cst_58 {dimension_numbers = #tpu.dot_dimension_numbers<[1], [0], [0], [1], [0, 0, 1, 1], [], []>} : vector<1x5xf32>, vector<5x100xf32>, vector<1x100xf32> -> vector<1x100xf32>
    %90 = arith.addf %88, %89 : vector<1x100xf32>
    %91 = vector.broadcast %75 : vector<1x1xf32> to vector<1x100xf32>
    %92 = arith.mulf %91, %11 : vector<1x100xf32>
    %93 = arith.addf %90, %92 : vector<1x100xf32>
    %94 = arith.addf %93, %12 : vector<1x100xf32>
    %cst_59 = arith.constant 0.000000e+00 : f32
    %95 = vector.broadcast %cst_59 : f32 to vector<1x100xf32>
    %96 = arith.maximumf %94, %95 : vector<1x100xf32>
    %cst_60 = arith.constant dense<0.000000e+00> : vector<1x12xf32>
    %97 = tpu.matmul %96, %13, %cst_60 {dimension_numbers = #tpu.dot_dimension_numbers<[1], [0], [0], [1], [0, 0, 1, 1], [], []>} : vector<1x100xf32>, vector<100x12xf32>, vector<1x12xf32> -> vector<1x12xf32>
    %98 = arith.addf %97, %14 : vector<1x12xf32>
    %cst_61 = arith.constant dense<0.000000e+00> : vector<1x400xf32>
    %99 = tpu.matmul %98, %1, %cst_61 {dimension_numbers = #tpu.dot_dimension_numbers<[1], [0], [0], [1], [0, 0, 1, 1], [], []>} : vector<1x12xf32>, vector<12x400xf32>, vector<1x400xf32> -> vector<1x400xf32>
    %100 = arith.addf %99, %2 : vector<1x400xf32>
    %cst_62 = arith.constant 0.000000e+00 : f32
    %101 = vector.broadcast %cst_62 : f32 to vector<1x400xf32>
    %102 = arith.maximumf %100, %101 : vector<1x400xf32>
    %cst_63 = arith.constant dense<0.000000e+00> : vector<1x17xf32>
    %103 = tpu.matmul %102, %3, %cst_63 {dimension_numbers = #tpu.dot_dimension_numbers<[1], [0], [0], [1], [0, 0, 1, 1], [], []>} : vector<1x400xf32>, vector<400x17xf32>, vector<1x17xf32> -> vector<1x17xf32>
    %104 = arith.addf %103, %4 : vector<1x17xf32>
    %105 = vector.extract_strided_slice %35 {offsets = [0, 0], sizes = [1, 16], strides = [1, 1]} : vector<1x17xf32> to vector<1x16xf32>
    %106 = vector.extract_strided_slice %104 {offsets = [0, 0], sizes = [1, 16], strides = [1, 1]} : vector<1x17xf32> to vector<1x16xf32>
    %107 = vector.extract_strided_slice %44 {offsets = [0, 0], sizes = [16, 16], strides = [1, 1]} : vector<16x17xf32> to vector<16x16xf32>
    %cst_64 = arith.constant dense<0xFF800000> : vector<16xf32>
    %108 = vector.multi_reduction <maximumf>, %107, %cst_64 [0] : vector<16x16xf32> to vector<16xf32>
    %109 = vector.shape_cast %108 : vector<16xf32> to vector<1x16xf32>
    %110 = arith.maximumf %109, %105 : vector<1x16xf32>
    %111 = arith.maximumf %110, %106 : vector<1x16xf32>
    %112 = arith.subf %105, %111 : vector<1x16xf32>
    %113 = math.exp %112 : vector<1x16xf32>
    %114 = arith.subf %106, %111 : vector<1x16xf32>
    %115 = math.exp %114 : vector<1x16xf32>
    %116 = vector.broadcast %111 : vector<1x16xf32> to vector<16x16xf32>
    %117 = arith.subf %107, %116 : vector<16x16xf32>
    %118 = math.exp %117 : vector<16x16xf32>
    %cst_65 = arith.constant dense<0.000000e+00> : vector<16xf32>
    %119 = vector.multi_reduction <add>, %118, %cst_65 [0] : vector<16x16xf32> to vector<16xf32>
    %120 = vector.shape_cast %119 : vector<16xf32> to vector<1x16xf32>
    %121 = arith.addf %120, %113 : vector<1x16xf32>
    %122 = arith.addf %121, %115 : vector<1x16xf32>
    %123 = tpu.reciprocal %122 {approx = true} : vector<1x16xf32> -> vector<1x16xf32>
    %124 = arith.mulf %113, %123 : vector<1x16xf32>
    %cst_66 = arith.constant dense<0.000000e+00> : vector<16x12xf32>
    %125 = tpu.matmul %124, %34, %cst_66 {dimension_numbers = #tpu.dot_dimension_numbers<[0], [0], [1], [1], [0, 1, 1, 1], [], []>} : vector<1x16xf32>, vector<1x12xf32>, vector<16x12xf32> -> vector<16x12xf32>
    %126 = arith.mulf %115, %123 : vector<1x16xf32>
    %cst_67 = arith.constant dense<0.000000e+00> : vector<16x12xf32>
    %127 = tpu.matmul %126, %98, %cst_67 {dimension_numbers = #tpu.dot_dimension_numbers<[0], [0], [1], [1], [0, 1, 1, 1], [], []>} : vector<1x16xf32>, vector<1x12xf32>, vector<16x12xf32> -> vector<16x12xf32>
    %128 = arith.addf %125, %127 : vector<16x12xf32>
    %129 = vector.broadcast %123 : vector<1x16xf32> to vector<16x16xf32>
    %130 = arith.mulf %118, %129 : vector<16x16xf32>
    %cst_68 = arith.constant dense<0.000000e+00> : vector<16x12xf32>
    %131 = tpu.matmul %130, %36, %cst_68 {dimension_numbers = #tpu.dot_dimension_numbers<[0], [0], [1], [1], [0, 1, 1, 1], [], []>} : vector<16x16xf32>, vector<16x12xf32>, vector<16x12xf32> -> vector<16x12xf32>
    %132 = arith.addf %128, %131 : vector<16x12xf32>
    %cst_69 = arith.constant dense<0x7F800000> : vector<16xf32>
    %133 = vector.multi_reduction <minimumf>, %132, %cst_69 [1] : vector<16x12xf32> to vector<16xf32>
    %134 = vector.shape_cast %133 : vector<16xf32> to vector<16x1xf32>
    %135 = vector.broadcast %134 : vector<16x1xf32> to vector<16x12xf32>
    %136 = arith.subf %132, %135 : vector<16x12xf32>
    %cst_70 = arith.constant dense<0xFF800000> : vector<16xf32>
    %137 = vector.multi_reduction <maximumf>, %136, %cst_70 [1] : vector<16x12xf32> to vector<16xf32>
    %138 = vector.shape_cast %137 : vector<16xf32> to vector<16x1xf32>
    %139 = tpu.reciprocal %138 {approx = true} : vector<16x1xf32> -> vector<16x1xf32>
    %140 = vector.broadcast %139 : vector<16x1xf32> to vector<16x12xf32>
    %141 = arith.mulf %136, %140 : vector<16x12xf32>
    %142 = tpu.concatenate %85, %75 in 1 : vector<1x5xf32>, vector<1x1xf32> -> vector<1x6xf32>
    %143 = vector.extract_strided_slice %20 {offsets = [1, 0], sizes = [1, 12], strides = [1, 1]} : vector<2x12xf32> to vector<1x12xf32>
    %144 = vector.extract_strided_slice %28 {offsets = [1, 0], sizes = [1, 17], strides = [1, 1]} : vector<2x17xf32> to vector<1x17xf32>
    %145 = arith.addf %141, %0 : vector<16x12xf32>
    %cst_71 = arith.constant dense<0.000000e+00> : vector<16x400xf32>
    %146 = tpu.matmul %145, %1, %cst_71 {dimension_numbers = #tpu.dot_dimension_numbers<[1], [0], [0], [1], [0, 0, 1, 1], [], []>} : vector<16x12xf32>, vector<12x400xf32>, vector<16x400xf32> -> vector<16x400xf32>
    %147 = vector.broadcast %2 : vector<1x400xf32> to vector<16x400xf32>
    %148 = arith.addf %146, %147 : vector<16x400xf32>
    %cst_72 = arith.constant 0.000000e+00 : f32
    %149 = vector.broadcast %cst_72 : f32 to vector<16x400xf32>
    %150 = arith.maximumf %148, %149 : vector<16x400xf32>
    %cst_73 = arith.constant dense<0.000000e+00> : vector<16x17xf32>
    %151 = tpu.matmul %150, %3, %cst_73 {dimension_numbers = #tpu.dot_dimension_numbers<[1], [0], [0], [1], [0, 0, 1, 1], [], []>} : vector<16x400xf32>, vector<400x17xf32>, vector<16x17xf32> -> vector<16x17xf32>
    %152 = vector.broadcast %4 : vector<1x17xf32> to vector<16x17xf32>
    %153 = arith.addf %151, %152 : vector<16x17xf32>
    %154 = vector.extract_strided_slice %144 {offsets = [0, 16], sizes = [1, 1], strides = [1, 1]} : vector<1x17xf32> to vector<1x1xf32>
    %155 = vector.extract_strided_slice %153 {offsets = [0, 16], sizes = [16, 1], strides = [1, 1]} : vector<16x17xf32> to vector<16x1xf32>
    %cst_74 = arith.constant dense<0xFF800000> : vector<1xf32>
    %156 = vector.multi_reduction <maximumf>, %155, %cst_74 [0] : vector<16x1xf32> to vector<1xf32>
    %157 = vector.shape_cast %156 : vector<1xf32> to vector<1x1xf32>
    %158 = arith.maximumf %157, %154 : vector<1x1xf32>
    %159 = arith.subf %154, %158 : vector<1x1xf32>
    %160 = math.exp %159 : vector<1x1xf32>
    %161 = vector.broadcast %158 : vector<1x1xf32> to vector<16x1xf32>
    %162 = arith.subf %155, %161 : vector<16x1xf32>
    %163 = math.exp %162 : vector<16x1xf32>
    %cst_75 = arith.constant dense<0.000000e+00> : vector<1xf32>
    %164 = vector.multi_reduction <add>, %163, %cst_75 [0] : vector<16x1xf32> to vector<1xf32>
    %165 = vector.shape_cast %164 : vector<1xf32> to vector<1x1xf32>
    %166 = arith.addf %165, %160 : vector<1x1xf32>
    %167 = tpu.reciprocal %166 {approx = true} : vector<1x1xf32> -> vector<1x1xf32>
    %168 = arith.mulf %160, %167 : vector<1x1xf32>
    %169 = vector.broadcast %168 : vector<1x1xf32> to vector<1x12xf32>
    %170 = arith.mulf %169, %143 : vector<1x12xf32>
    %171 = vector.broadcast %167 : vector<1x1xf32> to vector<16x1xf32>
    %172 = arith.mulf %163, %171 : vector<16x1xf32>
    %cst_76 = arith.constant dense<0.000000e+00> : vector<1x12xf32>
    %173 = tpu.matmul %172, %145, %cst_76 {dimension_numbers = #tpu.dot_dimension_numbers<[0], [0], [1], [1], [0, 1, 1, 1], [], []>} : vector<16x1xf32>, vector<16x12xf32>, vector<1x12xf32> -> vector<1x12xf32>
    %174 = arith.addf %170, %173 : vector<1x12xf32>
    %175 = vector.extract_strided_slice %30 {offsets = [1, 0], sizes = [1, 200], strides = [1, 1]} : vector<2x200xf32> to vector<1x200xf32>
    %cst_77 = arith.constant dense<0.000000e+00> : vector<1x200xf32>
    %176 = tpu.matmul %174, %5, %cst_77 {dimension_numbers = #tpu.dot_dimension_numbers<[1], [0], [0], [1], [0, 0, 1, 1], [], []>} : vector<1x12xf32>, vector<12x200xf32>, vector<1x200xf32> -> vector<1x200xf32>
    %177 = arith.addf %175, %176 : vector<1x200xf32>
    %178 = arith.addf %177, %6 : vector<1x200xf32>
    %cst_78 = arith.constant 0.000000e+00 : f32
    %179 = vector.broadcast %cst_78 : f32 to vector<1x200xf32>
    %180 = arith.maximumf %178, %179 : vector<1x200xf32>
    %cst_79 = arith.constant dense<0.000000e+00> : vector<1x6xf32>
    %181 = tpu.matmul %180, %7, %cst_79 {dimension_numbers = #tpu.dot_dimension_numbers<[1], [0], [0], [1], [0, 0, 1, 1], [], []>} : vector<1x200xf32>, vector<200x6xf32>, vector<1x6xf32> -> vector<1x6xf32>
    %182 = arith.addf %181, %8 : vector<1x6xf32>
    %183 = vector.extract_strided_slice %182 {offsets = [0, 0], sizes = [1, 5], strides = [1, 1]} : vector<1x6xf32> to vector<1x5xf32>
    %184 = vector.extract_strided_slice %182 {offsets = [0, 5], sizes = [1, 1], strides = [1, 1]} : vector<1x6xf32> to vector<1x1xf32>
    %cst_80 = arith.constant dense<0xFF800000> : vector<1xf32>
    %185 = vector.multi_reduction <maximumf>, %183, %cst_80 [1] : vector<1x5xf32> to vector<1xf32>
    %186 = vector.shape_cast %185 : vector<1xf32> to vector<1x1xf32>
    %187 = vector.broadcast %186 : vector<1x1xf32> to vector<1x5xf32>
    %188 = arith.subf %183, %187 : vector<1x5xf32>
    %189 = math.exp %188 : vector<1x5xf32>
    %cst_81 = arith.constant dense<0.000000e+00> : vector<1xf32>
    %190 = vector.multi_reduction <add>, %189, %cst_81 [1] : vector<1x5xf32> to vector<1xf32>
    %191 = vector.shape_cast %190 : vector<1xf32> to vector<1x1xf32>
    %192 = tpu.reciprocal %191 {approx = true} : vector<1x1xf32> -> vector<1x1xf32>
    %193 = vector.broadcast %192 : vector<1x1xf32> to vector<1x5xf32>
    %194 = arith.mulf %189, %193 : vector<1x5xf32>
    %195 = vector.extract_strided_slice %32 {offsets = [1, 0], sizes = [1, 100], strides = [1, 1]} : vector<2x100xf32> to vector<1x100xf32>
    %cst_82 = arith.constant dense<0.000000e+00> : vector<1x100xf32>
    %196 = tpu.matmul %174, %9, %cst_82 {dimension_numbers = #tpu.dot_dimension_numbers<[1], [0], [0], [1], [0, 0, 1, 1], [], []>} : vector<1x12xf32>, vector<12x100xf32>, vector<1x100xf32> -> vector<1x100xf32>
    %197 = arith.addf %195, %196 : vector<1x100xf32>
    %cst_83 = arith.constant dense<0.000000e+00> : vector<1x100xf32>
    %198 = tpu.matmul %194, %10, %cst_83 {dimension_numbers = #tpu.dot_dimension_numbers<[1], [0], [0], [1], [0, 0, 1, 1], [], []>} : vector<1x5xf32>, vector<5x100xf32>, vector<1x100xf32> -> vector<1x100xf32>
    %199 = arith.addf %197, %198 : vector<1x100xf32>
    %200 = vector.broadcast %184 : vector<1x1xf32> to vector<1x100xf32>
    %201 = arith.mulf %200, %11 : vector<1x100xf32>
    %202 = arith.addf %199, %201 : vector<1x100xf32>
    %203 = arith.addf %202, %12 : vector<1x100xf32>
    %cst_84 = arith.constant 0.000000e+00 : f32
    %204 = vector.broadcast %cst_84 : f32 to vector<1x100xf32>
    %205 = arith.maximumf %203, %204 : vector<1x100xf32>
    %cst_85 = arith.constant dense<0.000000e+00> : vector<1x12xf32>
    %206 = tpu.matmul %205, %13, %cst_85 {dimension_numbers = #tpu.dot_dimension_numbers<[1], [0], [0], [1], [0, 0, 1, 1], [], []>} : vector<1x100xf32>, vector<100x12xf32>, vector<1x12xf32> -> vector<1x12xf32>
    %207 = arith.addf %206, %14 : vector<1x12xf32>
    %cst_86 = arith.constant dense<0.000000e+00> : vector<1x400xf32>
    %208 = tpu.matmul %207, %1, %cst_86 {dimension_numbers = #tpu.dot_dimension_numbers<[1], [0], [0], [1], [0, 0, 1, 1], [], []>} : vector<1x12xf32>, vector<12x400xf32>, vector<1x400xf32> -> vector<1x400xf32>
    %209 = arith.addf %208, %2 : vector<1x400xf32>
    %cst_87 = arith.constant 0.000000e+00 : f32
    %210 = vector.broadcast %cst_87 : f32 to vector<1x400xf32>
    %211 = arith.maximumf %209, %210 : vector<1x400xf32>
    %cst_88 = arith.constant dense<0.000000e+00> : vector<1x17xf32>
    %212 = tpu.matmul %211, %3, %cst_88 {dimension_numbers = #tpu.dot_dimension_numbers<[1], [0], [0], [1], [0, 0, 1, 1], [], []>} : vector<1x400xf32>, vector<400x17xf32>, vector<1x17xf32> -> vector<1x17xf32>
    %213 = arith.addf %212, %4 : vector<1x17xf32>
    %214 = vector.extract_strided_slice %144 {offsets = [0, 0], sizes = [1, 16], strides = [1, 1]} : vector<1x17xf32> to vector<1x16xf32>
    %215 = vector.extract_strided_slice %213 {offsets = [0, 0], sizes = [1, 16], strides = [1, 1]} : vector<1x17xf32> to vector<1x16xf32>
    %216 = vector.extract_strided_slice %153 {offsets = [0, 0], sizes = [16, 16], strides = [1, 1]} : vector<16x17xf32> to vector<16x16xf32>
    %cst_89 = arith.constant dense<0xFF800000> : vector<16xf32>
    %217 = vector.multi_reduction <maximumf>, %216, %cst_89 [0] : vector<16x16xf32> to vector<16xf32>
    %218 = vector.shape_cast %217 : vector<16xf32> to vector<1x16xf32>
    %219 = arith.maximumf %218, %214 : vector<1x16xf32>
    %220 = arith.maximumf %219, %215 : vector<1x16xf32>
    %221 = arith.subf %214, %220 : vector<1x16xf32>
    %222 = math.exp %221 : vector<1x16xf32>
    %223 = arith.subf %215, %220 : vector<1x16xf32>
    %224 = math.exp %223 : vector<1x16xf32>
    %225 = vector.broadcast %220 : vector<1x16xf32> to vector<16x16xf32>
    %226 = arith.subf %216, %225 : vector<16x16xf32>
    %227 = math.exp %226 : vector<16x16xf32>
    %cst_90 = arith.constant dense<0.000000e+00> : vector<16xf32>
    %228 = vector.multi_reduction <add>, %227, %cst_90 [0] : vector<16x16xf32> to vector<16xf32>
    %229 = vector.shape_cast %228 : vector<16xf32> to vector<1x16xf32>
    %230 = arith.addf %229, %222 : vector<1x16xf32>
    %231 = arith.addf %230, %224 : vector<1x16xf32>
    %232 = tpu.reciprocal %231 {approx = true} : vector<1x16xf32> -> vector<1x16xf32>
    %233 = arith.mulf %222, %232 : vector<1x16xf32>
    %cst_91 = arith.constant dense<0.000000e+00> : vector<16x12xf32>
    %234 = tpu.matmul %233, %143, %cst_91 {dimension_numbers = #tpu.dot_dimension_numbers<[0], [0], [1], [1], [0, 1, 1, 1], [], []>} : vector<1x16xf32>, vector<1x12xf32>, vector<16x12xf32> -> vector<16x12xf32>
    %235 = arith.mulf %224, %232 : vector<1x16xf32>
    %cst_92 = arith.constant dense<0.000000e+00> : vector<16x12xf32>
    %236 = tpu.matmul %235, %207, %cst_92 {dimension_numbers = #tpu.dot_dimension_numbers<[0], [0], [1], [1], [0, 1, 1, 1], [], []>} : vector<1x16xf32>, vector<1x12xf32>, vector<16x12xf32> -> vector<16x12xf32>
    %237 = arith.addf %234, %236 : vector<16x12xf32>
    %238 = vector.broadcast %232 : vector<1x16xf32> to vector<16x16xf32>
    %239 = arith.mulf %227, %238 : vector<16x16xf32>
    %cst_93 = arith.constant dense<0.000000e+00> : vector<16x12xf32>
    %240 = tpu.matmul %239, %145, %cst_93 {dimension_numbers = #tpu.dot_dimension_numbers<[0], [0], [1], [1], [0, 1, 1, 1], [], []>} : vector<16x16xf32>, vector<16x12xf32>, vector<16x12xf32> -> vector<16x12xf32>
    %241 = arith.addf %237, %240 : vector<16x12xf32>
    %cst_94 = arith.constant dense<0x7F800000> : vector<16xf32>
    %242 = vector.multi_reduction <minimumf>, %241, %cst_94 [1] : vector<16x12xf32> to vector<16xf32>
    %243 = vector.shape_cast %242 : vector<16xf32> to vector<16x1xf32>
    %244 = vector.broadcast %243 : vector<16x1xf32> to vector<16x12xf32>
    %245 = arith.subf %241, %244 : vector<16x12xf32>
    %cst_95 = arith.constant dense<0xFF800000> : vector<16xf32>
    %246 = vector.multi_reduction <maximumf>, %245, %cst_95 [1] : vector<16x12xf32> to vector<16xf32>
    %247 = vector.shape_cast %246 : vector<16xf32> to vector<16x1xf32>
    %248 = tpu.reciprocal %247 {approx = true} : vector<16x1xf32> -> vector<16x1xf32>
    %249 = vector.broadcast %248 : vector<16x1xf32> to vector<16x12xf32>
    %250 = arith.mulf %245, %249 : vector<16x12xf32>
    %251 = tpu.concatenate %194, %184 in 1 : vector<1x5xf32>, vector<1x1xf32> -> vector<1x6xf32>
    %252 = tpu.concatenate %142, %251 in 0 : vector<1x6xf32>, vector<1x6xf32> -> vector<2x6xf32>
    %c0_96 = arith.constant 0 : index
    %c0_97 = arith.constant 0 : index
    %253 = vector.load %arg21[%c0_96, %c0_97] : memref<2x6xf32, #tpu.memory_space<vmem>>, vector<2x6xf32>
    tpu.vector_store %arg21[%c0_96, %c0_97], %252 {strides = array<i32>} : memref<2x6xf32, #tpu.memory_space<vmem>>, vector<2x6xf32>,
    %c0_98 = arith.constant 0 : index
    %c0_99 = arith.constant 0 : index
    %254 = vector.load %arg22[%c0_98, %c0_99] : memref<16x12xf32, #tpu.memory_space<vmem>>, vector<16x12xf32>
    tpu.vector_store %arg22[%c0_98, %c0_99], %250 {strides = array<i32>} : memref<16x12xf32, #tpu.memory_space<vmem>>, vector<16x12xf32>,
    return
  }
}

</mosaic_0001>

<llo_original>
// kernel: toy_ac_mem_forward.1
$region0: #{toy_ac_mem_forward.1}
  #allocation0 [shape = 'u32[]', space=smem, size = 0x4, offset = 0x4, fixed_abs, tag = 'smem constant byte address 0x4 - core index']
  #allocation1 [shape = 'u32[144,128]{1,0:T(1,128)}', space=vmem, size = 0x12000, scoped, tag = 'internal scratch']
  %s0 = inlined_call_operand.vmem [shape: f32[2,4], index: 0, kind: input, shape index: {}]
  %s1 = inlined_call_operand.vmem [shape: f32[16,12], index: 1, kind: input, shape index: {}]
  %s2 = inlined_call_operand.vmem [shape: f32[16,12], index: 2, kind: input, shape index: {}]
  %s3 = inlined_call_operand.vmem [shape: f32[4,12], index: 3, kind: input, shape index: {}]
  %s4 = inlined_call_operand.vmem [shape: f32[1,12], index: 4, kind: input, shape index: {}]
  %s5 = inlined_call_operand.vmem [shape: f32[12,400], index: 5, kind: input, shape index: {}]
  %s6 = inlined_call_operand.vmem [shape: f32[1,400], index: 6, kind: input, shape index: {}]
  %s7 = inlined_call_operand.vmem [shape: f32[400,17], index: 7, kind: input, shape index: {}]
  %s8 = inlined_call_operand.vmem [shape: f32[1,17], index: 8, kind: input, shape index: {}]
  %s9 = inlined_call_operand.vmem [shape: f32[12,200], index: 9, kind: input, shape index: {}]
  %s10 = inlined_call_operand.vmem [shape: f32[12,200], index: 10, kind: input, shape index: {}]
  %s11 = inlined_call_operand.vmem [shape: f32[1,200], index: 11, kind: input, shape index: {}]
  %s12 = inlined_call_operand.vmem [shape: f32[200,6], index: 12, kind: input, shape index: {}]
  %s13 = inlined_call_operand.vmem [shape: f32[1,6], index: 13, kind: input, shape index: {}]
  %s14 = inlined_call_operand.vmem [shape: f32[12,100], index: 14, kind: input, shape index: {}]
  %s15 = inlined_call_operand.vmem [shape: f32[12,100], index: 15, kind: input, shape index: {}]
  %s16 = inlined_call_operand.vmem [shape: f32[5,100], index: 16, kind: input, shape index: {}]
  %s17 = inlined_call_operand.vmem [shape: f32[1,100], index: 17, kind: input, shape index: {}]
  %s18 = inlined_call_operand.vmem [shape: f32[1,100], index: 18, kind: input, shape index: {}]
  %s19 = inlined_call_operand.vmem [shape: f32[100,12], index: 19, kind: input, shape index: {}]
  %s20 = inlined_call_operand.vmem [shape: f32[1,12], index: 20, kind: input, shape index: {}]
  %s21 = inlined_call_operand.vmem [shape: f32[2,6], index: 21, kind: output, shape index: {0}]
  %s22 = inlined_call_operand.hbm [shape: f32[16,12], index: 22, kind: output, shape index: {1}]
  %23 = xla_tuple %s21, %s22
  %s24 = sld [smem:[#allocation0]]
  $region102: #{toy_ac_mem_forward.1} parent=0
    _
  %s26 = ssub.s32 1, %s24
  %s27 = scalar_select 0, %s26, %s24
  $region1: #{toy_ac_mem_forward.1} parent=0
    #allocation2 [shape = 'u8[8192]{0}', space=vmem, size = 0x2000, scoped, tag = 'output window, operand 1, single buffered']
    #allocation3 [shape = 's32[1]{0}', space=sflag, size = 0x4, scoped, tag = 'scoped memory for toy_ac_mem_forward.1']
    %28 = vsyncpa [#allocation3], 0
    // Predicated region
    $region2: #{toy_ac_mem_forward.1} parent=1 // pred_check
      _
    $region3: #{toy_ac_mem_forward.1} parent=1 // pred_check_branch
      %30 = sbr.rel (0) target = $region5
    $region4: #{toy_ac_mem_forward.1} parent=1 // pred_region
      _
    $region5: #{toy_ac_mem_forward.1} parent=1 // pred_fallthru
      _
    // Predicated region
    $region6: #{toy_ac_mem_forward.1} parent=1 // pred_check
      _
    $region7: #{toy_ac_mem_forward.1} parent=1 // pred_check_branch
      %32 = sbr.rel (0) target = $region9
    $region8: #{toy_ac_mem_forward.1} parent=1 // pred_region
      _
    $region9: #{toy_ac_mem_forward.1} parent=1 // pred_fallthru
      _
    // Predicated region
    $region10: #{toy_ac_mem_forward.1} parent=1 // pred_check
      _
    $region11: #{toy_ac_mem_forward.1} parent=1 // pred_check_branch
      %34 = sbr.rel (0) target = $region13
    $region12: #{toy_ac_mem_forward.1} parent=1 // pred_region
      _
    $region13: #{toy_ac_mem_forward.1} parent=1 // pred_fallthru
      _
    // Predicated region
    $region14: #{toy_ac_mem_forward.1} parent=1 // pred_check
      _
    $region15: #{toy_ac_mem_forward.1} parent=1 // pred_check_branch
      %36 = sbr.rel (0) target = $region17
    $region16: #{toy_ac_mem_forward.1} parent=1 // pred_region
      _
    $region17: #{toy_ac_mem_forward.1} parent=1 // pred_fallthru
      _
    // Predicated region
    $region18: #{toy_ac_mem_forward.1} parent=1 // pred_check
      _
    $region19: #{toy_ac_mem_forward.1} parent=1 // pred_check_branch
      %38 = sbr.rel (0) target = $region21
    $region20: #{toy_ac_mem_forward.1} parent=1 // pred_region
      _
    $region21: #{toy_ac_mem_forward.1} parent=1 // pred_fallthru
      _
    // Predicated region
    $region22: #{toy_ac_mem_forward.1} parent=1 // pred_check
      _
    $region23: #{toy_ac_mem_forward.1} parent=1 // pred_check_branch
      %40 = sbr.rel (0) target = $region25
    $region24: #{toy_ac_mem_forward.1} parent=1 // pred_region
      _
    $region25: #{toy_ac_mem_forward.1} parent=1 // pred_fallthru
      _
    // Predicated region
    $region26: #{toy_ac_mem_forward.1} parent=1 // pred_check
      _
    $region27: #{toy_ac_mem_forward.1} parent=1 // pred_check_branch
      %42 = sbr.rel (0) target = $region29
    $region28: #{toy_ac_mem_forward.1} parent=1 // pred_region
      _
    $region29: #{toy_ac_mem_forward.1} parent=1 // pred_fallthru
      _
    // Predicated region
    $region30: #{toy_ac_mem_forward.1} parent=1 // pred_check
      _
    $region31: #{toy_ac_mem_forward.1} parent=1 // pred_check_branch
      %44 = sbr.rel (0) target = $region33
    $region32: #{toy_ac_mem_forward.1} parent=1 // pred_region
      _
    $region33: #{toy_ac_mem_forward.1} parent=1 // pred_fallthru
      _
    // Predicated region
    $region34: #{toy_ac_mem_forward.1} parent=1 // pred_check
      _
    $region35: #{toy_ac_mem_forward.1} parent=1 // pred_check_branch
      %46 = sbr.rel (0) target = $region37
    $region36: #{toy_ac_mem_forward.1} parent=1 // pred_region
      _
    $region37: #{toy_ac_mem_forward.1} parent=1 // pred_fallthru
      _
    // Predicated region
    $region38: #{toy_ac_mem_forward.1} parent=1 // pred_check
      _
    $region39: #{toy_ac_mem_forward.1} parent=1 // pred_check_branch
      %48 = sbr.rel (0) target = $region41
    $region40: #{toy_ac_mem_forward.1} parent=1 // pred_region
      _
    $region41: #{toy_ac_mem_forward.1} parent=1 // pred_fallthru
      _
    // Predicated region
    $region42: #{toy_ac_mem_forward.1} parent=1 // pred_check
      _
    $region43: #{toy_ac_mem_forward.1} parent=1 // pred_check_branch
      %50 = sbr.rel (0) target = $region45
    $region44: #{toy_ac_mem_forward.1} parent=1 // pred_region
      _
    $region45: #{toy_ac_mem_forward.1} parent=1 // pred_fallthru
      _
    // Predicated region
    $region46: #{toy_ac_mem_forward.1} parent=1 // pred_check
      _
    $region47: #{toy_ac_mem_forward.1} parent=1 // pred_check_branch
      %52 = sbr.rel (0) target = $region49
    $region48: #{toy_ac_mem_forward.1} parent=1 // pred_region
      _
    $region49: #{toy_ac_mem_forward.1} parent=1 // pred_fallthru
      _
    // Predicated region
    $region50: #{toy_ac_mem_forward.1} parent=1 // pred_check
      _
    $region51: #{toy_ac_mem_forward.1} parent=1 // pred_check_branch
      %54 = sbr.rel (0) target = $region53
    $region52: #{toy_ac_mem_forward.1} parent=1 // pred_region
      _
    $region53: #{toy_ac_mem_forward.1} parent=1 // pred_fallthru
      _
    // Predicated region
    $region54: #{toy_ac_mem_forward.1} parent=1 // pred_check
      _
    $region55: #{toy_ac_mem_forward.1} parent=1 // pred_check_branch
      %56 = sbr.rel (0) target = $region57
    $region56: #{toy_ac_mem_forward.1} parent=1 // pred_region
      _
    $region57: #{toy_ac_mem_forward.1} parent=1 // pred_fallthru
      _
    // Predicated region
    $region58: #{toy_ac_mem_forward.1} parent=1 // pred_check
      _
    $region59: #{toy_ac_mem_forward.1} parent=1 // pred_check_branch
      %58 = sbr.rel (0) target = $region61
    $region60: #{toy_ac_mem_forward.1} parent=1 // pred_region
      _
    $region61: #{toy_ac_mem_forward.1} parent=1 // pred_fallthru
      _
    // Predicated region
    $region62: #{toy_ac_mem_forward.1} parent=1 // pred_check
      _
    $region63: #{toy_ac_mem_forward.1} parent=1 // pred_check_branch
      %60 = sbr.rel (0) target = $region65
    $region64: #{toy_ac_mem_forward.1} parent=1 // pred_region
      _
    $region65: #{toy_ac_mem_forward.1} parent=1 // pred_fallthru
      _
    // Predicated region
    $region66: #{toy_ac_mem_forward.1} parent=1 // pred_check
      _
    $region67: #{toy_ac_mem_forward.1} parent=1 // pred_check_branch
      %62 = sbr.rel (0) target = $region69
    $region68: #{toy_ac_mem_forward.1} parent=1 // pred_region
      _
    $region69: #{toy_ac_mem_forward.1} parent=1 // pred_fallthru
      _
    // Predicated region
    $region70: #{toy_ac_mem_forward.1} parent=1 // pred_check
      _
    $region71: #{toy_ac_mem_forward.1} parent=1 // pred_check_branch
      %64 = sbr.rel (0) target = $region73
    $region72: #{toy_ac_mem_forward.1} parent=1 // pred_region
      _
    $region73: #{toy_ac_mem_forward.1} parent=1 // pred_fallthru
      _
    // Predicated region
    $region74: #{toy_ac_mem_forward.1} parent=1 // pred_check
      _
    $region75: #{toy_ac_mem_forward.1} parent=1 // pred_check_branch
      %66 = sbr.rel (0) target = $region77
    $region76: #{toy_ac_mem_forward.1} parent=1 // pred_region
      _
    $region77: #{toy_ac_mem_forward.1} parent=1 // pred_fallthru
      _
    // Predicated region
    $region78: #{toy_ac_mem_forward.1} parent=1 // pred_check
      _
    $region79: #{toy_ac_mem_forward.1} parent=1 // pred_check_branch
      %68 = sbr.rel (0) target = $region81
    $region80: #{toy_ac_mem_forward.1} parent=1 // pred_region
      _
    $region81: #{toy_ac_mem_forward.1} parent=1 // pred_fallthru
      _
    // Predicated region
    $region82: #{toy_ac_mem_forward.1} parent=1 // pred_check
      _
    $region83: #{toy_ac_mem_forward.1} parent=1 // pred_check_branch
      %70 = sbr.rel (0) target = $region85
    $region84: #{toy_ac_mem_forward.1} parent=1 // pred_region
      _
    $region85: #{toy_ac_mem_forward.1} parent=1 // pred_fallthru
      _
    %v71 = vld [vmem:[%s2] sm:$0xff]
    %v72 = vld [vmem:[%s2 + $0x8] sm:$0xff]
    %v73 = vld [vmem:[%s5] sm:$0xff]
    %v74 = vld [vmem:[%s5 + $0x8] sm:$0xff]
    %v75 = vld [vmem:[%s5 + $0x10] sm:$0xff]
    %v76 = vld [vmem:[%s5 + $0x18] sm:$0xff]
    %v77 = vld [vmem:[%s5 + $0x20] sm:$0xf]
    %v78 = vld [vmem:[%s5 + $0x28] sm:$0xf]
    %v79 = vld [vmem:[%s5 + $0x30] sm:$0xf]
    %v80 = vld [vmem:[%s5 + $0x38] sm:$0xf]
    %v81 = vld [vmem:[%s6] sm:$0xf]
    %v82 = vld [vmem:[%s7] sm:$0xff]
    %v83 = vld [vmem:[%s7 + $0x8] sm:$0xff]
    %v84 = vld [vmem:[%s7 + $0x10] sm:$0xff]
    %v85 = vld [vmem:[%s7 + $0x18] sm:$0xff]
    %v86 = vld [vmem:[%s7 + $0x20] sm:$0xff]
    %v87 = vld [vmem:[%s7 + $0x28] sm:$0xff]
    %v88 = vld [vmem:[%s7 + $0x30] sm:$0xff]
    %v89 = vld [vmem:[%s7 + $0x38] sm:$0xff]
    %v90 = vld [vmem:[%s7 + $0x40] sm:$0xff]
    %v91 = vld [vmem:[%s7 + $0x48] sm:$0xff]
    %v92 = vld [vmem:[%s7 + $0x50] sm:$0xff]
    %v93 = vld [vmem:[%s7 + $0x58] sm:$0xff]
    %v94 = vld [vmem:[%s7 + $0x60] sm:$0xff]
    %v95 = vld [vmem:[%s7 + $0x68] sm:$0xff]
    %v96 = vld [vmem:[%s7 + $0x70] sm:$0xff]
    %v97 = vld [vmem:[%s7 + $0x78] sm:$0xff]
    %v98 = vld [vmem:[%s7 + $0x80] sm:$0xff]
    %v99 = vld [vmem:[%s7 + $0x88] sm:$0xff]
    %v100 = vld [vmem:[%s7 + $0x90] sm:$0xff]
    %v101 = vld [vmem:[%s7 + $0x98] sm:$0xff]
    %v102 = vld [vmem:[%s7 + $0xa0] sm:$0xff]
    %v103 = vld [vmem:[%s7 + $0xa8] sm:$0xff]
    %v104 = vld [vmem:[%s7 + $0xb0] sm:$0xff]
    %v105 = vld [vmem:[%s7 + $0xb8] sm:$0xff]
    %v106 = vld [vmem:[%s7 + $0xc0] sm:$0xff]
    %v107 = vld [vmem:[%s7 + $0xc8] sm:$0xff]
    %v108 = vld [vmem:[%s7 + $0xd0] sm:$0xff]
    %v109 = vld [vmem:[%s7 + $0xd8] sm:$0xff]
    %v110 = vld [vmem:[%s7 + $0xe0] sm:$0xff]
    %v111 = vld [vmem:[%s7 + $0xe8] sm:$0xff]
    %v112 = vld [vmem:[%s7 + $0xf0] sm:$0xff]
    %v113 = vld [vmem:[%s7 + $0xf8] sm:$0xff]
    %v114 = vld [vmem:[%s7 + $0x100] sm:$0xff]
    %v115 = vld [vmem:[%s7 + $0x108] sm:$0xff]
    %v116 = vld [vmem:[%s7 + $0x110] sm:$0xff]
    %v117 = vld [vmem:[%s7 + $0x118] sm:$0xff]
    %v118 = vld [vmem:[%s7 + $0x120] sm:$0xff]
    %v119 = vld [vmem:[%s7 + $0x128] sm:$0xff]
    %v120 = vld [vmem:[%s7 + $0x130] sm:$0xff]
    %v121 = vld [vmem:[%s7 + $0x138] sm:$0xff]
    %v122 = vld [vmem:[%s7 + $0x140] sm:$0xff]
    %v123 = vld [vmem:[%s7 + $0x148] sm:$0xff]
    %v124 = vld [vmem:[%s7 + $0x150] sm:$0xff]
    %v125 = vld [vmem:[%s7 + $0x158] sm:$0xff]
    %v126 = vld [vmem:[%s7 + $0x160] sm:$0xff]
    %v127 = vld [vmem:[%s7 + $0x168] sm:$0xff]
    %v128 = vld [vmem:[%s7 + $0x170] sm:$0xff]
    %v129 = vld [vmem:[%s7 + $0x178] sm:$0xff]
    %v130 = vld [vmem:[%s7 + $0x180] sm:$0xff]
    %v131 = vld [vmem:[%s7 + $0x188] sm:$0xff]
    %v132 = vld [vmem:[%s8] sm:$0x1]
    %v133 = vld [vmem:[%s10] sm:$0xff]
    %v134 = vld [vmem:[%s10 + $0x8] sm:$0xff]
    %v135 = vld [vmem:[%s10 + $0x10] sm:$0xf]
    %v136 = vld [vmem:[%s10 + $0x18] sm:$0xf]
    %v137 = vld [vmem:[%s11] sm:$0x3]
    %v138 = vld [vmem:[%s12] sm:$0xff]
    %v139 = vld [vmem:[%s12 + $0x8] sm:$0xff]
    %v140 = vld [vmem:[%s12 + $0x10] sm:$0xff]
    %v141 = vld [vmem:[%s12 + $0x18] sm:$0xff]
    %v142 = vld [vmem:[%s12 + $0x20] sm:$0xff]
    %v143 = vld [vmem:[%s12 + $0x28] sm:$0xff]
    %v144 = vld [vmem:[%s12 + $0x30] sm:$0xff]
    %v145 = vld [vmem:[%s12 + $0x38] sm:$0xff]
    %v146 = vld [vmem:[%s12 + $0x40] sm:$0xff]
    %v147 = vld [vmem:[%s12 + $0x48] sm:$0xff]
    %v148 = vld [vmem:[%s12 + $0x50] sm:$0xff]
    %v149 = vld [vmem:[%s12 + $0x58] sm:$0xff]
    %v150 = vld [vmem:[%s12 + $0x60] sm:$0xff]
    %v151 = vld [vmem:[%s12 + $0x68] sm:$0xff]
    %v152 = vld [vmem:[%s12 + $0x70] sm:$0xff]
    %v153 = vld [vmem:[%s12 + $0x78] sm:$0xff]
    %v154 = vld [vmem:[%s12 + $0x80] sm:$0xff]
    %v155 = vld [vmem:[%s12 + $0x88] sm:$0xff]
    %v156 = vld [vmem:[%s12 + $0x90] sm:$0xff]
    %v157 = vld [vmem:[%s12 + $0x98] sm:$0xff]
    %v158 = vld [vmem:[%s12 + $0xa0] sm:$0xff]
    %v159 = vld [vmem:[%s12 + $0xa8] sm:$0xff]
    %v160 = vld [vmem:[%s12 + $0xb0] sm:$0xff]
    %v161 = vld [vmem:[%s12 + $0xb8] sm:$0xff]
    %v162 = vld [vmem:[%s12 + $0xc0] sm:$0xff]
    %v163 = vld [vmem:[%s13] sm:$0x1]
    %v164 = vld [vmem:[%s15] sm:$0xff]
    %v165 = vld [vmem:[%s15 + $0x8] sm:$0xf]
    %v166 = vld [vmem:[%s16] sm:$0x1f]
    %v167 = vld [vmem:[%s17] sm:$0x1]
    %v168 = vld [vmem:[%s18] sm:$0x1]
    %v169 = vld [vmem:[%s19] sm:$0xff]
    %v170 = vld [vmem:[%s19 + $0x8] sm:$0xff]
    %v171 = vld [vmem:[%s19 + $0x10] sm:$0xff]
    %v172 = vld [vmem:[%s19 + $0x18] sm:$0xff]
    %v173 = vld [vmem:[%s19 + $0x20] sm:$0xff]
    %v174 = vld [vmem:[%s19 + $0x28] sm:$0xff]
    %v175 = vld [vmem:[%s19 + $0x30] sm:$0xff]
    %v176 = vld [vmem:[%s19 + $0x38] sm:$0xff]
    %v177 = vld [vmem:[%s19 + $0x40] sm:$0xff]
    %v178 = vld [vmem:[%s19 + $0x48] sm:$0xff]
    %v179 = vld [vmem:[%s19 + $0x50] sm:$0xff]
    %v180 = vld [vmem:[%s19 + $0x58] sm:$0xff]
    %v181 = vld [vmem:[%s19 + $0x60] sm:$0xf]
    %v182 = vld [vmem:[%s20] sm:$0x1]
    %v183 = vld [vmem:[%s0] sm:$0x3]
    %v184 = vld [vmem:[%s3] sm:$0xf]
    %v185 = vld [vmem:[%s4] sm:$0x1]
    %v187 = vlaneseq
    %v188 = vshrl.u32 %v187, 7
    %v189 = vsub.s32 0, %v188
    %v190 = vrot.slane %v185, %v189
    %vm192 = vcmask 31744
    %v194 = vsel %vm192, %v183, 0
    %vm196 = vcmask 1043456
    %v198 = vsel %vm196, %v184, 0
    %200 = vmatprep.subr.mxu0 0.0
    %201 = vmatpush1.msra.mxu0 0.0
    %202 = vmatprep.subr.mxu0 0.0
    %203 = vmatpush1.msra.mxu0 0.0
    %204 = vmatprep.subr.mxu0 0.0
    %205 = vmatpush1.msra.mxu0 0.0
    %206 = vmatprep.subr.mxu0 0.0
    %207 = vmatpush1.msra.mxu0 0.0
    %208 = vmatprep.subr.mxu0 0.0
    %209 = vmatpush1.msra.mxu0 0.0
    %210 = vmatprep.subr.mxu0 0.0
    %211 = vmatpush1.msra.mxu0 0.0
    %212 = vmatprep.subr.mxu0 0.0
    %213 = vmatpush1.msra.mxu0 0.0
    %214 = vmatprep.subr.mxu0 0.0
    %215 = vmatpush1.msra.mxu0 0.0
    %216 = vmatprep.subr.mxu0 0.0
    %217 = vmatpush1.msra.mxu0 0.0
    %218 = vmatprep.subr.mxu0 0.0
    %219 = vmatpush1.msra.mxu0 0.0
    %220 = vmatprep.subr.mxu0 0.0
    %221 = vmatpush1.msra.mxu0 0.0
    %222 = vmatprep.subr.mxu0 0.0
    %223 = vmatpush1.msra.mxu0 0.0
    %224 = vmatprep.subr.mxu0 0.0
    %225 = vmatpush1.msra.mxu0 0.0
    %226 = vmatprep.subr.mxu0 0.0
    %227 = vmatpush1.msra.mxu0 0.0
    %228 = vmatprep.subr.mxu0 0.0
    %229 = vmatpush1.msra.mxu0 0.0
    %230 = vmatprep.subr.mxu0 0.0
    %231 = vmatpush1.msra.mxu0 %v198
    %232 = vmatprep.subr.mxu0 0.0
    %233 = vmatpush2.msra.mxu0 0.0
    %234 = vmatprep.subr.mxu0 0.0
    %235 = vmatpush2.msra.mxu0 0.0
    %236 = vmatprep.subr.mxu0 0.0
    %237 = vmatpush2.msra.mxu0 0.0
    %238 = vmatprep.subr.mxu0 0.0
    %239 = vmatpush2.msra.mxu0 0.0
    %240 = vmatprep.subr.mxu0 0.0
    %241 = vmatpush2.msra.mxu0 0.0
    %242 = vmatprep.subr.mxu0 0.0
    %243 = vmatpush2.msra.mxu0 0.0
    %244 = vmatprep.subr.mxu0 0.0
    %245 = vmatpush2.msra.mxu0 0.0
    %246 = vmatprep.subr.mxu0 0.0
    %247 = vmatpush2.msra.mxu0 0.0
    %248 = vmatprep.subr.mxu0 0.0
    %249 = vmatpush2.msra.mxu0 0.0
    %250 = vmatprep.subr.mxu0 0.0
    %251 = vmatpush2.msra.mxu0 0.0
    %252 = vmatprep.subr.mxu0 0.0
    %253 = vmatpush2.msra.mxu0 0.0
    %254 = vmatprep.subr.mxu0 0.0
    %255 = vmatpush2.msra.mxu0 0.0
    %256 = vmatprep.subr.mxu0 0.0
    %257 = vmatpush2.msra.mxu0 0.0
    %258 = vmatprep.subr.mxu0 0.0
    %259 = vmatpush2.msra.mxu0 0.0
    %260 = vmatprep.subr.mxu0 0.0
    %261 = vmatpush2.msra.mxu0 0.0
    %262 = vmatprep.subr.mxu0 0.0
    %263 = vmatpush2.msra.mxu0 0.0
    %264 = vmatprep.mubr.f32.mxu0 0.0
    %265 = vmatmul.mubr.f32.gmra.mxu0 %v194
    %v266 = vpop.f32.mrf.mxu0
    %v267 = vadd.f32 %v190, %v266
    %v268 = vpop.f32.mrf.mxu0
    %269 = vdwg.mxu0
    %v271 = vlaneseq
    %v272 = vshrl.u32 %v271, 7
    %v273 = vsub.s32 0, %v272
    %v274 = vrot.slane %v81, %v273
    %v275 = vlaneseq
    %v276 = vshrl.u32 %v275, 7
    %v277 = vsub.s32 1, %v276
    %v278 = vrot.slane %v81, %v277
    %v279 = vlaneseq
    %v280 = vshrl.u32 %v279, 7
    %v281 = vsub.s32 2, %v280
    %v282 = vrot.slane %v81, %v281
    %v283 = vlaneseq
    %v284 = vshrl.u32 %v283, 7
    %v285 = vsub.s32 3, %v284
    %v286 = vrot.slane %v81, %v285
    %vm291 = vcmask 97280
    %v293 = vsel %vm291, %v267, 0
    %v296 = vsel %vm196, %v77, 0
    %v299 = vsel %vm196, %v78, 0
    %v302 = vsel %vm196, %v79, 0
    %v305 = vsel %vm196, %v80, 0
    %307 = vmatprep.subr.mxu0 0.0
    %308 = vmatpush1.msra.mxu0 0.0
    %309 = vmatprep.subr.mxu0 0.0
    %310 = vmatpush1.msra.mxu0 0.0
    %311 = vmatprep.subr.mxu0 0.0
    %312 = vmatpush1.msra.mxu0 0.0
    %313 = vmatprep.subr.mxu0 0.0
    %314 = vmatpush1.msra.mxu0 0.0
    %315 = vmatprep.subr.mxu0 0.0
    %316 = vmatpush1.msra.mxu0 0.0
    %317 = vmatprep.subr.mxu0 0.0
    %318 = vmatpush1.msra.mxu0 0.0
    %319 = vmatprep.subr.mxu0 0.0
    %320 = vmatpush1.msra.mxu0 0.0
    %321 = vmatprep.subr.mxu0 0.0
    %322 = vmatpush1.msra.mxu0 0.0
    %323 = vmatprep.subr.mxu0 0.0
    %324 = vmatpush1.msra.mxu0 0.0
    %325 = vmatprep.subr.mxu0 0.0
    %326 = vmatpush1.msra.mxu0 0.0
    %327 = vmatprep.subr.mxu0 0.0
    %328 = vmatpush1.msra.mxu0 0.0
    %329 = vmatprep.subr.mxu0 0.0
    %330 = vmatpush1.msra.mxu0 0.0
    %331 = vmatprep.subr.mxu0 0.0
    %332 = vmatpush1.msra.mxu0 0.0
    %333 = vmatprep.subr.mxu0 0.0
    %334 = vmatpush1.msra.mxu0 0.0
    %335 = vmatprep.subr.mxu0 %v299
    %336 = vmatpush1.msra.mxu0 %v296
    %337 = vmatprep.subr.mxu0 %v74
    %338 = vmatpush1.msra.mxu0 %v73
    %339 = vmatprep.subr.mxu0 0.0
    %340 = vmatpush2.msra.mxu0 0.0
    %341 = vmatprep.subr.mxu0 0.0
    %342 = vmatpush2.msra.mxu0 0.0
    %343 = vmatprep.subr.mxu0 0.0
    %344 = vmatpush2.msra.mxu0 0.0
    %345 = vmatprep.subr.mxu0 0.0
    %346 = vmatpush2.msra.mxu0 0.0
    %347 = vmatprep.subr.mxu0 0.0
    %348 = vmatpush2.msra.mxu0 0.0
    %349 = vmatprep.subr.mxu0 0.0
    %350 = vmatpush2.msra.mxu0 0.0
    %351 = vmatprep.subr.mxu0 0.0
    %352 = vmatpush2.msra.mxu0 0.0
    %353 = vmatprep.subr.mxu0 0.0
    %354 = vmatpush2.msra.mxu0 0.0
    %355 = vmatprep.subr.mxu0 0.0
    %356 = vmatpush2.msra.mxu0 0.0
    %357 = vmatprep.subr.mxu0 0.0
    %358 = vmatpush2.msra.mxu0 0.0
    %359 = vmatprep.subr.mxu0 0.0
    %360 = vmatpush2.msra.mxu0 0.0
    %361 = vmatprep.subr.mxu0 0.0
    %362 = vmatpush2.msra.mxu0 0.0
    %363 = vmatprep.subr.mxu0 0.0
    %364 = vmatpush2.msra.mxu0 0.0
    %365 = vmatprep.subr.mxu0 0.0
    %366 = vmatpush2.msra.mxu0 0.0
    %367 = vmatprep.subr.mxu0 0.0
    %368 = vmatpush2.msra.mxu0 0.0
    %369 = vmatprep.subr.mxu0 0.0
    %370 = vmatpush2.msra.mxu0 0.0
    %371 = vmatprep.mubr.f32.mxu0 0.0
    %372 = vmatmul.mubr.f32.gmra.mxu0 %v293
    %v373 = vpop.f32.mrf.mxu0
    %v374 = vadd.f32 %v274, %v373
    %v375 = vpop.f32.mrf.mxu0
    %v376 = vadd.f32 %v278, %v375
    %377 = vdwg.mxu0
    %378 = vmatprep.subr.mxu0 0.0
    %379 = vmatpush1.msra.mxu0 0.0
    %380 = vmatprep.subr.mxu0 0.0
    %381 = vmatpush1.msra.mxu0 0.0
    %382 = vmatprep.subr.mxu0 0.0
    %383 = vmatpush1.msra.mxu0 0.0
    %384 = vmatprep.subr.mxu0 0.0
    %385 = vmatpush1.msra.mxu0 0.0
    %386 = vmatprep.subr.mxu0 0.0
    %387 = vmatpush1.msra.mxu0 0.0
    %388 = vmatprep.subr.mxu0 0.0
    %389 = vmatpush1.msra.mxu0 0.0
    %390 = vmatprep.subr.mxu0 0.0
    %391 = vmatpush1.msra.mxu0 0.0
    %392 = vmatprep.subr.mxu0 0.0
    %393 = vmatpush1.msra.mxu0 0.0
    %394 = vmatprep.subr.mxu0 0.0
    %395 = vmatpush1.msra.mxu0 0.0
    %396 = vmatprep.subr.mxu0 0.0
    %397 = vmatpush1.msra.mxu0 0.0
    %398 = vmatprep.subr.mxu0 0.0
    %399 = vmatpush1.msra.mxu0 0.0
    %400 = vmatprep.subr.mxu0 0.0
    %401 = vmatpush1.msra.mxu0 0.0
    %402 = vmatprep.subr.mxu0 0.0
    %403 = vmatpush1.msra.mxu0 0.0
    %404 = vmatprep.subr.mxu0 0.0
    %405 = vmatpush1.msra.mxu0 0.0
    %406 = vmatprep.subr.mxu0 %v305
    %407 = vmatpush1.msra.mxu0 %v302
    %408 = vmatprep.subr.mxu0 %v76
    %409 = vmatpush1.msra.mxu0 %v75
    %410 = vmatprep.subr.mxu0 0.0
    %411 = vmatpush2.msra.mxu0 0.0
    %412 = vmatprep.subr.mxu0 0.0
    %413 = vmatpush2.msra.mxu0 0.0
    %414 = vmatprep.subr.mxu0 0.0
    %415 = vmatpush2.msra.mxu0 0.0
    %416 = vmatprep.subr.mxu0 0.0
    %417 = vmatpush2.msra.mxu0 0.0
    %418 = vmatprep.subr.mxu0 0.0
    %419 = vmatpush2.msra.mxu0 0.0
    %420 = vmatprep.subr.mxu0 0.0
    %421 = vmatpush2.msra.mxu0 0.0
    %422 = vmatprep.subr.mxu0 0.0
    %423 = vmatpush2.msra.mxu0 0.0
    %424 = vmatprep.subr.mxu0 0.0
    %425 = vmatpush2.msra.mxu0 0.0
    %426 = vmatprep.subr.mxu0 0.0
    %427 = vmatpush2.msra.mxu0 0.0
    %428 = vmatprep.subr.mxu0 0.0
    %429 = vmatpush2.msra.mxu0 0.0
    %430 = vmatprep.subr.mxu0 0.0
    %431 = vmatpush2.msra.mxu0 0.0
    %432 = vmatprep.subr.mxu0 0.0
    %433 = vmatpush2.msra.mxu0 0.0
    %434 = vmatprep.subr.mxu0 0.0
    %435 = vmatpush2.msra.mxu0 0.0
    %436 = vmatprep.subr.mxu0 0.0
    %437 = vmatpush2.msra.mxu0 0.0
    %438 = vmatprep.subr.mxu0 0.0
    %439 = vmatpush2.msra.mxu0 0.0
    %440 = vmatprep.subr.mxu0 0.0
    %441 = vmatpush2.msra.mxu0 0.0
    %442 = vmatprep.mubr.f32.mxu0 0.0
    %443 = vmatmul.mubr.f32.gmra.mxu0 %v293
    %v444 = vpop.f32.mrf.mxu0
    %v445 = vadd.f32 %v282, %v444
    %v446 = vpop.f32.mrf.mxu0
    %v447 = vadd.f32 %v286, %v446
    %448 = vdwg.mxu0
    %v449 = vmax.f32 %v374, 0.0
    %v450 = vmax.f32 %v376, 0.0
    %v451 = vmax.f32 %v445, 0.0
    %v452 = vmax.f32 %v447, 0.0
    %v454 = vlaneseq
    %v455 = vshrl.u32 %v454, 7
    %v456 = vsub.s32 0, %v455
    %v457 = vrot.slane %v132, %v456
    %vm459 = vcmask 130048
    %v461 = vsel %vm459, %v452, 0
    %463 = vmatprep.subr.mxu0 0.0
    %464 = vmatpush1.msra.mxu0 %v97
    %465 = vmatprep.subr.mxu0 0.0
    %466 = vmatpush1.msra.mxu0 %v96
    %467 = vmatprep.subr.mxu0 0.0
    %468 = vmatpush1.msra.mxu0 %v95
    %469 = vmatprep.subr.mxu0 0.0
    %470 = vmatpush1.msra.mxu0 %v94
    %471 = vmatprep.subr.mxu0 0.0
    %472 = vmatpush1.msra.mxu0 %v93
    %473 = vmatprep.subr.mxu0 0.0
    %474 = vmatpush1.msra.mxu0 %v92
    %475 = vmatprep.subr.mxu0 0.0
    %476 = vmatpush1.msra.mxu0 %v91
    %477 = vmatprep.subr.mxu0 0.0
    %478 = vmatpush1.msra.mxu0 %v90
    %479 = vmatprep.subr.mxu0 0.0
    %480 = vmatpush1.msra.mxu0 %v89
    %481 = vmatprep.subr.mxu0 0.0
    %482 = vmatpush1.msra.mxu0 %v88
    %483 = vmatprep.subr.mxu0 0.0
    %484 = vmatpush1.msra.mxu0 %v87
    %485 = vmatprep.subr.mxu0 0.0
    %486 = vmatpush1.msra.mxu0 %v86
    %487 = vmatprep.subr.mxu0 0.0
    %488 = vmatpush1.msra.mxu0 %v85
    %489 = vmatprep.subr.mxu0 0.0
    %490 = vmatpush1.msra.mxu0 %v84
    %491 = vmatprep.subr.mxu0 0.0
    %492 = vmatpush1.msra.mxu0 %v83
    %493 = vmatprep.subr.mxu0 0.0
    %494 = vmatpush1.msra.mxu0 %v82
    %495 = vmatprep.subr.mxu0 0.0
    %496 = vmatpush2.msra.mxu0 %v113
    %497 = vmatprep.subr.mxu0 0.0
    %498 = vmatpush2.msra.mxu0 %v112
    %499 = vmatprep.subr.mxu0 0.0
    %500 = vmatpush2.msra.mxu0 %v111
    %501 = vmatprep.subr.mxu0 0.0
    %502 = vmatpush2.msra.mxu0 %v110
    %503 = vmatprep.subr.mxu0 0.0
    %504 = vmatpush2.msra.mxu0 %v109
    %505 = vmatprep.subr.mxu0 0.0
    %506 = vmatpush2.msra.mxu0 %v108
    %507 = vmatprep.subr.mxu0 0.0
    %508 = vmatpush2.msra.mxu0 %v107
    %509 = vmatprep.subr.mxu0 0.0
    %510 = vmatpush2.msra.mxu0 %v106
    %511 = vmatprep.subr.mxu0 0.0
    %512 = vmatpush2.msra.mxu0 %v105
    %513 = vmatprep.subr.mxu0 0.0
    %514 = vmatpush2.msra.mxu0 %v104
    %515 = vmatprep.subr.mxu0 0.0
    %516 = vmatpush2.msra.mxu0 %v103
    %517 = vmatprep.subr.mxu0 0.0
    %518 = vmatpush2.msra.mxu0 %v102
    %519 = vmatprep.subr.mxu0 0.0
    %520 = vmatpush2.msra.mxu0 %v101
    %521 = vmatprep.subr.mxu0 0.0
    %522 = vmatpush2.msra.mxu0 %v100
    %523 = vmatprep.subr.mxu0 0.0
    %524 = vmatpush2.msra.mxu0 %v99
    %525 = vmatprep.subr.mxu0 0.0
    %526 = vmatpush2.msra.mxu0 %v98
    %527 = vmatprep.mubr.f32.mxu0 %v450
    %528 = vmatmul.mubr.f32.gmra.mxu0 %v449
    %v529 = vpop.f32.mrf.mxu0
    %v530 = vadd.f32 %v457, %v529
    %v531 = vpop.f32.mrf.mxu0
    %532 = vdwg.mxu0
    %533 = vmatprep.subr.mxu0 0.0
    %534 = vmatpush1.msra.mxu0 %v129
    %535 = vmatprep.subr.mxu0 0.0
    %536 = vmatpush1.msra.mxu0 %v128
    %537 = vmatprep.subr.mxu0 0.0
    %538 = vmatpush1.msra.mxu0 %v127
    %539 = vmatprep.subr.mxu0 0.0
    %540 = vmatpush1.msra.mxu0 %v126
    %541 = vmatprep.subr.mxu0 0.0
    %542 = vmatpush1.msra.mxu0 %v125
    %543 = vmatprep.subr.mxu0 0.0
    %544 = vmatpush1.msra.mxu0 %v124
    %545 = vmatprep.subr.mxu0 0.0
    %546 = vmatpush1.msra.mxu0 %v123
    %547 = vmatprep.subr.mxu0 0.0
    %548 = vmatpush1.msra.mxu0 %v122
    %549 = vmatprep.subr.mxu0 0.0
    %550 = vmatpush1.msra.mxu0 %v121
    %551 = vmatprep.subr.mxu0 0.0
    %552 = vmatpush1.msra.mxu0 %v120
    %553 = vmatprep.subr.mxu0 0.0
    %554 = vmatpush1.msra.mxu0 %v119
    %555 = vmatprep.subr.mxu0 0.0
    %556 = vmatpush1.msra.mxu0 %v118
    %557 = vmatprep.subr.mxu0 0.0
    %558 = vmatpush1.msra.mxu0 %v117
    %559 = vmatprep.subr.mxu0 0.0
    %560 = vmatpush1.msra.mxu0 %v116
    %561 = vmatprep.subr.mxu0 0.0
    %562 = vmatpush1.msra.mxu0 %v115
    %563 = vmatprep.subr.mxu0 0.0
    %564 = vmatpush1.msra.mxu0 %v114
    %565 = vmatprep.subr.mxu0 0.0
    %566 = vmatpush2.msra.mxu0 0.0
    %567 = vmatprep.subr.mxu0 0.0
    %568 = vmatpush2.msra.mxu0 0.0
    %569 = vmatprep.subr.mxu0 0.0
    %570 = vmatpush2.msra.mxu0 0.0
    %571 = vmatprep.subr.mxu0 0.0
    %572 = vmatpush2.msra.mxu0 0.0
    %573 = vmatprep.subr.mxu0 0.0
    %574 = vmatpush2.msra.mxu0 0.0
    %575 = vmatprep.subr.mxu0 0.0
    %576 = vmatpush2.msra.mxu0 0.0
    %577 = vmatprep.subr.mxu0 0.0
    %578 = vmatpush2.msra.mxu0 0.0
    %579 = vmatprep.subr.mxu0 0.0
    %580 = vmatpush2.msra.mxu0 0.0
    %581 = vmatprep.subr.mxu0 0.0
    %582 = vmatpush2.msra.mxu0 0.0
    %583 = vmatprep.subr.mxu0 0.0
    %584 = vmatpush2.msra.mxu0 0.0
    %585 = vmatprep.subr.mxu0 0.0
    %586 = vmatpush2.msra.mxu0 0.0
    %587 = vmatprep.subr.mxu0 0.0
    %588 = vmatpush2.msra.mxu0 0.0
    %589 = vmatprep.subr.mxu0 0.0
    %590 = vmatpush2.msra.mxu0 0.0
    %591 = vmatprep.subr.mxu0 0.0
    %592 = vmatpush2.msra.mxu0 0.0
    %593 = vmatprep.subr.mxu0 0.0
    %594 = vmatpush2.msra.mxu0 %v131
    %595 = vmatprep.subr.mxu0 0.0
    %596 = vmatpush2.msra.mxu0 %v130
    %597 = vmatprep.mubr.f32.mxu0 %v461
    %598 = vmatmul.mubr.f32.gmra.mxu0 %v451
    %v599 = vpop.f32.mrf.mxu0
    %v600 = vadd.f32 %v530, %v599
    %v601 = vpop.f32.mrf.mxu0
    %602 = vdwg.mxu0
    %v603 = vld [vmem:[%s9] sm:$0xff]
    %v604 = vld [vmem:[%s9 + $0x8] sm:$0xff]
    %v605 = vld [vmem:[%s9 + $0x10] sm:$0xf]
    %v606 = vld [vmem:[%s9 + $0x18] sm:$0xf]
    %v608 = vsel %vm196, %v605, 0
    %v611 = vsel %vm196, %v606, 0
    %613 = vmatprep.subr.mxu0 0.0
    %614 = vmatpush1.msra.mxu0 0.0
    %615 = vmatprep.subr.mxu0 0.0
    %616 = vmatpush1.msra.mxu0 0.0
    %617 = vmatprep.subr.mxu0 0.0
    %618 = vmatpush1.msra.mxu0 0.0
    %619 = vmatprep.subr.mxu0 0.0
    %620 = vmatpush1.msra.mxu0 0.0
    %621 = vmatprep.subr.mxu0 0.0
    %622 = vmatpush1.msra.mxu0 0.0
    %623 = vmatprep.subr.mxu0 0.0
    %624 = vmatpush1.msra.mxu0 0.0
    %625 = vmatprep.subr.mxu0 0.0
    %626 = vmatpush1.msra.mxu0 0.0
    %627 = vmatprep.subr.mxu0 0.0
    %628 = vmatpush1.msra.mxu0 0.0
    %629 = vmatprep.subr.mxu0 0.0
    %630 = vmatpush1.msra.mxu0 0.0
    %631 = vmatprep.subr.mxu0 0.0
    %632 = vmatpush1.msra.mxu0 0.0
    %633 = vmatprep.subr.mxu0 0.0
    %634 = vmatpush1.msra.mxu0 0.0
    %635 = vmatprep.subr.mxu0 0.0
    %636 = vmatpush1.msra.mxu0 0.0
    %637 = vmatprep.subr.mxu0 0.0
    %638 = vmatpush1.msra.mxu0 0.0
    %639 = vmatprep.subr.mxu0 0.0
    %640 = vmatpush1.msra.mxu0 0.0
    %641 = vmatprep.subr.mxu0 %v611
    %642 = vmatpush1.msra.mxu0 %v608
    %643 = vmatprep.subr.mxu0 %v604
    %644 = vmatpush1.msra.mxu0 %v603
    %645 = vmatprep.subr.mxu0 0.0
    %646 = vmatpush2.msra.mxu0 0.0
    %647 = vmatprep.subr.mxu0 0.0
    %648 = vmatpush2.msra.mxu0 0.0
    %649 = vmatprep.subr.mxu0 0.0
    %650 = vmatpush2.msra.mxu0 0.0
    %651 = vmatprep.subr.mxu0 0.0
    %652 = vmatpush2.msra.mxu0 0.0
    %653 = vmatprep.subr.mxu0 0.0
    %654 = vmatpush2.msra.mxu0 0.0
    %655 = vmatprep.subr.mxu0 0.0
    %656 = vmatpush2.msra.mxu0 0.0
    %657 = vmatprep.subr.mxu0 0.0
    %658 = vmatpush2.msra.mxu0 0.0
    %659 = vmatprep.subr.mxu0 0.0
    %660 = vmatpush2.msra.mxu0 0.0
    %661 = vmatprep.subr.mxu0 0.0
    %662 = vmatpush2.msra.mxu0 0.0
    %663 = vmatprep.subr.mxu0 0.0
    %664 = vmatpush2.msra.mxu0 0.0
    %665 = vmatprep.subr.mxu0 0.0
    %666 = vmatpush2.msra.mxu0 0.0
    %667 = vmatprep.subr.mxu0 0.0
    %668 = vmatpush2.msra.mxu0 0.0
    %669 = vmatprep.subr.mxu0 0.0
    %670 = vmatpush2.msra.mxu0 0.0
    %671 = vmatprep.subr.mxu0 0.0
    %672 = vmatpush2.msra.mxu0 0.0
    %673 = vmatprep.subr.mxu0 0.0
    %674 = vmatpush2.msra.mxu0 0.0
    %675 = vmatprep.subr.mxu0 0.0
    %676 = vmatpush2.msra.mxu0 0.0
    %677 = vmatprep.mubr.f32.mxu0 0.0
    %678 = vmatmul.mubr.f32.gmra.mxu0 %v293
    %v679 = vpop.f32.mrf.mxu0
    %v680 = vadd.f32 0.0, %v679
    %v681 = vpop.f32.mrf.mxu0
    %v682 = vadd.f32 0.0, %v681
    %683 = vdwg.mxu0
    %v684 = vld [vmem:[%s14] sm:$0xff]
    %v685 = vld [vmem:[%s14 + $0x8] sm:$0xf]
    %v687 = vsel %vm196, %v685, 0
    %689 = vmatprep.subr.mxu0 0.0
    %690 = vmatpush1.msra.mxu0 0.0
    %691 = vmatprep.subr.mxu0 0.0
    %692 = vmatpush1.msra.mxu0 0.0
    %693 = vmatprep.subr.mxu0 0.0
    %694 = vmatpush1.msra.mxu0 0.0
    %695 = vmatprep.subr.mxu0 0.0
    %696 = vmatpush1.msra.mxu0 0.0
    %697 = vmatprep.subr.mxu0 0.0
    %698 = vmatpush1.msra.mxu0 0.0
    %699 = vmatprep.subr.mxu0 0.0
    %700 = vmatpush1.msra.mxu0 0.0
    %701 = vmatprep.subr.mxu0 0.0
    %702 = vmatpush1.msra.mxu0 0.0
    %703 = vmatprep.subr.mxu0 0.0
    %704 = vmatpush1.msra.mxu0 0.0
    %705 = vmatprep.subr.mxu0 0.0
    %706 = vmatpush1.msra.mxu0 0.0
    %707 = vmatprep.subr.mxu0 0.0
    %708 = vmatpush1.msra.mxu0 0.0
    %709 = vmatprep.subr.mxu0 0.0
    %710 = vmatpush1.msra.mxu0 0.0
    %711 = vmatprep.subr.mxu0 0.0
    %712 = vmatpush1.msra.mxu0 0.0
    %713 = vmatprep.subr.mxu0 0.0
    %714 = vmatpush1.msra.mxu0 0.0
    %715 = vmatprep.subr.mxu0 0.0
    %716 = vmatpush1.msra.mxu0 0.0
    %717 = vmatprep.subr.mxu0 0.0
    %718 = vmatpush1.msra.mxu0 %v687
    %719 = vmatprep.subr.mxu0 0.0
    %720 = vmatpush1.msra.mxu0 %v684
    %721 = vmatprep.subr.mxu0 0.0
    %722 = vmatpush2.msra.mxu0 0.0
    %723 = vmatprep.subr.mxu0 0.0
    %724 = vmatpush2.msra.mxu0 0.0
    %725 = vmatprep.subr.mxu0 0.0
    %726 = vmatpush2.msra.mxu0 0.0
    %727 = vmatprep.subr.mxu0 0.0
    %728 = vmatpush2.msra.mxu0 0.0
    %729 = vmatprep.subr.mxu0 0.0
    %730 = vmatpush2.msra.mxu0 0.0
    %731 = vmatprep.subr.mxu0 0.0
    %732 = vmatpush2.msra.mxu0 0.0
    %733 = vmatprep.subr.mxu0 0.0
    %734 = vmatpush2.msra.mxu0 0.0
    %735 = vmatprep.subr.mxu0 0.0
    %736 = vmatpush2.msra.mxu0 0.0
    %737 = vmatprep.subr.mxu0 0.0
    %738 = vmatpush2.msra.mxu0 0.0
    %739 = vmatprep.subr.mxu0 0.0
    %740 = vmatpush2.msra.mxu0 0.0
    %741 = vmatprep.subr.mxu0 0.0
    %742 = vmatpush2.msra.mxu0 0.0
    %743 = vmatprep.subr.mxu0 0.0
    %744 = vmatpush2.msra.mxu0 0.0
    %745 = vmatprep.subr.mxu0 0.0
    %746 = vmatpush2.msra.mxu0 0.0
    %747 = vmatprep.subr.mxu0 0.0
    %748 = vmatpush2.msra.mxu0 0.0
    %749 = vmatprep.subr.mxu0 0.0
    %750 = vmatpush2.msra.mxu0 0.0
    %751 = vmatprep.subr.mxu0 0.0
    %752 = vmatpush2.msra.mxu0 0.0
    %753 = vmatprep.mubr.f32.mxu0 0.0
    %754 = vmatmul.mubr.f32.gmra.mxu0 %v293
    %v755 = vpop.f32.mrf.mxu0
    %v756 = vadd.f32 0.0, %v755
    %v757 = vpop.f32.mrf.mxu0
    %758 = vdwg.mxu0
    %v759 = vld [vmem:[%s1] sm:$0xff]
    %v760 = vld [vmem:[%s1 + $0x8] sm:$0xff]
    %v761 = vadd.f32 %v759, %v71
    %v762 = vadd.f32 %v760, %v72
    %v764 = vsel %vm291, %v761, 0
    %v767 = vsel %vm291, %v762, 0
    %769 = vmatprep.subr.mxu0 0.0
    %770 = vmatpush1.msra.mxu0 0.0
    %771 = vmatprep.subr.mxu0 0.0
    %772 = vmatpush1.msra.mxu0 0.0
    %773 = vmatprep.subr.mxu0 0.0
    %774 = vmatpush1.msra.mxu0 0.0
    %775 = vmatprep.subr.mxu0 0.0
    %776 = vmatpush1.msra.mxu0 0.0
    %777 = vmatprep.subr.mxu0 0.0
    %778 = vmatpush1.msra.mxu0 0.0
    %779 = vmatprep.subr.mxu0 0.0
    %780 = vmatpush1.msra.mxu0 0.0
    %781 = vmatprep.subr.mxu0 0.0
    %782 = vmatpush1.msra.mxu0 0.0
    %783 = vmatprep.subr.mxu0 0.0
    %784 = vmatpush1.msra.mxu0 0.0
    %785 = vmatprep.subr.mxu0 0.0
    %786 = vmatpush1.msra.mxu0 0.0
    %787 = vmatprep.subr.mxu0 0.0
    %788 = vmatpush1.msra.mxu0 0.0
    %789 = vmatprep.subr.mxu0 0.0
    %790 = vmatpush1.msra.mxu0 0.0
    %791 = vmatprep.subr.mxu0 0.0
    %792 = vmatpush1.msra.mxu0 0.0
    %793 = vmatprep.subr.mxu0 0.0
    %794 = vmatpush1.msra.mxu0 0.0
    %795 = vmatprep.subr.mxu0 0.0
    %796 = vmatpush1.msra.mxu0 0.0
    %797 = vmatprep.subr.mxu0 %v299
    %798 = vmatpush1.msra.mxu0 %v296
    %799 = vmatprep.subr.mxu0 %v74
    %800 = vmatpush1.msra.mxu0 %v73
    %801 = vmatprep.subr.mxu0 0.0
    %802 = vmatpush2.msra.mxu0 0.0
    %803 = vmatprep.subr.mxu0 0.0
    %804 = vmatpush2.msra.mxu0 0.0
    %805 = vmatprep.subr.mxu0 0.0
    %806 = vmatpush2.msra.mxu0 0.0
    %807 = vmatprep.subr.mxu0 0.0
    %808 = vmatpush2.msra.mxu0 0.0
    %809 = vmatprep.subr.mxu0 0.0
    %810 = vmatpush2.msra.mxu0 0.0
    %811 = vmatprep.subr.mxu0 0.0
    %812 = vmatpush2.msra.mxu0 0.0
    %813 = vmatprep.subr.mxu0 0.0
    %814 = vmatpush2.msra.mxu0 0.0
    %815 = vmatprep.subr.mxu0 0.0
    %816 = vmatpush2.msra.mxu0 0.0
    %817 = vmatprep.subr.mxu0 0.0
    %818 = vmatpush2.msra.mxu0 0.0
    %819 = vmatprep.subr.mxu0 0.0
    %820 = vmatpush2.msra.mxu0 0.0
    %821 = vmatprep.subr.mxu0 0.0
    %822 = vmatpush2.msra.mxu0 0.0
    %823 = vmatprep.subr.mxu0 0.0
    %824 = vmatpush2.msra.mxu0 0.0
    %825 = vmatprep.subr.mxu0 0.0
    %826 = vmatpush2.msra.mxu0 0.0
    %827 = vmatprep.subr.mxu0 0.0
    %828 = vmatpush2.msra.mxu0 0.0
    %829 = vmatprep.subr.mxu0 0.0
    %830 = vmatpush2.msra.mxu0 0.0
    %831 = vmatprep.subr.mxu0 0.0
    %832 = vmatpush2.msra.mxu0 0.0
    %833 = vmatprep.mubr.f32.mxu0 0.0
    %834 = vmatmul.mubr.f32.gmra.mxu0 %v764
    %v835 = vpop.f32.mrf.mxu0
    %v836 = vadd.f32 %v274, %v835
    %v837 = vpop.f32.mrf.mxu0
    %v838 = vadd.f32 %v278, %v837
    %839 = vmatprep.mubr.f32.mxu0 0.0
    %840 = vmatmul.mubr.f32.gmra.mxu0 %v767
    %v841 = vpop.f32.mrf.mxu0
    %v842 = vadd.f32 %v274, %v841
    %v843 = vpop.f32.mrf.mxu0
    %v844 = vadd.f32 %v278, %v843
    %845 = vdwg.mxu0
    %846 = vmatprep.subr.mxu0 0.0
    %847 = vmatpush1.msra.mxu0 0.0
    %848 = vmatprep.subr.mxu0 0.0
    %849 = vmatpush1.msra.mxu0 0.0
    %850 = vmatprep.subr.mxu0 0.0
    %851 = vmatpush1.msra.mxu0 0.0
    %852 = vmatprep.subr.mxu0 0.0
    %853 = vmatpush1.msra.mxu0 0.0
    %854 = vmatprep.subr.mxu0 0.0
    %855 = vmatpush1.msra.mxu0 0.0
    %856 = vmatprep.subr.mxu0 0.0
    %857 = vmatpush1.msra.mxu0 0.0
    %858 = vmatprep.subr.mxu0 0.0
    %859 = vmatpush1.msra.mxu0 0.0
    %860 = vmatprep.subr.mxu0 0.0
    %861 = vmatpush1.msra.mxu0 0.0
    %862 = vmatprep.subr.mxu0 0.0
    %863 = vmatpush1.msra.mxu0 0.0
    %864 = vmatprep.subr.mxu0 0.0
    %865 = vmatpush1.msra.mxu0 0.0
    %866 = vmatprep.subr.mxu0 0.0
    %867 = vmatpush1.msra.mxu0 0.0
    %868 = vmatprep.subr.mxu0 0.0
    %869 = vmatpush1.msra.mxu0 0.0
    %870 = vmatprep.subr.mxu0 0.0
    %871 = vmatpush1.msra.mxu0 0.0
    %872 = vmatprep.subr.mxu0 0.0
    %873 = vmatpush1.msra.mxu0 0.0
    %874 = vmatprep.subr.mxu0 %v305
    %875 = vmatpush1.msra.mxu0 %v302
    %876 = vmatprep.subr.mxu0 %v76
    %877 = vmatpush1.msra.mxu0 %v75
    %878 = vmatprep.subr.mxu0 0.0
    %879 = vmatpush2.msra.mxu0 0.0
    %880 = vmatprep.subr.mxu0 0.0
    %881 = vmatpush2.msra.mxu0 0.0
    %882 = vmatprep.subr.mxu0 0.0
    %883 = vmatpush2.msra.mxu0 0.0
    %884 = vmatprep.subr.mxu0 0.0
    %885 = vmatpush2.msra.mxu0 0.0
    %886 = vmatprep.subr.mxu0 0.0
    %887 = vmatpush2.msra.mxu0 0.0
    %888 = vmatprep.subr.mxu0 0.0
    %889 = vmatpush2.msra.mxu0 0.0
    %890 = vmatprep.subr.mxu0 0.0
    %891 = vmatpush2.msra.mxu0 0.0
    %892 = vmatprep.subr.mxu0 0.0
    %893 = vmatpush2.msra.mxu0 0.0
    %894 = vmatprep.subr.mxu0 0.0
    %895 = vmatpush2.msra.mxu0 0.0
    %896 = vmatprep.subr.mxu0 0.0
    %897 = vmatpush2.msra.mxu0 0.0
    %898 = vmatprep.subr.mxu0 0.0
    %899 = vmatpush2.msra.mxu0 0.0
    %900 = vmatprep.subr.mxu0 0.0
    %901 = vmatpush2.msra.mxu0 0.0
    %902 = vmatprep.subr.mxu0 0.0
    %903 = vmatpush2.msra.mxu0 0.0
    %904 = vmatprep.subr.mxu0 0.0
    %905 = vmatpush2.msra.mxu0 0.0
    %906 = vmatprep.subr.mxu0 0.0
    %907 = vmatpush2.msra.mxu0 0.0
    %908 = vmatprep.subr.mxu0 0.0
    %909 = vmatpush2.msra.mxu0 0.0
    %910 = vmatprep.mubr.f32.mxu0 0.0
    %911 = vmatmul.mubr.f32.gmra.mxu0 %v764
    %v912 = vpop.f32.mrf.mxu0
    %v913 = vadd.f32 %v282, %v912
    %v914 = vpop.f32.mrf.mxu0
    %v915 = vadd.f32 %v286, %v914
    %916 = vmatprep.mubr.f32.mxu0 0.0
    %917 = vmatmul.mubr.f32.gmra.mxu0 %v767
    %v918 = vpop.f32.mrf.mxu0
    %v919 = vadd.f32 %v282, %v918
    %v920 = vpop.f32.mrf.mxu0
    %v921 = vadd.f32 %v286, %v920
    %922 = vdwg.mxu0
    %v923 = vmax.f32 %v836, 0.0
    %v924 = vmax.f32 %v838, 0.0
    %v925 = vmax.f32 %v913, 0.0
    %v926 = vmax.f32 %v915, 0.0
    %v927 = vmax.f32 %v842, 0.0
    %v928 = vmax.f32 %v844, 0.0
    %v929 = vmax.f32 %v919, 0.0
    %v930 = vmax.f32 %v921, 0.0
    %v932 = vsel %vm459, %v926, 0
    %v935 = vsel %vm459, %v930, 0
    %937 = vmatprep.subr.mxu0 0.0
    %938 = vmatpush1.msra.mxu0 %v97
    %939 = vmatprep.subr.mxu0 0.0
    %940 = vmatpush1.msra.mxu0 %v96
    %941 = vmatprep.subr.mxu0 0.0
    %942 = vmatpush1.msra.mxu0 %v95
    %943 = vmatprep.subr.mxu0 0.0
    %944 = vmatpush1.msra.mxu0 %v94
    %945 = vmatprep.subr.mxu0 0.0
    %946 = vmatpush1.msra.mxu0 %v93
    %947 = vmatprep.subr.mxu0 0.0
    %948 = vmatpush1.msra.mxu0 %v92
    %949 = vmatprep.subr.mxu0 0.0
    %950 = vmatpush1.msra.mxu0 %v91
    %951 = vmatprep.subr.mxu0 0.0
    %952 = vmatpush1.msra.mxu0 %v90
    %953 = vmatprep.subr.mxu0 0.0
    %954 = vmatpush1.msra.mxu0 %v89
    %955 = vmatprep.subr.mxu0 0.0
    %956 = vmatpush1.msra.mxu0 %v88
    %957 = vmatprep.subr.mxu0 0.0
    %958 = vmatpush1.msra.mxu0 %v87
    %959 = vmatprep.subr.mxu0 0.0
    %960 = vmatpush1.msra.mxu0 %v86
    %961 = vmatprep.subr.mxu0 0.0
    %962 = vmatpush1.msra.mxu0 %v85
    %963 = vmatprep.subr.mxu0 0.0
    %964 = vmatpush1.msra.mxu0 %v84
    %965 = vmatprep.subr.mxu0 0.0
    %966 = vmatpush1.msra.mxu0 %v83
    %967 = vmatprep.subr.mxu0 0.0
    %968 = vmatpush1.msra.mxu0 %v82
    %969 = vmatprep.subr.mxu0 0.0
    %970 = vmatpush2.msra.mxu0 %v113
    %971 = vmatprep.subr.mxu0 0.0
    %972 = vmatpush2.msra.mxu0 %v112
    %973 = vmatprep.subr.mxu0 0.0
    %974 = vmatpush2.msra.mxu0 %v111
    %975 = vmatprep.subr.mxu0 0.0
    %976 = vmatpush2.msra.mxu0 %v110
    %977 = vmatprep.subr.mxu0 0.0
    %978 = vmatpush2.msra.mxu0 %v109
    %979 = vmatprep.subr.mxu0 0.0
    %980 = vmatpush2.msra.mxu0 %v108
    %981 = vmatprep.subr.mxu0 0.0
    %982 = vmatpush2.msra.mxu0 %v107
    %983 = vmatprep.subr.mxu0 0.0
    %984 = vmatpush2.msra.mxu0 %v106
    %985 = vmatprep.subr.mxu0 0.0
    %986 = vmatpush2.msra.mxu0 %v105
    %987 = vmatprep.subr.mxu0 0.0
    %988 = vmatpush2.msra.mxu0 %v104
    %989 = vmatprep.subr.mxu0 0.0
    %990 = vmatpush2.msra.mxu0 %v103
    %991 = vmatprep.subr.mxu0 0.0
    %992 = vmatpush2.msra.mxu0 %v102
    %993 = vmatprep.subr.mxu0 0.0
    %994 = vmatpush2.msra.mxu0 %v101
    %995 = vmatprep.subr.mxu0 0.0
    %996 = vmatpush2.msra.mxu0 %v100
    %997 = vmatprep.subr.mxu0 0.0
    %998 = vmatpush2.msra.mxu0 %v99
    %999 = vmatprep.subr.mxu0 0.0
    %1000 = vmatpush2.msra.mxu0 %v98
    %1001 = vmatprep.mubr.f32.mxu0 %v924
    %1002 = vmatmul.mubr.f32.gmra.mxu0 %v923
    %v1003 = vpop.f32.mrf.mxu0
    %v1004 = vadd.f32 %v457, %v1003
    %v1005 = vpop.f32.mrf.mxu0
    %1006 = vmatprep.mubr.f32.mxu0 %v928
    %1007 = vmatmul.mubr.f32.gmra.mxu0 %v927
    %v1008 = vpop.f32.mrf.mxu0
    %v1009 = vadd.f32 %v457, %v1008
    %v1010 = vpop.f32.mrf.mxu0
    %1011 = vdwg.mxu0
    %1012 = vmatprep.subr.mxu0 0.0
    %1013 = vmatpush1.msra.mxu0 %v129
    %1014 = vmatprep.subr.mxu0 0.0
    %1015 = vmatpush1.msra.mxu0 %v128
    %1016 = vmatprep.subr.mxu0 0.0
    %1017 = vmatpush1.msra.mxu0 %v127
    %1018 = vmatprep.subr.mxu0 0.0
    %1019 = vmatpush1.msra.mxu0 %v126
    %1020 = vmatprep.subr.mxu0 0.0
    %1021 = vmatpush1.msra.mxu0 %v125
    %1022 = vmatprep.subr.mxu0 0.0
    %1023 = vmatpush1.msra.mxu0 %v124
    %1024 = vmatprep.subr.mxu0 0.0
    %1025 = vmatpush1.msra.mxu0 %v123
    %1026 = vmatprep.subr.mxu0 0.0
    %1027 = vmatpush1.msra.mxu0 %v122
    %1028 = vmatprep.subr.mxu0 0.0
    %1029 = vmatpush1.msra.mxu0 %v121
    %1030 = vmatprep.subr.mxu0 0.0
    %1031 = vmatpush1.msra.mxu0 %v120
    %1032 = vmatprep.subr.mxu0 0.0
    %1033 = vmatpush1.msra.mxu0 %v119
    %1034 = vmatprep.subr.mxu0 0.0
    %1035 = vmatpush1.msra.mxu0 %v118
    %1036 = vmatprep.subr.mxu0 0.0
    %1037 = vmatpush1.msra.mxu0 %v117
    %1038 = vmatprep.subr.mxu0 0.0
    %1039 = vmatpush1.msra.mxu0 %v116
    %1040 = vmatprep.subr.mxu0 0.0
    %1041 = vmatpush1.msra.mxu0 %v115
    %1042 = vmatprep.subr.mxu0 0.0
    %1043 = vmatpush1.msra.mxu0 %v114
    %1044 = vmatprep.subr.mxu0 0.0
    %1045 = vmatpush2.msra.mxu0 0.0
    %1046 = vmatprep.subr.mxu0 0.0
    %1047 = vmatpush2.msra.mxu0 0.0
    %1048 = vmatprep.subr.mxu0 0.0
    %1049 = vmatpush2.msra.mxu0 0.0
    %1050 = vmatprep.subr.mxu0 0.0
    %1051 = vmatpush2.msra.mxu0 0.0
    %1052 = vmatprep.subr.mxu0 0.0
    %1053 = vmatpush2.msra.mxu0 0.0
    %1054 = vmatprep.subr.mxu0 0.0
    %1055 = vmatpush2.msra.mxu0 0.0
    %1056 = vmatprep.subr.mxu0 0.0
    %1057 = vmatpush2.msra.mxu0 0.0
    %1058 = vmatprep.subr.mxu0 0.0
    %1059 = vmatpush2.msra.mxu0 0.0
    %1060 = vmatprep.subr.mxu0 0.0
    %1061 = vmatpush2.msra.mxu0 0.0
    %1062 = vmatprep.subr.mxu0 0.0
    %1063 = vmatpush2.msra.mxu0 0.0
    %1064 = vmatprep.subr.mxu0 0.0
    %1065 = vmatpush2.msra.mxu0 0.0
    %1066 = vmatprep.subr.mxu0 0.0
    %1067 = vmatpush2.msra.mxu0 0.0
    %1068 = vmatprep.subr.mxu0 0.0
    %1069 = vmatpush2.msra.mxu0 0.0
    %1070 = vmatprep.subr.mxu0 0.0
    %1071 = vmatpush2.msra.mxu0 0.0
    %1072 = vmatprep.subr.mxu0 0.0
    %1073 = vmatpush2.msra.mxu0 %v131
    %1074 = vmatprep.subr.mxu0 0.0
    %1075 = vmatpush2.msra.mxu0 %v130
    %1076 = vmatprep.mubr.f32.mxu0 %v932
    %1077 = vmatmul.mubr.f32.gmra.mxu0 %v925
    %v1078 = vpop.f32.mrf.mxu0
    %v1079 = vadd.f32 %v1004, %v1078
    %v1080 = vpop.f32.mrf.mxu0
    %1081 = vmatprep.mubr.f32.mxu0 %v935
    %1082 = vmatmul.mubr.f32.gmra.mxu0 %v929
    %v1083 = vpop.f32.mrf.mxu0
    %v1084 = vadd.f32 %v1009, %v1083
    %v1085 = vpop.f32.mrf.mxu0
    %1086 = vdwg.mxu0
    %vm1087 = vcmask 138368
    %v1088 = vsel %vm1087, %v1079, -inf
    %v1089 = vsel %vm1087, %v1084, -inf
    %v1090 = vmax.f32 %v1088, %v1089
    %v1091 = vrot.slane %v1090, 4
    %v1092 = vmax.f32 %v1090, %v1091
    %v1093 = vrot.slane %v1092, 2
    %v1094 = vmax.f32 %v1092, %v1093
    %v1095 = vrot.slane %v1094, 1
    %v1096 = vmax.f32 %v1094, %v1095
    %v1097 = vmax.f32 %v1096, %v600
    %v1098 = vsub.f32 %v600, %v1097
    %v1099 = vmul.f32 %v1098, 1.442695
    %v1100 = vpow.pop %v1099
    %v1101 = vlaneseq
    %v1102 = vshrl.u32 %v1101, 7
    %v1103 = vsub.s32 0, %v1102
    %v1104 = vrot.slane %v1097, %v1103
    %v1105 = vsub.f32 %v1079, %v1104
    %v1106 = vsub.f32 %v1084, %v1104
    %v1107 = vmul.f32 %v1105, 1.442695
    %v1108 = vpow.pop %v1107
    %v1109 = vmul.f32 %v1106, 1.442695
    %v1110 = vpow.pop %v1109
    %v1111 = vsel %vm1087, %v1108, 0.0
    %v1112 = vsel %vm1087, %v1110, 0.0
    %v1113 = vadd.f32 %v1111, %v1112
    %v1114 = vrot.slane %v1113, 4
    %v1115 = vadd.f32 %v1113, %v1114
    %v1116 = vrot.slane %v1115, 2
    %v1117 = vadd.f32 %v1115, %v1116
    %v1118 = vrot.slane %v1117, 1
    %v1119 = vadd.f32 %v1117, %v1118
    %v1120 = vadd.f32 %v1119, %v1100
    %v1121 = vrcp.pop %v1120
    %v1122 = vmul.f32 %v1100, %v1121
    %1124 = vset.pattern.permute.xlu0 16
    %1125 = vperm.xlu0 %1124, %v1122
    %v1126 = vpop.permute.xlu0 %1125
    %v1128 = vmul.f32 %v1126, %v267
    %v1129 = vlaneseq
    %v1130 = vshrl.u32 %v1129, 7
    %v1131 = vsub.s32 0, %v1130
    %v1132 = vrot.slane %v1121, %v1131
    %v1133 = vmul.f32 %v1108, %v1132
    %v1134 = vmul.f32 %v1110, %v1132
    %1137 = vrot.lane.b32.xlu0 %v1133, 112
    %v1138 = vpop.permute.xlu0 %1137
    %1139 = vrot.lane.b32.xlu0 %v1134, 112
    %v1140 = vpop.permute.xlu0 %1139
    %1143 = vxpose.xlu0.b32.start [1/16] %v1138, 128
    %1144 = vxpose.xlu0.b32.cont [2/16] %v1140, 128
    %1145 = vxpose.xlu0.b32.cont [3/16] 0.0, 128
    %1146 = vxpose.xlu0.b32.cont [4/16] 0.0, 128
    %1147 = vxpose.xlu0.b32.cont [5/16] 0.0, 128
    %1148 = vxpose.xlu0.b32.cont [6/16] 0.0, 128
    %1149 = vxpose.xlu0.b32.cont [7/16] 0.0, 128
    %1150 = vxpose.xlu0.b32.cont [8/16] 0.0, 128
    %1151 = vxpose.xlu0.b32.cont [9/16] 0.0, 128
    %1152 = vxpose.xlu0.b32.cont [10/16] 0.0, 128
    %1153 = vxpose.xlu0.b32.cont [11/16] 0.0, 128
    %1154 = vxpose.xlu0.b32.cont [12/16] 0.0, 128
    %1155 = vxpose.xlu0.b32.cont [13/16] 0.0, 128
    %1156 = vxpose.xlu0.b32.cont [14/16] 0.0, 128
    %1157 = vxpose.xlu0.b32.cont [15/16] 0.0, 128
    %1158 = vxpose.xlu0.b32.end [16/16] 0.0, 128
    %v1159 = vpop.trf.xlu0
    %v1160 = vpop.trf.xlu0
    %v1161 = vpop.trf.xlu0
    %v1162 = vpop.trf.xlu0
    %v1163 = vpop.trf.xlu0
    %v1164 = vpop.trf.xlu0
    %v1165 = vpop.trf.xlu0
    %v1166 = vpop.trf.xlu0
    %v1167 = vpop.trf.xlu0
    %v1168 = vpop.trf.xlu0
    %v1169 = vpop.trf.xlu0
    %v1170 = vpop.trf.xlu0
    %v1171 = vpop.trf.xlu0
    %v1172 = vpop.trf.xlu0
    %v1173 = vpop.trf.xlu0
    %v1174 = vpop.trf.xlu0
    %v1176 = vsel %vm459, %v1159, 0
    %1178 = vmatprep.subr.mxu0 0.0
    %1179 = vmatpush1.msra.mxu0 0.0
    %1180 = vmatprep.subr.mxu0 0.0
    %1181 = vmatpush1.msra.mxu0 0.0
    %1182 = vmatprep.subr.mxu0 0.0
    %1183 = vmatpush1.msra.mxu0 0.0
    %1184 = vmatprep.subr.mxu0 0.0
    %1185 = vmatpush1.msra.mxu0 0.0
    %1186 = vmatprep.subr.mxu0 0.0
    %1187 = vmatpush1.msra.mxu0 0.0
    %1188 = vmatprep.subr.mxu0 0.0
    %1189 = vmatpush1.msra.mxu0 0.0
    %1190 = vmatprep.subr.mxu0 0.0
    %1191 = vmatpush1.msra.mxu0 0.0
    %1192 = vmatprep.subr.mxu0 0.0
    %1193 = vmatpush1.msra.mxu0 0.0
    %1194 = vmatprep.subr.mxu0 0.0
    %1195 = vmatpush1.msra.mxu0 0.0
    %1196 = vmatprep.subr.mxu0 0.0
    %1197 = vmatpush1.msra.mxu0 0.0
    %1198 = vmatprep.subr.mxu0 0.0
    %1199 = vmatpush1.msra.mxu0 0.0
    %1200 = vmatprep.subr.mxu0 0.0
    %1201 = vmatpush1.msra.mxu0 0.0
    %1202 = vmatprep.subr.mxu0 0.0
    %1203 = vmatpush1.msra.mxu0 0.0
    %1204 = vmatprep.subr.mxu0 0.0
    %1205 = vmatpush1.msra.mxu0 0.0
    %1206 = vmatprep.subr.mxu0 0.0
    %1207 = vmatpush1.msra.mxu0 %v762
    %1208 = vmatprep.subr.mxu0 0.0
    %1209 = vmatpush1.msra.mxu0 %v761
    %1210 = vmatprep.subr.mxu0 0.0
    %1211 = vmatpush2.msra.mxu0 0.0
    %1212 = vmatprep.subr.mxu0 0.0
    %1213 = vmatpush2.msra.mxu0 0.0
    %1214 = vmatprep.subr.mxu0 0.0
    %1215 = vmatpush2.msra.mxu0 0.0
    %1216 = vmatprep.subr.mxu0 0.0
    %1217 = vmatpush2.msra.mxu0 0.0
    %1218 = vmatprep.subr.mxu0 0.0
    %1219 = vmatpush2.msra.mxu0 0.0
    %1220 = vmatprep.subr.mxu0 0.0
    %1221 = vmatpush2.msra.mxu0 0.0
    %1222 = vmatprep.subr.mxu0 0.0
    %1223 = vmatpush2.msra.mxu0 0.0
    %1224 = vmatprep.subr.mxu0 0.0
    %1225 = vmatpush2.msra.mxu0 0.0
    %1226 = vmatprep.subr.mxu0 0.0
    %1227 = vmatpush2.msra.mxu0 0.0
    %1228 = vmatprep.subr.mxu0 0.0
    %1229 = vmatpush2.msra.mxu0 0.0
    %1230 = vmatprep.subr.mxu0 0.0
    %1231 = vmatpush2.msra.mxu0 0.0
    %1232 = vmatprep.subr.mxu0 0.0
    %1233 = vmatpush2.msra.mxu0 0.0
    %1234 = vmatprep.subr.mxu0 0.0
    %1235 = vmatpush2.msra.mxu0 0.0
    %1236 = vmatprep.subr.mxu0 0.0
    %1237 = vmatpush2.msra.mxu0 0.0
    %1238 = vmatprep.subr.mxu0 0.0
    %1239 = vmatpush2.msra.mxu0 0.0
    %1240 = vmatprep.subr.mxu0 0.0
    %1241 = vmatpush2.msra.mxu0 0.0
    %1242 = vmatprep.mubr.f32.mxu0 0.0
    %1243 = vmatmul.mubr.f32.gmra.mxu0 %v1176
    %v1244 = vpop.f32.mrf.mxu0
    %v1245 = vadd.f32 0.0, %v1244
    %v1246 = vpop.f32.mrf.mxu0
    %1247 = vdwg.mxu0
    %v1248 = vadd.f32 %v1128, %v1245
    %v1250 = vsel %vm291, %v1248, 0
    %v1253 = vsel %vm196, %v135, 0
    %v1256 = vsel %vm196, %v136, 0
    %1258 = vmatprep.subr.mxu0 0.0
    %1259 = vmatpush1.msra.mxu0 0.0
    %1260 = vmatprep.subr.mxu0 0.0
    %1261 = vmatpush1.msra.mxu0 0.0
    %1262 = vmatprep.subr.mxu0 0.0
    %1263 = vmatpush1.msra.mxu0 0.0
    %1264 = vmatprep.subr.mxu0 0.0
    %1265 = vmatpush1.msra.mxu0 0.0
    %1266 = vmatprep.subr.mxu0 0.0
    %1267 = vmatpush1.msra.mxu0 0.0
    %1268 = vmatprep.subr.mxu0 0.0
    %1269 = vmatpush1.msra.mxu0 0.0
    %1270 = vmatprep.subr.mxu0 0.0
    %1271 = vmatpush1.msra.mxu0 0.0
    %1272 = vmatprep.subr.mxu0 0.0
    %1273 = vmatpush1.msra.mxu0 0.0
    %1274 = vmatprep.subr.mxu0 0.0
    %1275 = vmatpush1.msra.mxu0 0.0
    %1276 = vmatprep.subr.mxu0 0.0
    %1277 = vmatpush1.msra.mxu0 0.0
    %1278 = vmatprep.subr.mxu0 0.0
    %1279 = vmatpush1.msra.mxu0 0.0
    %1280 = vmatprep.subr.mxu0 0.0
    %1281 = vmatpush1.msra.mxu0 0.0
    %1282 = vmatprep.subr.mxu0 0.0
    %1283 = vmatpush1.msra.mxu0 0.0
    %1284 = vmatprep.subr.mxu0 0.0
    %1285 = vmatpush1.msra.mxu0 0.0
    %1286 = vmatprep.subr.mxu0 %v1256
    %1287 = vmatpush1.msra.mxu0 %v1253
    %1288 = vmatprep.subr.mxu0 %v134
    %1289 = vmatpush1.msra.mxu0 %v133
    %1290 = vmatprep.subr.mxu0 0.0
    %1291 = vmatpush2.msra.mxu0 0.0
    %1292 = vmatprep.subr.mxu0 0.0
    %1293 = vmatpush2.msra.mxu0 0.0
    %1294 = vmatprep.subr.mxu0 0.0
    %1295 = vmatpush2.msra.mxu0 0.0
    %1296 = vmatprep.subr.mxu0 0.0
    %1297 = vmatpush2.msra.mxu0 0.0
    %1298 = vmatprep.subr.mxu0 0.0
    %1299 = vmatpush2.msra.mxu0 0.0
    %1300 = vmatprep.subr.mxu0 0.0
    %1301 = vmatpush2.msra.mxu0 0.0
    %1302 = vmatprep.subr.mxu0 0.0
    %1303 = vmatpush2.msra.mxu0 0.0
    %1304 = vmatprep.subr.mxu0 0.0
    %1305 = vmatpush2.msra.mxu0 0.0
    %1306 = vmatprep.subr.mxu0 0.0
    %1307 = vmatpush2.msra.mxu0 0.0
    %1308 = vmatprep.subr.mxu0 0.0
    %1309 = vmatpush2.msra.mxu0 0.0
    %1310 = vmatprep.subr.mxu0 0.0
    %1311 = vmatpush2.msra.mxu0 0.0
    %1312 = vmatprep.subr.mxu0 0.0
    %1313 = vmatpush2.msra.mxu0 0.0
    %1314 = vmatprep.subr.mxu0 0.0
    %1315 = vmatpush2.msra.mxu0 0.0
    %1316 = vmatprep.subr.mxu0 0.0
    %1317 = vmatpush2.msra.mxu0 0.0
    %1318 = vmatprep.subr.mxu0 0.0
    %1319 = vmatpush2.msra.mxu0 0.0
    %1320 = vmatprep.subr.mxu0 0.0
    %1321 = vmatpush2.msra.mxu0 0.0
    %1322 = vmatprep.mubr.f32.mxu0 0.0
    %1323 = vmatmul.mubr.f32.gmra.mxu0 %v1250
    %v1324 = vpop.f32.mrf.mxu0
    %v1325 = vadd.f32 0.0, %v1324
    %v1326 = vpop.f32.mrf.mxu0
    %v1327 = vadd.f32 0.0, %v1326
    %1328 = vdwg.mxu0
    %v1329 = vadd.f32 %v680, %v1325
    %v1330 = vadd.f32 %v682, %v1327
    %v1332 = vlaneseq
    %v1333 = vshrl.u32 %v1332, 7
    %v1334 = vsub.s32 0, %v1333
    %v1335 = vrot.slane %v137, %v1334
    %v1336 = vlaneseq
    %v1337 = vshrl.u32 %v1336, 7
    %v1338 = vsub.s32 1, %v1337
    %v1339 = vrot.slane %v137, %v1338
    %v1342 = vadd.f32 %v1329, %v1335
    %v1343 = vadd.f32 %v1330, %v1339
    %v1344 = vmax.f32 %v1342, 0.0
    %v1345 = vmax.f32 %v1343, 0.0
    %vm1346 = vcmask 588800
    %v1348 = vsel %vm1346, %v1345, 0
    %1350 = vmatprep.subr.mxu0 0.0
    %1351 = vmatpush1.msra.mxu0 %v153
    %1352 = vmatprep.subr.mxu0 0.0
    %1353 = vmatpush1.msra.mxu0 %v152
    %1354 = vmatprep.subr.mxu0 0.0
    %1355 = vmatpush1.msra.mxu0 %v151
    %1356 = vmatprep.subr.mxu0 0.0
    %1357 = vmatpush1.msra.mxu0 %v150
    %1358 = vmatprep.subr.mxu0 0.0
    %1359 = vmatpush1.msra.mxu0 %v149
    %1360 = vmatprep.subr.mxu0 0.0
    %1361 = vmatpush1.msra.mxu0 %v148
    %1362 = vmatprep.subr.mxu0 0.0
    %1363 = vmatpush1.msra.mxu0 %v147
    %1364 = vmatprep.subr.mxu0 0.0
    %1365 = vmatpush1.msra.mxu0 %v146
    %1366 = vmatprep.subr.mxu0 0.0
    %1367 = vmatpush1.msra.mxu0 %v145
    %1368 = vmatprep.subr.mxu0 0.0
    %1369 = vmatpush1.msra.mxu0 %v144
    %1370 = vmatprep.subr.mxu0 0.0
    %1371 = vmatpush1.msra.mxu0 %v143
    %1372 = vmatprep.subr.mxu0 0.0
    %1373 = vmatpush1.msra.mxu0 %v142
    %1374 = vmatprep.subr.mxu0 0.0
    %1375 = vmatpush1.msra.mxu0 %v141
    %1376 = vmatprep.subr.mxu0 0.0
    %1377 = vmatpush1.msra.mxu0 %v140
    %1378 = vmatprep.subr.mxu0 0.0
    %1379 = vmatpush1.msra.mxu0 %v139
    %1380 = vmatprep.subr.mxu0 0.0
    %1381 = vmatpush1.msra.mxu0 %v138
    %1382 = vmatprep.subr.mxu0 0.0
    %1383 = vmatpush2.msra.mxu0 0.0
    %1384 = vmatprep.subr.mxu0 0.0
    %1385 = vmatpush2.msra.mxu0 0.0
    %1386 = vmatprep.subr.mxu0 0.0
    %1387 = vmatpush2.msra.mxu0 0.0
    %1388 = vmatprep.subr.mxu0 0.0
    %1389 = vmatpush2.msra.mxu0 0.0
    %1390 = vmatprep.subr.mxu0 0.0
    %1391 = vmatpush2.msra.mxu0 0.0
    %1392 = vmatprep.subr.mxu0 0.0
    %1393 = vmatpush2.msra.mxu0 0.0
    %1394 = vmatprep.subr.mxu0 0.0
    %1395 = vmatpush2.msra.mxu0 0.0
    %1396 = vmatprep.subr.mxu0 0.0
    %1397 = vmatpush2.msra.mxu0 %v162
    %1398 = vmatprep.subr.mxu0 0.0
    %1399 = vmatpush2.msra.mxu0 %v161
    %1400 = vmatprep.subr.mxu0 0.0
    %1401 = vmatpush2.msra.mxu0 %v160
    %1402 = vmatprep.subr.mxu0 0.0
    %1403 = vmatpush2.msra.mxu0 %v159
    %1404 = vmatprep.subr.mxu0 0.0
    %1405 = vmatpush2.msra.mxu0 %v158
    %1406 = vmatprep.subr.mxu0 0.0
    %1407 = vmatpush2.msra.mxu0 %v157
    %1408 = vmatprep.subr.mxu0 0.0
    %1409 = vmatpush2.msra.mxu0 %v156
    %1410 = vmatprep.subr.mxu0 0.0
    %1411 = vmatpush2.msra.mxu0 %v155
    %1412 = vmatprep.subr.mxu0 0.0
    %1413 = vmatpush2.msra.mxu0 %v154
    %1414 = vmatprep.mubr.f32.mxu0 %v1348
    %1415 = vmatmul.mubr.f32.gmra.mxu0 %v1344
    %v1416 = vpop.f32.mrf.mxu0
    %v1417 = vadd.f32 %v163, %v1416
    %v1418 = vpop.f32.mrf.mxu0
    %1419 = vdwg.mxu0
    %vm1420 = vcmask 32768
    %v1421 = vsel %vm1420, %v1417, -inf
    %1422 = vmax.xlane.f32.xlu0 %v1421
    %v1423 = vpop.xlane.xlu0 %1422
    %v1424 = vsub.f32 %v1417, %v1423
    %v1425 = vmul.f32 %v1424, 1.442695
    %v1426 = vpow.pop %v1425
    %v1427 = vsel %vm1420, %v1426, 0.0
    %1428 = vadd.xlane.f32.xlu0 %v1427
    %v1429 = vpop.xlane.xlu0 %1428
    %v1430 = vrcp.pop %v1429
    %v1431 = vmul.f32 %v1426, %v1430
    %v1433 = vsel %vm196, %v165, 0
    %1435 = vmatprep.subr.mxu0 0.0
    %1436 = vmatpush1.msra.mxu0 0.0
    %1437 = vmatprep.subr.mxu0 0.0
    %1438 = vmatpush1.msra.mxu0 0.0
    %1439 = vmatprep.subr.mxu0 0.0
    %1440 = vmatpush1.msra.mxu0 0.0
    %1441 = vmatprep.subr.mxu0 0.0
    %1442 = vmatpush1.msra.mxu0 0.0
    %1443 = vmatprep.subr.mxu0 0.0
    %1444 = vmatpush1.msra.mxu0 0.0
    %1445 = vmatprep.subr.mxu0 0.0
    %1446 = vmatpush1.msra.mxu0 0.0
    %1447 = vmatprep.subr.mxu0 0.0
    %1448 = vmatpush1.msra.mxu0 0.0
    %1449 = vmatprep.subr.mxu0 0.0
    %1450 = vmatpush1.msra.mxu0 0.0
    %1451 = vmatprep.subr.mxu0 0.0
    %1452 = vmatpush1.msra.mxu0 0.0
    %1453 = vmatprep.subr.mxu0 0.0
    %1454 = vmatpush1.msra.mxu0 0.0
    %1455 = vmatprep.subr.mxu0 0.0
    %1456 = vmatpush1.msra.mxu0 0.0
    %1457 = vmatprep.subr.mxu0 0.0
    %1458 = vmatpush1.msra.mxu0 0.0
    %1459 = vmatprep.subr.mxu0 0.0
    %1460 = vmatpush1.msra.mxu0 0.0
    %1461 = vmatprep.subr.mxu0 0.0
    %1462 = vmatpush1.msra.mxu0 0.0
    %1463 = vmatprep.subr.mxu0 0.0
    %1464 = vmatpush1.msra.mxu0 %v1433
    %1465 = vmatprep.subr.mxu0 0.0
    %1466 = vmatpush1.msra.mxu0 %v164
    %1467 = vmatprep.subr.mxu0 0.0
    %1468 = vmatpush2.msra.mxu0 0.0
    %1469 = vmatprep.subr.mxu0 0.0
    %1470 = vmatpush2.msra.mxu0 0.0
    %1471 = vmatprep.subr.mxu0 0.0
    %1472 = vmatpush2.msra.mxu0 0.0
    %1473 = vmatprep.subr.mxu0 0.0
    %1474 = vmatpush2.msra.mxu0 0.0
    %1475 = vmatprep.subr.mxu0 0.0
    %1476 = vmatpush2.msra.mxu0 0.0
    %1477 = vmatprep.subr.mxu0 0.0
    %1478 = vmatpush2.msra.mxu0 0.0
    %1479 = vmatprep.subr.mxu0 0.0
    %1480 = vmatpush2.msra.mxu0 0.0
    %1481 = vmatprep.subr.mxu0 0.0
    %1482 = vmatpush2.msra.mxu0 0.0
    %1483 = vmatprep.subr.mxu0 0.0
    %1484 = vmatpush2.msra.mxu0 0.0
    %1485 = vmatprep.subr.mxu0 0.0
    %1486 = vmatpush2.msra.mxu0 0.0
    %1487 = vmatprep.subr.mxu0 0.0
    %1488 = vmatpush2.msra.mxu0 0.0
    %1489 = vmatprep.subr.mxu0 0.0
    %1490 = vmatpush2.msra.mxu0 0.0
    %1491 = vmatprep.subr.mxu0 0.0
    %1492 = vmatpush2.msra.mxu0 0.0
    %1493 = vmatprep.subr.mxu0 0.0
    %1494 = vmatpush2.msra.mxu0 0.0
    %1495 = vmatprep.subr.mxu0 0.0
    %1496 = vmatpush2.msra.mxu0 0.0
    %1497 = vmatprep.subr.mxu0 0.0
    %1498 = vmatpush2.msra.mxu0 0.0
    %1499 = vmatprep.mubr.f32.mxu0 0.0
    %1500 = vmatmul.mubr.f32.gmra.mxu0 %v1250
    %v1501 = vpop.f32.mrf.mxu0
    %v1502 = vadd.f32 0.0, %v1501
    %v1503 = vpop.f32.mrf.mxu0
    %1504 = vdwg.mxu0
    %v1505 = vadd.f32 %v756, %v1502
    %vm1506 = vcmask 39936
    %v1508 = vsel %vm1506, %v1431, 0
    %vm1510 = vcmask 1044480
    %v1512 = vsel %vm1510, %v166, 0
    %1514 = vmatprep.subr.mxu0 0.0
    %1515 = vmatpush1.msra.mxu0 0.0
    %1516 = vmatprep.subr.mxu0 0.0
    %1517 = vmatpush1.msra.mxu0 0.0
    %1518 = vmatprep.subr.mxu0 0.0
    %1519 = vmatpush1.msra.mxu0 0.0
    %1520 = vmatprep.subr.mxu0 0.0
    %1521 = vmatpush1.msra.mxu0 0.0
    %1522 = vmatprep.subr.mxu0 0.0
    %1523 = vmatpush1.msra.mxu0 0.0
    %1524 = vmatprep.subr.mxu0 0.0
    %1525 = vmatpush1.msra.mxu0 0.0
    %1526 = vmatprep.subr.mxu0 0.0
    %1527 = vmatpush1.msra.mxu0 0.0
    %1528 = vmatprep.subr.mxu0 0.0
    %1529 = vmatpush1.msra.mxu0 0.0
    %1530 = vmatprep.subr.mxu0 0.0
    %1531 = vmatpush1.msra.mxu0 0.0
    %1532 = vmatprep.subr.mxu0 0.0
    %1533 = vmatpush1.msra.mxu0 0.0
    %1534 = vmatprep.subr.mxu0 0.0
    %1535 = vmatpush1.msra.mxu0 0.0
    %1536 = vmatprep.subr.mxu0 0.0
    %1537 = vmatpush1.msra.mxu0 0.0
    %1538 = vmatprep.subr.mxu0 0.0
    %1539 = vmatpush1.msra.mxu0 0.0
    %1540 = vmatprep.subr.mxu0 0.0
    %1541 = vmatpush1.msra.mxu0 0.0
    %1542 = vmatprep.subr.mxu0 0.0
    %1543 = vmatpush1.msra.mxu0 0.0
    %1544 = vmatprep.subr.mxu0 0.0
    %1545 = vmatpush1.msra.mxu0 %v1512
    %1546 = vmatprep.subr.mxu0 0.0
    %1547 = vmatpush2.msra.mxu0 0.0
    %1548 = vmatprep.subr.mxu0 0.0
    %1549 = vmatpush2.msra.mxu0 0.0
    %1550 = vmatprep.subr.mxu0 0.0
    %1551 = vmatpush2.msra.mxu0 0.0
    %1552 = vmatprep.subr.mxu0 0.0
    %1553 = vmatpush2.msra.mxu0 0.0
    %1554 = vmatprep.subr.mxu0 0.0
    %1555 = vmatpush2.msra.mxu0 0.0
    %1556 = vmatprep.subr.mxu0 0.0
    %1557 = vmatpush2.msra.mxu0 0.0
    %1558 = vmatprep.subr.mxu0 0.0
    %1559 = vmatpush2.msra.mxu0 0.0
    %1560 = vmatprep.subr.mxu0 0.0
    %1561 = vmatpush2.msra.mxu0 0.0
    %1562 = vmatprep.subr.mxu0 0.0
    %1563 = vmatpush2.msra.mxu0 0.0
    %1564 = vmatprep.subr.mxu0 0.0
    %1565 = vmatpush2.msra.mxu0 0.0
    %1566 = vmatprep.subr.mxu0 0.0
    %1567 = vmatpush2.msra.mxu0 0.0
    %1568 = vmatprep.subr.mxu0 0.0
    %1569 = vmatpush2.msra.mxu0 0.0
    %1570 = vmatprep.subr.mxu0 0.0
    %1571 = vmatpush2.msra.mxu0 0.0
    %1572 = vmatprep.subr.mxu0 0.0
    %1573 = vmatpush2.msra.mxu0 0.0
    %1574 = vmatprep.subr.mxu0 0.0
    %1575 = vmatpush2.msra.mxu0 0.0
    %1576 = vmatprep.subr.mxu0 0.0
    %1577 = vmatpush2.msra.mxu0 0.0
    %1578 = vmatprep.mubr.f32.mxu0 0.0
    %1579 = vmatmul.mubr.f32.gmra.mxu0 %v1508
    %v1580 = vpop.f32.mrf.mxu0
    %v1581 = vadd.f32 0.0, %v1580
    %v1582 = vpop.f32.mrf.mxu0
    %1583 = vdwg.mxu0
    %v1584 = vadd.f32 %v1505, %v1581
    %1586 = vset.pattern.permute.xlu0 5
    %1587 = vperm.xlu0 %1586, %v1417
    %v1588 = vpop.permute.xlu0 %1587
    %v1590 = vmul.f32 %v1588, %v167
    %v1591 = vadd.f32 %v1584, %v1590
    %v1592 = vadd.f32 %v1591, %v168
    %v1593 = vmax.f32 %v1592, 0.0
    %vm1594 = vcmask 818176
    %v1596 = vsel %vm1594, %v1593, 0
    %v1599 = vsel %vm196, %v181, 0
    %1601 = vmatprep.subr.mxu0 0.0
    %1602 = vmatpush1.msra.mxu0 0.0
    %1603 = vmatprep.subr.mxu0 0.0
    %1604 = vmatpush1.msra.mxu0 0.0
    %1605 = vmatprep.subr.mxu0 0.0
    %1606 = vmatpush1.msra.mxu0 0.0
    %1607 = vmatprep.subr.mxu0 0.0
    %1608 = vmatpush1.msra.mxu0 %v1599
    %1609 = vmatprep.subr.mxu0 0.0
    %1610 = vmatpush1.msra.mxu0 %v180
    %1611 = vmatprep.subr.mxu0 0.0
    %1612 = vmatpush1.msra.mxu0 %v179
    %1613 = vmatprep.subr.mxu0 0.0
    %1614 = vmatpush1.msra.mxu0 %v178
    %1615 = vmatprep.subr.mxu0 0.0
    %1616 = vmatpush1.msra.mxu0 %v177
    %1617 = vmatprep.subr.mxu0 0.0
    %1618 = vmatpush1.msra.mxu0 %v176
    %1619 = vmatprep.subr.mxu0 0.0
    %1620 = vmatpush1.msra.mxu0 %v175
    %1621 = vmatprep.subr.mxu0 0.0
    %1622 = vmatpush1.msra.mxu0 %v174
    %1623 = vmatprep.subr.mxu0 0.0
    %1624 = vmatpush1.msra.mxu0 %v173
    %1625 = vmatprep.subr.mxu0 0.0
    %1626 = vmatpush1.msra.mxu0 %v172
    %1627 = vmatprep.subr.mxu0 0.0
    %1628 = vmatpush1.msra.mxu0 %v171
    %1629 = vmatprep.subr.mxu0 0.0
    %1630 = vmatpush1.msra.mxu0 %v170
    %1631 = vmatprep.subr.mxu0 0.0
    %1632 = vmatpush1.msra.mxu0 %v169
    %1633 = vmatprep.subr.mxu0 0.0
    %1634 = vmatpush2.msra.mxu0 0.0
    %1635 = vmatprep.subr.mxu0 0.0
    %1636 = vmatpush2.msra.mxu0 0.0
    %1637 = vmatprep.subr.mxu0 0.0
    %1638 = vmatpush2.msra.mxu0 0.0
    %1639 = vmatprep.subr.mxu0 0.0
    %1640 = vmatpush2.msra.mxu0 0.0
    %1641 = vmatprep.subr.mxu0 0.0
    %1642 = vmatpush2.msra.mxu0 0.0
    %1643 = vmatprep.subr.mxu0 0.0
    %1644 = vmatpush2.msra.mxu0 0.0
    %1645 = vmatprep.subr.mxu0 0.0
    %1646 = vmatpush2.msra.mxu0 0.0
    %1647 = vmatprep.subr.mxu0 0.0
    %1648 = vmatpush2.msra.mxu0 0.0
    %1649 = vmatprep.subr.mxu0 0.0
    %1650 = vmatpush2.msra.mxu0 0.0
    %1651 = vmatprep.subr.mxu0 0.0
    %1652 = vmatpush2.msra.mxu0 0.0
    %1653 = vmatprep.subr.mxu0 0.0
    %1654 = vmatpush2.msra.mxu0 0.0
    %1655 = vmatprep.subr.mxu0 0.0
    %1656 = vmatpush2.msra.mxu0 0.0
    %1657 = vmatprep.subr.mxu0 0.0
    %1658 = vmatpush2.msra.mxu0 0.0
    %1659 = vmatprep.subr.mxu0 0.0
    %1660 = vmatpush2.msra.mxu0 0.0
    %1661 = vmatprep.subr.mxu0 0.0
    %1662 = vmatpush2.msra.mxu0 0.0
    %1663 = vmatprep.subr.mxu0 0.0
    %1664 = vmatpush2.msra.mxu0 0.0
    %1665 = vmatprep.mubr.f32.mxu0 0.0
    %1666 = vmatmul.mubr.f32.gmra.mxu0 %v1596
    %v1667 = vpop.f32.mrf.mxu0
    %v1668 = vadd.f32 %v182, %v1667
    %v1669 = vpop.f32.mrf.mxu0
    %1670 = vdwg.mxu0
    %v1672 = vsel %vm291, %v1668, 0
    %1674 = vmatprep.subr.mxu0 0.0
    %1675 = vmatpush1.msra.mxu0 0.0
    %1676 = vmatprep.subr.mxu0 0.0
    %1677 = vmatpush1.msra.mxu0 0.0
    %1678 = vmatprep.subr.mxu0 0.0
    %1679 = vmatpush1.msra.mxu0 0.0
    %1680 = vmatprep.subr.mxu0 0.0
    %1681 = vmatpush1.msra.mxu0 0.0
    %1682 = vmatprep.subr.mxu0 0.0
    %1683 = vmatpush1.msra.mxu0 0.0
    %1684 = vmatprep.subr.mxu0 0.0
    %1685 = vmatpush1.msra.mxu0 0.0
    %1686 = vmatprep.subr.mxu0 0.0
    %1687 = vmatpush1.msra.mxu0 0.0
    %1688 = vmatprep.subr.mxu0 0.0
    %1689 = vmatpush1.msra.mxu0 0.0
    %1690 = vmatprep.subr.mxu0 0.0
    %1691 = vmatpush1.msra.mxu0 0.0
    %1692 = vmatprep.subr.mxu0 0.0
    %1693 = vmatpush1.msra.mxu0 0.0
    %1694 = vmatprep.subr.mxu0 0.0
    %1695 = vmatpush1.msra.mxu0 0.0
    %1696 = vmatprep.subr.mxu0 0.0
    %1697 = vmatpush1.msra.mxu0 0.0
    %1698 = vmatprep.subr.mxu0 0.0
    %1699 = vmatpush1.msra.mxu0 0.0
    %1700 = vmatprep.subr.mxu0 0.0
    %1701 = vmatpush1.msra.mxu0 0.0
    %1702 = vmatprep.subr.mxu0 %v299
    %1703 = vmatpush1.msra.mxu0 %v296
    %1704 = vmatprep.subr.mxu0 %v74
    %1705 = vmatpush1.msra.mxu0 %v73
    %1706 = vmatprep.subr.mxu0 0.0
    %1707 = vmatpush2.msra.mxu0 0.0
    %1708 = vmatprep.subr.mxu0 0.0
    %1709 = vmatpush2.msra.mxu0 0.0
    %1710 = vmatprep.subr.mxu0 0.0
    %1711 = vmatpush2.msra.mxu0 0.0
    %1712 = vmatprep.subr.mxu0 0.0
    %1713 = vmatpush2.msra.mxu0 0.0
    %1714 = vmatprep.subr.mxu0 0.0
    %1715 = vmatpush2.msra.mxu0 0.0
    %1716 = vmatprep.subr.mxu0 0.0
    %1717 = vmatpush2.msra.mxu0 0.0
    %1718 = vmatprep.subr.mxu0 0.0
    %1719 = vmatpush2.msra.mxu0 0.0
    %1720 = vmatprep.subr.mxu0 0.0
    %1721 = vmatpush2.msra.mxu0 0.0
    %1722 = vmatprep.subr.mxu0 0.0
    %1723 = vmatpush2.msra.mxu0 0.0
    %1724 = vmatprep.subr.mxu0 0.0
    %1725 = vmatpush2.msra.mxu0 0.0
    %1726 = vmatprep.subr.mxu0 0.0
    %1727 = vmatpush2.msra.mxu0 0.0
    %1728 = vmatprep.subr.mxu0 0.0
    %1729 = vmatpush2.msra.mxu0 0.0
    %1730 = vmatprep.subr.mxu0 0.0
    %1731 = vmatpush2.msra.mxu0 0.0
    %1732 = vmatprep.subr.mxu0 0.0
    %1733 = vmatpush2.msra.mxu0 0.0
    %1734 = vmatprep.subr.mxu0 0.0
    %1735 = vmatpush2.msra.mxu0 0.0
    %1736 = vmatprep.subr.mxu0 0.0
    %1737 = vmatpush2.msra.mxu0 0.0
    %1738 = vmatprep.mubr.f32.mxu0 0.0
    %1739 = vmatmul.mubr.f32.gmra.mxu0 %v1672
    %v1740 = vpop.f32.mrf.mxu0
    %v1741 = vadd.f32 %v274, %v1740
    %v1742 = vpop.f32.mrf.mxu0
    %v1743 = vadd.f32 %v278, %v1742
    %1744 = vdwg.mxu0
    %1745 = vmatprep.subr.mxu0 0.0
    %1746 = vmatpush1.msra.mxu0 0.0
    %1747 = vmatprep.subr.mxu0 0.0
    %1748 = vmatpush1.msra.mxu0 0.0
    %1749 = vmatprep.subr.mxu0 0.0
    %1750 = vmatpush1.msra.mxu0 0.0
    %1751 = vmatprep.subr.mxu0 0.0
    %1752 = vmatpush1.msra.mxu0 0.0
    %1753 = vmatprep.subr.mxu0 0.0
    %1754 = vmatpush1.msra.mxu0 0.0
    %1755 = vmatprep.subr.mxu0 0.0
    %1756 = vmatpush1.msra.mxu0 0.0
    %1757 = vmatprep.subr.mxu0 0.0
    %1758 = vmatpush1.msra.mxu0 0.0
    %1759 = vmatprep.subr.mxu0 0.0
    %1760 = vmatpush1.msra.mxu0 0.0
    %1761 = vmatprep.subr.mxu0 0.0
    %1762 = vmatpush1.msra.mxu0 0.0
    %1763 = vmatprep.subr.mxu0 0.0
    %1764 = vmatpush1.msra.mxu0 0.0
    %1765 = vmatprep.subr.mxu0 0.0
    %1766 = vmatpush1.msra.mxu0 0.0
    %1767 = vmatprep.subr.mxu0 0.0
    %1768 = vmatpush1.msra.mxu0 0.0
    %1769 = vmatprep.subr.mxu0 0.0
    %1770 = vmatpush1.msra.mxu0 0.0
    %1771 = vmatprep.subr.mxu0 0.0
    %1772 = vmatpush1.msra.mxu0 0.0
    %1773 = vmatprep.subr.mxu0 %v305
    %1774 = vmatpush1.msra.mxu0 %v302
    %1775 = vmatprep.subr.mxu0 %v76
    %1776 = vmatpush1.msra.mxu0 %v75
    %1777 = vmatprep.subr.mxu0 0.0
    %1778 = vmatpush2.msra.mxu0 0.0
    %1779 = vmatprep.subr.mxu0 0.0
    %1780 = vmatpush2.msra.mxu0 0.0
    %1781 = vmatprep.subr.mxu0 0.0
    %1782 = vmatpush2.msra.mxu0 0.0
    %1783 = vmatprep.subr.mxu0 0.0
    %1784 = vmatpush2.msra.mxu0 0.0
    %1785 = vmatprep.subr.mxu0 0.0
    %1786 = vmatpush2.msra.mxu0 0.0
    %1787 = vmatprep.subr.mxu0 0.0
    %1788 = vmatpush2.msra.mxu0 0.0
    %1789 = vmatprep.subr.mxu0 0.0
    %1790 = vmatpush2.msra.mxu0 0.0
    %1791 = vmatprep.subr.mxu0 0.0
    %1792 = vmatpush2.msra.mxu0 0.0
    %1793 = vmatprep.subr.mxu0 0.0
    %1794 = vmatpush2.msra.mxu0 0.0
    %1795 = vmatprep.subr.mxu0 0.0
    %1796 = vmatpush2.msra.mxu0 0.0
    %1797 = vmatprep.subr.mxu0 0.0
    %1798 = vmatpush2.msra.mxu0 0.0
    %1799 = vmatprep.subr.mxu0 0.0
    %1800 = vmatpush2.msra.mxu0 0.0
    %1801 = vmatprep.subr.mxu0 0.0
    %1802 = vmatpush2.msra.mxu0 0.0
    %1803 = vmatprep.subr.mxu0 0.0
    %1804 = vmatpush2.msra.mxu0 0.0
    %1805 = vmatprep.subr.mxu0 0.0
    %1806 = vmatpush2.msra.mxu0 0.0
    %1807 = vmatprep.subr.mxu0 0.0
    %1808 = vmatpush2.msra.mxu0 0.0
    %1809 = vmatprep.mubr.f32.mxu0 0.0
    %1810 = vmatmul.mubr.f32.gmra.mxu0 %v1672
    %v1811 = vpop.f32.mrf.mxu0
    %v1812 = vadd.f32 %v282, %v1811
    %v1813 = vpop.f32.mrf.mxu0
    %v1814 = vadd.f32 %v286, %v1813
    %1815 = vdwg.mxu0
    %v1816 = vmax.f32 %v1741, 0.0
    %v1817 = vmax.f32 %v1743, 0.0
    %v1818 = vmax.f32 %v1812, 0.0
    %v1819 = vmax.f32 %v1814, 0.0
    %v1821 = vsel %vm459, %v1819, 0
    %1823 = vmatprep.subr.mxu0 0.0
    %1824 = vmatpush1.msra.mxu0 %v97
    %1825 = vmatprep.subr.mxu0 0.0
    %1826 = vmatpush1.msra.mxu0 %v96
    %1827 = vmatprep.subr.mxu0 0.0
    %1828 = vmatpush1.msra.mxu0 %v95
    %1829 = vmatprep.subr.mxu0 0.0
    %1830 = vmatpush1.msra.mxu0 %v94
    %1831 = vmatprep.subr.mxu0 0.0
    %1832 = vmatpush1.msra.mxu0 %v93
    %1833 = vmatprep.subr.mxu0 0.0
    %1834 = vmatpush1.msra.mxu0 %v92
    %1835 = vmatprep.subr.mxu0 0.0
    %1836 = vmatpush1.msra.mxu0 %v91
    %1837 = vmatprep.subr.mxu0 0.0
    %1838 = vmatpush1.msra.mxu0 %v90
    %1839 = vmatprep.subr.mxu0 0.0
    %1840 = vmatpush1.msra.mxu0 %v89
    %1841 = vmatprep.subr.mxu0 0.0
    %1842 = vmatpush1.msra.mxu0 %v88
    %1843 = vmatprep.subr.mxu0 0.0
    %1844 = vmatpush1.msra.mxu0 %v87
    %1845 = vmatprep.subr.mxu0 0.0
    %1846 = vmatpush1.msra.mxu0 %v86
    %1847 = vmatprep.subr.mxu0 0.0
    %1848 = vmatpush1.msra.mxu0 %v85
    %1849 = vmatprep.subr.mxu0 0.0
    %1850 = vmatpush1.msra.mxu0 %v84
    %1851 = vmatprep.subr.mxu0 0.0
    %1852 = vmatpush1.msra.mxu0 %v83
    %1853 = vmatprep.subr.mxu0 0.0
    %1854 = vmatpush1.msra.mxu0 %v82
    %1855 = vmatprep.subr.mxu0 0.0
    %1856 = vmatpush2.msra.mxu0 %v113
    %1857 = vmatprep.subr.mxu0 0.0
    %1858 = vmatpush2.msra.mxu0 %v112
    %1859 = vmatprep.subr.mxu0 0.0
    %1860 = vmatpush2.msra.mxu0 %v111
    %1861 = vmatprep.subr.mxu0 0.0
    %1862 = vmatpush2.msra.mxu0 %v110
    %1863 = vmatprep.subr.mxu0 0.0
    %1864 = vmatpush2.msra.mxu0 %v109
    %1865 = vmatprep.subr.mxu0 0.0
    %1866 = vmatpush2.msra.mxu0 %v108
    %1867 = vmatprep.subr.mxu0 0.0
    %1868 = vmatpush2.msra.mxu0 %v107
    %1869 = vmatprep.subr.mxu0 0.0
    %1870 = vmatpush2.msra.mxu0 %v106
    %1871 = vmatprep.subr.mxu0 0.0
    %1872 = vmatpush2.msra.mxu0 %v105
    %1873 = vmatprep.subr.mxu0 0.0
    %1874 = vmatpush2.msra.mxu0 %v104
    %1875 = vmatprep.subr.mxu0 0.0
    %1876 = vmatpush2.msra.mxu0 %v103
    %1877 = vmatprep.subr.mxu0 0.0
    %1878 = vmatpush2.msra.mxu0 %v102
    %1879 = vmatprep.subr.mxu0 0.0
    %1880 = vmatpush2.msra.mxu0 %v101
    %1881 = vmatprep.subr.mxu0 0.0
    %1882 = vmatpush2.msra.mxu0 %v100
    %1883 = vmatprep.subr.mxu0 0.0
    %1884 = vmatpush2.msra.mxu0 %v99
    %1885 = vmatprep.subr.mxu0 0.0
    %1886 = vmatpush2.msra.mxu0 %v98
    %1887 = vmatprep.mubr.f32.mxu0 %v1817
    %1888 = vmatmul.mubr.f32.gmra.mxu0 %v1816
    %v1889 = vpop.f32.mrf.mxu0
    %v1890 = vadd.f32 %v132, %v1889
    %v1891 = vpop.f32.mrf.mxu0
    %1892 = vdwg.mxu0
    %1893 = vmatprep.subr.mxu0 0.0
    %1894 = vmatpush1.msra.mxu0 %v129
    %1895 = vmatprep.subr.mxu0 0.0
    %1896 = vmatpush1.msra.mxu0 %v128
    %1897 = vmatprep.subr.mxu0 0.0
    %1898 = vmatpush1.msra.mxu0 %v127
    %1899 = vmatprep.subr.mxu0 0.0
    %1900 = vmatpush1.msra.mxu0 %v126
    %1901 = vmatprep.subr.mxu0 0.0
    %1902 = vmatpush1.msra.mxu0 %v125
    %1903 = vmatprep.subr.mxu0 0.0
    %1904 = vmatpush1.msra.mxu0 %v124
    %1905 = vmatprep.subr.mxu0 0.0
    %1906 = vmatpush1.msra.mxu0 %v123
    %1907 = vmatprep.subr.mxu0 0.0
    %1908 = vmatpush1.msra.mxu0 %v122
    %1909 = vmatprep.subr.mxu0 0.0
    %1910 = vmatpush1.msra.mxu0 %v121
    %1911 = vmatprep.subr.mxu0 0.0
    %1912 = vmatpush1.msra.mxu0 %v120
    %1913 = vmatprep.subr.mxu0 0.0
    %1914 = vmatpush1.msra.mxu0 %v119
    %1915 = vmatprep.subr.mxu0 0.0
    %1916 = vmatpush1.msra.mxu0 %v118
    %1917 = vmatprep.subr.mxu0 0.0
    %1918 = vmatpush1.msra.mxu0 %v117
    %1919 = vmatprep.subr.mxu0 0.0
    %1920 = vmatpush1.msra.mxu0 %v116
    %1921 = vmatprep.subr.mxu0 0.0
    %1922 = vmatpush1.msra.mxu0 %v115
    %1923 = vmatprep.subr.mxu0 0.0
    %1924 = vmatpush1.msra.mxu0 %v114
    %1925 = vmatprep.subr.mxu0 0.0
    %1926 = vmatpush2.msra.mxu0 0.0
    %1927 = vmatprep.subr.mxu0 0.0
    %1928 = vmatpush2.msra.mxu0 0.0
    %1929 = vmatprep.subr.mxu0 0.0
    %1930 = vmatpush2.msra.mxu0 0.0
    %1931 = vmatprep.subr.mxu0 0.0
    %1932 = vmatpush2.msra.mxu0 0.0
    %1933 = vmatprep.subr.mxu0 0.0
    %1934 = vmatpush2.msra.mxu0 0.0
    %1935 = vmatprep.subr.mxu0 0.0
    %1936 = vmatpush2.msra.mxu0 0.0
    %1937 = vmatprep.subr.mxu0 0.0
    %1938 = vmatpush2.msra.mxu0 0.0
    %1939 = vmatprep.subr.mxu0 0.0
    %1940 = vmatpush2.msra.mxu0 0.0
    %1941 = vmatprep.subr.mxu0 0.0
    %1942 = vmatpush2.msra.mxu0 0.0
    %1943 = vmatprep.subr.mxu0 0.0
    %1944 = vmatpush2.msra.mxu0 0.0
    %1945 = vmatprep.subr.mxu0 0.0
    %1946 = vmatpush2.msra.mxu0 0.0
    %1947 = vmatprep.subr.mxu0 0.0
    %1948 = vmatpush2.msra.mxu0 0.0
    %1949 = vmatprep.subr.mxu0 0.0
    %1950 = vmatpush2.msra.mxu0 0.0
    %1951 = vmatprep.subr.mxu0 0.0
    %1952 = vmatpush2.msra.mxu0 0.0
    %1953 = vmatprep.subr.mxu0 0.0
    %1954 = vmatpush2.msra.mxu0 %v131
    %1955 = vmatprep.subr.mxu0 0.0
    %1956 = vmatpush2.msra.mxu0 %v130
    %1957 = vmatprep.mubr.f32.mxu0 %v1821
    %1958 = vmatmul.mubr.f32.gmra.mxu0 %v1818
    %v1959 = vpop.f32.mrf.mxu0
    %v1960 = vadd.f32 %v1890, %v1959
    %v1961 = vpop.f32.mrf.mxu0
    %1962 = vdwg.mxu0
    %v1963 = vsel %vm459, %v1079, -inf
    %v1964 = vsel %vm459, %v1084, -inf
    %v1965 = vmax.f32 %v1963, %v1964
    %v1966 = vrot.slane %v1965, 4
    %v1967 = vmax.f32 %v1965, %v1966
    %v1968 = vrot.slane %v1967, 2
    %v1969 = vmax.f32 %v1967, %v1968
    %v1970 = vrot.slane %v1969, 1
    %v1971 = vmax.f32 %v1969, %v1970
    %v1972 = vmax.f32 %v1971, %v600
    %v1973 = vmax.f32 %v1972, %v1960
    %v1974 = vsub.f32 %v600, %v1973
    %v1975 = vmul.f32 %v1974, 1.442695
    %v1976 = vpow.pop %v1975
    %v1977 = vsub.f32 %v1960, %v1973
    %v1978 = vmul.f32 %v1977, 1.442695
    %v1979 = vpow.pop %v1978
    %v1980 = vlaneseq
    %v1981 = vshrl.u32 %v1980, 7
    %v1982 = vsub.s32 0, %v1981
    %v1983 = vrot.slane %v1973, %v1982
    %v1984 = vsub.f32 %v1079, %v1983
    %v1985 = vsub.f32 %v1084, %v1983
    %v1986 = vmul.f32 %v1984, 1.442695
    %v1987 = vpow.pop %v1986
    %v1988 = vmul.f32 %v1985, 1.442695
    %v1989 = vpow.pop %v1988
    %v1990 = vsel %vm459, %v1987, 0.0
    %v1991 = vsel %vm459, %v1989, 0.0
    %v1992 = vadd.f32 %v1990, %v1991
    %v1993 = vrot.slane %v1992, 4
    %v1994 = vadd.f32 %v1992, %v1993
    %v1995 = vrot.slane %v1994, 2
    %v1996 = vadd.f32 %v1994, %v1995
    %v1997 = vrot.slane %v1996, 1
    %v1998 = vadd.f32 %v1996, %v1997
    %v1999 = vadd.f32 %v1998, %v1976
    %v2000 = vadd.f32 %v1999, %v1979
    %v2001 = vrcp.pop %v2000
    %v2002 = vmul.f32 %v1976, %v2001
    %v2003 = vmul.f32 %v1979, %v2001
    %2004 = vxpose.xlu0.b32.start [1/16] %v2003, 128
    %2005 = vxpose.xlu0.b32.cont [2/16] 0.0, 128
    %2006 = vxpose.xlu0.b32.cont [3/16] 0.0, 128
    %2007 = vxpose.xlu0.b32.cont [4/16] 0.0, 128
    %2008 = vxpose.xlu0.b32.cont [5/16] 0.0, 128
    %2009 = vxpose.xlu0.b32.cont [6/16] 0.0, 128
    %2010 = vxpose.xlu0.b32.cont [7/16] 0.0, 128
    %2011 = vxpose.xlu0.b32.cont [8/16] 0.0, 128
    %2012 = vxpose.xlu0.b32.cont [9/16] 0.0, 128
    %2013 = vxpose.xlu0.b32.cont [10/16] 0.0, 128
    %2014 = vxpose.xlu0.b32.cont [11/16] 0.0, 128
    %2015 = vxpose.xlu0.b32.cont [12/16] 0.0, 128
    %2016 = vxpose.xlu0.b32.cont [13/16] 0.0, 128
    %2017 = vxpose.xlu0.b32.cont [14/16] 0.0, 128
    %2018 = vxpose.xlu0.b32.cont [15/16] 0.0, 128
    %2019 = vxpose.xlu0.b32.end [16/16] 0.0, 128
    %v2020 = vpop.trf.xlu0
    %v2021 = vpop.trf.xlu0
    %v2022 = vpop.trf.xlu0
    %v2023 = vpop.trf.xlu0
    %v2024 = vpop.trf.xlu0
    %v2025 = vpop.trf.xlu0
    %v2026 = vpop.trf.xlu0
    %v2027 = vpop.trf.xlu0
    %v2028 = vpop.trf.xlu0
    %v2029 = vpop.trf.xlu0
    %v2030 = vpop.trf.xlu0
    %v2031 = vpop.trf.xlu0
    %v2032 = vpop.trf.xlu0
    %v2033 = vpop.trf.xlu0
    %v2034 = vpop.trf.xlu0
    %v2035 = vpop.trf.xlu0
    %vm2036 = vcmask 7168
    %v2038 = vsel %vm2036, %v2020, 0
    %v2041 = vsel %vm2036, %v2021, 0
    %vm2043 = vcmask 1040384
    %v2044 = vsel %vm2043, %v1668, 0
    %2046 = vmatprep.subr.mxu0 0.0
    %2047 = vmatpush1.msra.mxu0 0.0
    %2048 = vmatprep.subr.mxu0 0.0
    %2049 = vmatpush1.msra.mxu0 0.0
    %2050 = vmatprep.subr.mxu0 0.0
    %2051 = vmatpush1.msra.mxu0 0.0
    %2052 = vmatprep.subr.mxu0 0.0
    %2053 = vmatpush1.msra.mxu0 0.0
    %2054 = vmatprep.subr.mxu0 0.0
    %2055 = vmatpush1.msra.mxu0 0.0
    %2056 = vmatprep.subr.mxu0 0.0
    %2057 = vmatpush1.msra.mxu0 0.0
    %2058 = vmatprep.subr.mxu0 0.0
    %2059 = vmatpush1.msra.mxu0 0.0
    %2060 = vmatprep.subr.mxu0 0.0
    %2061 = vmatpush1.msra.mxu0 0.0
    %2062 = vmatprep.subr.mxu0 0.0
    %2063 = vmatpush1.msra.mxu0 0.0
    %2064 = vmatprep.subr.mxu0 0.0
    %2065 = vmatpush1.msra.mxu0 0.0
    %2066 = vmatprep.subr.mxu0 0.0
    %2067 = vmatpush1.msra.mxu0 0.0
    %2068 = vmatprep.subr.mxu0 0.0
    %2069 = vmatpush1.msra.mxu0 0.0
    %2070 = vmatprep.subr.mxu0 0.0
    %2071 = vmatpush1.msra.mxu0 0.0
    %2072 = vmatprep.subr.mxu0 0.0
    %2073 = vmatpush1.msra.mxu0 0.0
    %2074 = vmatprep.subr.mxu0 0.0
    %2075 = vmatpush1.msra.mxu0 0.0
    %2076 = vmatprep.subr.mxu0 0.0
    %2077 = vmatpush1.msra.mxu0 %v2044
    %2078 = vmatprep.subr.mxu0 0.0
    %2079 = vmatpush2.msra.mxu0 0.0
    %2080 = vmatprep.subr.mxu0 0.0
    %2081 = vmatpush2.msra.mxu0 0.0
    %2082 = vmatprep.subr.mxu0 0.0
    %2083 = vmatpush2.msra.mxu0 0.0
    %2084 = vmatprep.subr.mxu0 0.0
    %2085 = vmatpush2.msra.mxu0 0.0
    %2086 = vmatprep.subr.mxu0 0.0
    %2087 = vmatpush2.msra.mxu0 0.0
    %2088 = vmatprep.subr.mxu0 0.0
    %2089 = vmatpush2.msra.mxu0 0.0
    %2090 = vmatprep.subr.mxu0 0.0
    %2091 = vmatpush2.msra.mxu0 0.0
    %2092 = vmatprep.subr.mxu0 0.0
    %2093 = vmatpush2.msra.mxu0 0.0
    %2094 = vmatprep.subr.mxu0 0.0
    %2095 = vmatpush2.msra.mxu0 0.0
    %2096 = vmatprep.subr.mxu0 0.0
    %2097 = vmatpush2.msra.mxu0 0.0
    %2098 = vmatprep.subr.mxu0 0.0
    %2099 = vmatpush2.msra.mxu0 0.0
    %2100 = vmatprep.subr.mxu0 0.0
    %2101 = vmatpush2.msra.mxu0 0.0
    %2102 = vmatprep.subr.mxu0 0.0
    %2103 = vmatpush2.msra.mxu0 0.0
    %2104 = vmatprep.subr.mxu0 0.0
    %2105 = vmatpush2.msra.mxu0 0.0
    %2106 = vmatprep.subr.mxu0 0.0
    %2107 = vmatpush2.msra.mxu0 0.0
    %2108 = vmatprep.subr.mxu0 0.0
    %2109 = vmatpush2.msra.mxu0 0.0
    %2110 = vmatprep.mubr.f32.mxu0 0.0
    %2111 = vmatmul.mubr.f32.gmra.mxu0 %v2038
    %v2112 = vpop.f32.mrf.mxu0
    %v2113 = vadd.f32 0.0, %v2112
    %v2114 = vpop.f32.mrf.mxu0
    %2115 = vmatprep.mubr.f32.mxu0 0.0
    %2116 = vmatmul.mubr.f32.gmra.mxu0 %v2041
    %v2117 = vpop.f32.mrf.mxu0
    %v2118 = vadd.f32 0.0, %v2117
    %v2119 = vpop.f32.mrf.mxu0
    %2120 = vdwg.mxu0
    %2121 = vxpose.xlu0.b32.start [1/16] %v2002, 128
    %2122 = vxpose.xlu0.b32.cont [2/16] 0.0, 128
    %2123 = vxpose.xlu0.b32.cont [3/16] 0.0, 128
    %2124 = vxpose.xlu0.b32.cont [4/16] 0.0, 128
    %2125 = vxpose.xlu0.b32.cont [5/16] 0.0, 128
    %2126 = vxpose.xlu0.b32.cont [6/16] 0.0, 128
    %2127 = vxpose.xlu0.b32.cont [7/16] 0.0, 128
    %2128 = vxpose.xlu0.b32.cont [8/16] 0.0, 128
    %2129 = vxpose.xlu0.b32.cont [9/16] 0.0, 128
    %2130 = vxpose.xlu0.b32.cont [10/16] 0.0, 128
    %2131 = vxpose.xlu0.b32.cont [11/16] 0.0, 128
    %2132 = vxpose.xlu0.b32.cont [12/16] 0.0, 128
    %2133 = vxpose.xlu0.b32.cont [13/16] 0.0, 128
    %2134 = vxpose.xlu0.b32.cont [14/16] 0.0, 128
    %2135 = vxpose.xlu0.b32.cont [15/16] 0.0, 128
    %2136 = vxpose.xlu0.b32.end [16/16] 0.0, 128
    %v2137 = vpop.trf.xlu0
    %v2138 = vpop.trf.xlu0
    %v2139 = vpop.trf.xlu0
    %v2140 = vpop.trf.xlu0
    %v2141 = vpop.trf.xlu0
    %v2142 = vpop.trf.xlu0
    %v2143 = vpop.trf.xlu0
    %v2144 = vpop.trf.xlu0
    %v2145 = vpop.trf.xlu0
    %v2146 = vpop.trf.xlu0
    %v2147 = vpop.trf.xlu0
    %v2148 = vpop.trf.xlu0
    %v2149 = vpop.trf.xlu0
    %v2150 = vpop.trf.xlu0
    %v2151 = vpop.trf.xlu0
    %v2152 = vpop.trf.xlu0
    %v2154 = vsel %vm2036, %v2137, 0
    %v2157 = vsel %vm2036, %v2138, 0
    %v2159 = vsel %vm2043, %v267, 0
    %2161 = vmatprep.subr.mxu0 0.0
    %2162 = vmatpush1.msra.mxu0 0.0
    %2163 = vmatprep.subr.mxu0 0.0
    %2164 = vmatpush1.msra.mxu0 0.0
    %2165 = vmatprep.subr.mxu0 0.0
    %2166 = vmatpush1.msra.mxu0 0.0
    %2167 = vmatprep.subr.mxu0 0.0
    %2168 = vmatpush1.msra.mxu0 0.0
    %2169 = vmatprep.subr.mxu0 0.0
    %2170 = vmatpush1.msra.mxu0 0.0
    %2171 = vmatprep.subr.mxu0 0.0
    %2172 = vmatpush1.msra.mxu0 0.0
    %2173 = vmatprep.subr.mxu0 0.0
    %2174 = vmatpush1.msra.mxu0 0.0
    %2175 = vmatprep.subr.mxu0 0.0
    %2176 = vmatpush1.msra.mxu0 0.0
    %2177 = vmatprep.subr.mxu0 0.0
    %2178 = vmatpush1.msra.mxu0 0.0
    %2179 = vmatprep.subr.mxu0 0.0
    %2180 = vmatpush1.msra.mxu0 0.0
    %2181 = vmatprep.subr.mxu0 0.0
    %2182 = vmatpush1.msra.mxu0 0.0
    %2183 = vmatprep.subr.mxu0 0.0
    %2184 = vmatpush1.msra.mxu0 0.0
    %2185 = vmatprep.subr.mxu0 0.0
    %2186 = vmatpush1.msra.mxu0 0.0
    %2187 = vmatprep.subr.mxu0 0.0
    %2188 = vmatpush1.msra.mxu0 0.0
    %2189 = vmatprep.subr.mxu0 0.0
    %2190 = vmatpush1.msra.mxu0 0.0
    %2191 = vmatprep.subr.mxu0 0.0
    %2192 = vmatpush1.msra.mxu0 %v2159
    %2193 = vmatprep.subr.mxu0 0.0
    %2194 = vmatpush2.msra.mxu0 0.0
    %2195 = vmatprep.subr.mxu0 0.0
    %2196 = vmatpush2.msra.mxu0 0.0
    %2197 = vmatprep.subr.mxu0 0.0
    %2198 = vmatpush2.msra.mxu0 0.0
    %2199 = vmatprep.subr.mxu0 0.0
    %2200 = vmatpush2.msra.mxu0 0.0
    %2201 = vmatprep.subr.mxu0 0.0
    %2202 = vmatpush2.msra.mxu0 0.0
    %2203 = vmatprep.subr.mxu0 0.0
    %2204 = vmatpush2.msra.mxu0 0.0
    %2205 = vmatprep.subr.mxu0 0.0
    %2206 = vmatpush2.msra.mxu0 0.0
    %2207 = vmatprep.subr.mxu0 0.0
    %2208 = vmatpush2.msra.mxu0 0.0
    %2209 = vmatprep.subr.mxu0 0.0
    %2210 = vmatpush2.msra.mxu0 0.0
    %2211 = vmatprep.subr.mxu0 0.0
    %2212 = vmatpush2.msra.mxu0 0.0
    %2213 = vmatprep.subr.mxu0 0.0
    %2214 = vmatpush2.msra.mxu0 0.0
    %2215 = vmatprep.subr.mxu0 0.0
    %2216 = vmatpush2.msra.mxu0 0.0
    %2217 = vmatprep.subr.mxu0 0.0
    %2218 = vmatpush2.msra.mxu0 0.0
    %2219 = vmatprep.subr.mxu0 0.0
    %2220 = vmatpush2.msra.mxu0 0.0
    %2221 = vmatprep.subr.mxu0 0.0
    %2222 = vmatpush2.msra.mxu0 0.0
    %2223 = vmatprep.subr.mxu0 0.0
    %2224 = vmatpush2.msra.mxu0 0.0
    %2225 = vmatprep.mubr.f32.mxu0 0.0
    %2226 = vmatmul.mubr.f32.gmra.mxu0 %v2154
    %v2227 = vpop.f32.mrf.mxu0
    %v2228 = vadd.f32 %v2113, %v2227
    %v2229 = vpop.f32.mrf.mxu0
    %2230 = vmatprep.mubr.f32.mxu0 0.0
    %2231 = vmatmul.mubr.f32.gmra.mxu0 %v2157
    %v2232 = vpop.f32.mrf.mxu0
    %v2233 = vadd.f32 %v2118, %v2232
    %v2234 = vpop.f32.mrf.mxu0
    %2235 = vdwg.mxu0
    %v2236 = vlaneseq
    %v2237 = vshrl.u32 %v2236, 7
    %v2238 = vsub.s32 0, %v2237
    %v2239 = vrot.slane %v2001, %v2238
    %v2240 = vmul.f32 %v1987, %v2239
    %v2241 = vmul.f32 %v1989, %v2239
    %2242 = vxpose.xlu0.b32.start [1/16] %v2240, 128
    %2243 = vxpose.xlu0.b32.cont [2/16] %v2241, 128
    %2244 = vxpose.xlu0.b32.cont [3/16] 0.0, 128
    %2245 = vxpose.xlu0.b32.cont [4/16] 0.0, 128
    %2246 = vxpose.xlu0.b32.cont [5/16] 0.0, 128
    %2247 = vxpose.xlu0.b32.cont [6/16] 0.0, 128
    %2248 = vxpose.xlu0.b32.cont [7/16] 0.0, 128
    %2249 = vxpose.xlu0.b32.cont [8/16] 0.0, 128
    %2250 = vxpose.xlu0.b32.cont [9/16] 0.0, 128
    %2251 = vxpose.xlu0.b32.cont [10/16] 0.0, 128
    %2252 = vxpose.xlu0.b32.cont [11/16] 0.0, 128
    %2253 = vxpose.xlu0.b32.cont [12/16] 0.0, 128
    %2254 = vxpose.xlu0.b32.cont [13/16] 0.0, 128
    %2255 = vxpose.xlu0.b32.cont [14/16] 0.0, 128
    %2256 = vxpose.xlu0.b32.cont [15/16] 0.0, 128
    %2257 = vxpose.xlu0.b32.end [16/16] 0.0, 128
    %v2258 = vpop.trf.xlu0
    %v2259 = vpop.trf.xlu0
    %v2260 = vpop.trf.xlu0
    %v2261 = vpop.trf.xlu0
    %v2262 = vpop.trf.xlu0
    %v2263 = vpop.trf.xlu0
    %v2264 = vpop.trf.xlu0
    %v2265 = vpop.trf.xlu0
    %v2266 = vpop.trf.xlu0
    %v2267 = vpop.trf.xlu0
    %v2268 = vpop.trf.xlu0
    %v2269 = vpop.trf.xlu0
    %v2270 = vpop.trf.xlu0
    %v2271 = vpop.trf.xlu0
    %v2272 = vpop.trf.xlu0
    %v2273 = vpop.trf.xlu0
    %v2275 = vsel %vm459, %v2258, 0
    %v2278 = vsel %vm459, %v2259, 0
    %2280 = vmatprep.subr.mxu0 0.0
    %2281 = vmatpush1.msra.mxu0 0.0
    %2282 = vmatprep.subr.mxu0 0.0
    %2283 = vmatpush1.msra.mxu0 0.0
    %2284 = vmatprep.subr.mxu0 0.0
    %2285 = vmatpush1.msra.mxu0 0.0
    %2286 = vmatprep.subr.mxu0 0.0
    %2287 = vmatpush1.msra.mxu0 0.0
    %2288 = vmatprep.subr.mxu0 0.0
    %2289 = vmatpush1.msra.mxu0 0.0
    %2290 = vmatprep.subr.mxu0 0.0
    %2291 = vmatpush1.msra.mxu0 0.0
    %2292 = vmatprep.subr.mxu0 0.0
    %2293 = vmatpush1.msra.mxu0 0.0
    %2294 = vmatprep.subr.mxu0 0.0
    %2295 = vmatpush1.msra.mxu0 0.0
    %2296 = vmatprep.subr.mxu0 0.0
    %2297 = vmatpush1.msra.mxu0 0.0
    %2298 = vmatprep.subr.mxu0 0.0
    %2299 = vmatpush1.msra.mxu0 0.0
    %2300 = vmatprep.subr.mxu0 0.0
    %2301 = vmatpush1.msra.mxu0 0.0
    %2302 = vmatprep.subr.mxu0 0.0
    %2303 = vmatpush1.msra.mxu0 0.0
    %2304 = vmatprep.subr.mxu0 0.0
    %2305 = vmatpush1.msra.mxu0 0.0
    %2306 = vmatprep.subr.mxu0 0.0
    %2307 = vmatpush1.msra.mxu0 0.0
    %2308 = vmatprep.subr.mxu0 0.0
    %2309 = vmatpush1.msra.mxu0 %v762
    %2310 = vmatprep.subr.mxu0 0.0
    %2311 = vmatpush1.msra.mxu0 %v761
    %2312 = vmatprep.subr.mxu0 0.0
    %2313 = vmatpush2.msra.mxu0 0.0
    %2314 = vmatprep.subr.mxu0 0.0
    %2315 = vmatpush2.msra.mxu0 0.0
    %2316 = vmatprep.subr.mxu0 0.0
    %2317 = vmatpush2.msra.mxu0 0.0
    %2318 = vmatprep.subr.mxu0 0.0
    %2319 = vmatpush2.msra.mxu0 0.0
    %2320 = vmatprep.subr.mxu0 0.0
    %2321 = vmatpush2.msra.mxu0 0.0
    %2322 = vmatprep.subr.mxu0 0.0
    %2323 = vmatpush2.msra.mxu0 0.0
    %2324 = vmatprep.subr.mxu0 0.0
    %2325 = vmatpush2.msra.mxu0 0.0
    %2326 = vmatprep.subr.mxu0 0.0
    %2327 = vmatpush2.msra.mxu0 0.0
    %2328 = vmatprep.subr.mxu0 0.0
    %2329 = vmatpush2.msra.mxu0 0.0
    %2330 = vmatprep.subr.mxu0 0.0
    %2331 = vmatpush2.msra.mxu0 0.0
    %2332 = vmatprep.subr.mxu0 0.0
    %2333 = vmatpush2.msra.mxu0 0.0
    %2334 = vmatprep.subr.mxu0 0.0
    %2335 = vmatpush2.msra.mxu0 0.0
    %2336 = vmatprep.subr.mxu0 0.0
    %2337 = vmatpush2.msra.mxu0 0.0
    %2338 = vmatprep.subr.mxu0 0.0
    %2339 = vmatpush2.msra.mxu0 0.0
    %2340 = vmatprep.subr.mxu0 0.0
    %2341 = vmatpush2.msra.mxu0 0.0
    %2342 = vmatprep.subr.mxu0 0.0
    %2343 = vmatpush2.msra.mxu0 0.0
    %2344 = vmatprep.mubr.f32.mxu0 0.0
    %2345 = vmatmul.mubr.f32.gmra.mxu0 %v2275
    %v2346 = vpop.f32.mrf.mxu0
    %v2347 = vadd.f32 0.0, %v2346
    %v2348 = vpop.f32.mrf.mxu0
    %2349 = vmatprep.mubr.f32.mxu0 0.0
    %2350 = vmatmul.mubr.f32.gmra.mxu0 %v2278
    %v2351 = vpop.f32.mrf.mxu0
    %v2352 = vadd.f32 0.0, %v2351
    %v2353 = vpop.f32.mrf.mxu0
    %2354 = vdwg.mxu0
    %v2355 = vadd.f32 %v2228, %v2347
    %v2356 = vadd.f32 %v2233, %v2352
    %v2357 = vsel %vm291, %v2355, inf
    %2358 = vmin.xlane.f32.xlu0 %v2357
    %v2359 = vpop.xlane.xlu0 %2358
    %v2360 = vsel %vm291, %v2356, inf
    %2361 = vmin.xlane.f32.xlu0 %v2360
    %v2362 = vpop.xlane.xlu0 %2361
    %v2363 = vsub.f32 %v2355, %v2359
    %v2364 = vsub.f32 %v2356, %v2362
    %v2365 = vsel %vm291, %v2363, -inf
    %2366 = vmax.xlane.f32.xlu0 %v2365
    %v2367 = vpop.xlane.xlu0 %2366
    %v2368 = vsel %vm291, %v2364, -inf
    %2369 = vmax.xlane.f32.xlu0 %v2368
    %v2370 = vpop.xlane.xlu0 %2369
    %v2371 = vrcp.pop %v2367
    %v2372 = vrcp.pop %v2370
    %v2373 = vmul.f32 %v2363, %v2371
    %v2374 = vmul.f32 %v2364, %v2372
    %v2375 = vsel %vm1506, %v1431, %v1417
    %v2376 = vadd.f32 %v2373, %v71
    %v2377 = vadd.f32 %v2374, %v72
    %v2379 = vsel %vm291, %v2376, 0
    %v2382 = vsel %vm291, %v2377, 0
    %2384 = vmatprep.subr.mxu0 0.0
    %2385 = vmatpush1.msra.mxu0 0.0
    %2386 = vmatprep.subr.mxu0 0.0
    %2387 = vmatpush1.msra.mxu0 0.0
    %2388 = vmatprep.subr.mxu0 0.0
    %2389 = vmatpush1.msra.mxu0 0.0
    %2390 = vmatprep.subr.mxu0 0.0
    %2391 = vmatpush1.msra.mxu0 0.0
    %2392 = vmatprep.subr.mxu0 0.0
    %2393 = vmatpush1.msra.mxu0 0.0
    %2394 = vmatprep.subr.mxu0 0.0
    %2395 = vmatpush1.msra.mxu0 0.0
    %2396 = vmatprep.subr.mxu0 0.0
    %2397 = vmatpush1.msra.mxu0 0.0
    %2398 = vmatprep.subr.mxu0 0.0
    %2399 = vmatpush1.msra.mxu0 0.0
    %2400 = vmatprep.subr.mxu0 0.0
    %2401 = vmatpush1.msra.mxu0 0.0
    %2402 = vmatprep.subr.mxu0 0.0
    %2403 = vmatpush1.msra.mxu0 0.0
    %2404 = vmatprep.subr.mxu0 0.0
    %2405 = vmatpush1.msra.mxu0 0.0
    %2406 = vmatprep.subr.mxu0 0.0
    %2407 = vmatpush1.msra.mxu0 0.0
    %2408 = vmatprep.subr.mxu0 0.0
    %2409 = vmatpush1.msra.mxu0 0.0
    %2410 = vmatprep.subr.mxu0 0.0
    %2411 = vmatpush1.msra.mxu0 0.0
    %2412 = vmatprep.subr.mxu0 %v299
    %2413 = vmatpush1.msra.mxu0 %v296
    %2414 = vmatprep.subr.mxu0 %v74
    %2415 = vmatpush1.msra.mxu0 %v73
    %2416 = vmatprep.subr.mxu0 0.0
    %2417 = vmatpush2.msra.mxu0 0.0
    %2418 = vmatprep.subr.mxu0 0.0
    %2419 = vmatpush2.msra.mxu0 0.0
    %2420 = vmatprep.subr.mxu0 0.0
    %2421 = vmatpush2.msra.mxu0 0.0
    %2422 = vmatprep.subr.mxu0 0.0
    %2423 = vmatpush2.msra.mxu0 0.0
    %2424 = vmatprep.subr.mxu0 0.0
    %2425 = vmatpush2.msra.mxu0 0.0
    %2426 = vmatprep.subr.mxu0 0.0
    %2427 = vmatpush2.msra.mxu0 0.0
    %2428 = vmatprep.subr.mxu0 0.0
    %2429 = vmatpush2.msra.mxu0 0.0
    %2430 = vmatprep.subr.mxu0 0.0
    %2431 = vmatpush2.msra.mxu0 0.0
    %2432 = vmatprep.subr.mxu0 0.0
    %2433 = vmatpush2.msra.mxu0 0.0
    %2434 = vmatprep.subr.mxu0 0.0
    %2435 = vmatpush2.msra.mxu0 0.0
    %2436 = vmatprep.subr.mxu0 0.0
    %2437 = vmatpush2.msra.mxu0 0.0
    %2438 = vmatprep.subr.mxu0 0.0
    %2439 = vmatpush2.msra.mxu0 0.0
    %2440 = vmatprep.subr.mxu0 0.0
    %2441 = vmatpush2.msra.mxu0 0.0
    %2442 = vmatprep.subr.mxu0 0.0
    %2443 = vmatpush2.msra.mxu0 0.0
    %2444 = vmatprep.subr.mxu0 0.0
    %2445 = vmatpush2.msra.mxu0 0.0
    %2446 = vmatprep.subr.mxu0 0.0
    %2447 = vmatpush2.msra.mxu0 0.0
    %2448 = vmatprep.mubr.f32.mxu0 0.0
    %2449 = vmatmul.mubr.f32.gmra.mxu0 %v2379
    %v2450 = vpop.f32.mrf.mxu0
    %v2451 = vadd.f32 %v274, %v2450
    %v2452 = vpop.f32.mrf.mxu0
    %v2453 = vadd.f32 %v278, %v2452
    %2454 = vmatprep.mubr.f32.mxu0 0.0
    %2455 = vmatmul.mubr.f32.gmra.mxu0 %v2382
    %v2456 = vpop.f32.mrf.mxu0
    %v2457 = vadd.f32 %v274, %v2456
    %v2458 = vpop.f32.mrf.mxu0
    %v2459 = vadd.f32 %v278, %v2458
    %2460 = vdwg.mxu0
    %2461 = vmatprep.subr.mxu0 0.0
    %2462 = vmatpush1.msra.mxu0 0.0
    %2463 = vmatprep.subr.mxu0 0.0
    %2464 = vmatpush1.msra.mxu0 0.0
    %2465 = vmatprep.subr.mxu0 0.0
    %2466 = vmatpush1.msra.mxu0 0.0
    %2467 = vmatprep.subr.mxu0 0.0
    %2468 = vmatpush1.msra.mxu0 0.0
    %2469 = vmatprep.subr.mxu0 0.0
    %2470 = vmatpush1.msra.mxu0 0.0
    %2471 = vmatprep.subr.mxu0 0.0
    %2472 = vmatpush1.msra.mxu0 0.0
    %2473 = vmatprep.subr.mxu0 0.0
    %2474 = vmatpush1.msra.mxu0 0.0
    %2475 = vmatprep.subr.mxu0 0.0
    %2476 = vmatpush1.msra.mxu0 0.0
    %2477 = vmatprep.subr.mxu0 0.0
    %2478 = vmatpush1.msra.mxu0 0.0
    %2479 = vmatprep.subr.mxu0 0.0
    %2480 = vmatpush1.msra.mxu0 0.0
    %2481 = vmatprep.subr.mxu0 0.0
    %2482 = vmatpush1.msra.mxu0 0.0
    %2483 = vmatprep.subr.mxu0 0.0
    %2484 = vmatpush1.msra.mxu0 0.0
    %2485 = vmatprep.subr.mxu0 0.0
    %2486 = vmatpush1.msra.mxu0 0.0
    %2487 = vmatprep.subr.mxu0 0.0
    %2488 = vmatpush1.msra.mxu0 0.0
    %2489 = vmatprep.subr.mxu0 %v305
    %2490 = vmatpush1.msra.mxu0 %v302
    %2491 = vmatprep.subr.mxu0 %v76
    %2492 = vmatpush1.msra.mxu0 %v75
    %2493 = vmatprep.subr.mxu0 0.0
    %2494 = vmatpush2.msra.mxu0 0.0
    %2495 = vmatprep.subr.mxu0 0.0
    %2496 = vmatpush2.msra.mxu0 0.0
    %2497 = vmatprep.subr.mxu0 0.0
    %2498 = vmatpush2.msra.mxu0 0.0
    %2499 = vmatprep.subr.mxu0 0.0
    %2500 = vmatpush2.msra.mxu0 0.0
    %2501 = vmatprep.subr.mxu0 0.0
    %2502 = vmatpush2.msra.mxu0 0.0
    %2503 = vmatprep.subr.mxu0 0.0
    %2504 = vmatpush2.msra.mxu0 0.0
    %2505 = vmatprep.subr.mxu0 0.0
    %2506 = vmatpush2.msra.mxu0 0.0
    %2507 = vmatprep.subr.mxu0 0.0
    %2508 = vmatpush2.msra.mxu0 0.0
    %2509 = vmatprep.subr.mxu0 0.0
    %2510 = vmatpush2.msra.mxu0 0.0
    %2511 = vmatprep.subr.mxu0 0.0
    %2512 = vmatpush2.msra.mxu0 0.0
    %2513 = vmatprep.subr.mxu0 0.0
    %2514 = vmatpush2.msra.mxu0 0.0
    %2515 = vmatprep.subr.mxu0 0.0
    %2516 = vmatpush2.msra.mxu0 0.0
    %2517 = vmatprep.subr.mxu0 0.0
    %2518 = vmatpush2.msra.mxu0 0.0
    %2519 = vmatprep.subr.mxu0 0.0
    %2520 = vmatpush2.msra.mxu0 0.0
    %2521 = vmatprep.subr.mxu0 0.0
    %2522 = vmatpush2.msra.mxu0 0.0
    %2523 = vmatprep.subr.mxu0 0.0
    %2524 = vmatpush2.msra.mxu0 0.0
    %2525 = vmatprep.mubr.f32.mxu0 0.0
    %2526 = vmatmul.mubr.f32.gmra.mxu0 %v2379
    %v2527 = vpop.f32.mrf.mxu0
    %v2528 = vadd.f32 %v282, %v2527
    %v2529 = vpop.f32.mrf.mxu0
    %v2530 = vadd.f32 %v286, %v2529
    %2531 = vmatprep.mubr.f32.mxu0 0.0
    %2532 = vmatmul.mubr.f32.gmra.mxu0 %v2382
    %v2533 = vpop.f32.mrf.mxu0
    %v2534 = vadd.f32 %v282, %v2533
    %v2535 = vpop.f32.mrf.mxu0
    %v2536 = vadd.f32 %v286, %v2535
    %2537 = vdwg.mxu0
    %v2538 = vmax.f32 %v2451, 0.0
    %v2539 = vmax.f32 %v2453, 0.0
    %v2540 = vmax.f32 %v2528, 0.0
    %v2541 = vmax.f32 %v2530, 0.0
    %v2542 = vmax.f32 %v2457, 0.0
    %v2543 = vmax.f32 %v2459, 0.0
    %v2544 = vmax.f32 %v2534, 0.0
    %v2545 = vmax.f32 %v2536, 0.0
    %v2547 = vsel %vm459, %v2541, 0
    %v2550 = vsel %vm459, %v2545, 0
    %2552 = vmatprep.subr.mxu0 0.0
    %2553 = vmatpush1.msra.mxu0 %v97
    %2554 = vmatprep.subr.mxu0 0.0
    %2555 = vmatpush1.msra.mxu0 %v96
    %2556 = vmatprep.subr.mxu0 0.0
    %2557 = vmatpush1.msra.mxu0 %v95
    %2558 = vmatprep.subr.mxu0 0.0
    %2559 = vmatpush1.msra.mxu0 %v94
    %2560 = vmatprep.subr.mxu0 0.0
    %2561 = vmatpush1.msra.mxu0 %v93
    %2562 = vmatprep.subr.mxu0 0.0
    %2563 = vmatpush1.msra.mxu0 %v92
    %2564 = vmatprep.subr.mxu0 0.0
    %2565 = vmatpush1.msra.mxu0 %v91
    %2566 = vmatprep.subr.mxu0 0.0
    %2567 = vmatpush1.msra.mxu0 %v90
    %2568 = vmatprep.subr.mxu0 0.0
    %2569 = vmatpush1.msra.mxu0 %v89
    %2570 = vmatprep.subr.mxu0 0.0
    %2571 = vmatpush1.msra.mxu0 %v88
    %2572 = vmatprep.subr.mxu0 0.0
    %2573 = vmatpush1.msra.mxu0 %v87
    %2574 = vmatprep.subr.mxu0 0.0
    %2575 = vmatpush1.msra.mxu0 %v86
    %2576 = vmatprep.subr.mxu0 0.0
    %2577 = vmatpush1.msra.mxu0 %v85
    %2578 = vmatprep.subr.mxu0 0.0
    %2579 = vmatpush1.msra.mxu0 %v84
    %2580 = vmatprep.subr.mxu0 0.0
    %2581 = vmatpush1.msra.mxu0 %v83
    %2582 = vmatprep.subr.mxu0 0.0
    %2583 = vmatpush1.msra.mxu0 %v82
    %2584 = vmatprep.subr.mxu0 0.0
    %2585 = vmatpush2.msra.mxu0 %v113
    %2586 = vmatprep.subr.mxu0 0.0
    %2587 = vmatpush2.msra.mxu0 %v112
    %2588 = vmatprep.subr.mxu0 0.0
    %2589 = vmatpush2.msra.mxu0 %v111
    %2590 = vmatprep.subr.mxu0 0.0
    %2591 = vmatpush2.msra.mxu0 %v110
    %2592 = vmatprep.subr.mxu0 0.0
    %2593 = vmatpush2.msra.mxu0 %v109
    %2594 = vmatprep.subr.mxu0 0.0
    %2595 = vmatpush2.msra.mxu0 %v108
    %2596 = vmatprep.subr.mxu0 0.0
    %2597 = vmatpush2.msra.mxu0 %v107
    %2598 = vmatprep.subr.mxu0 0.0
    %2599 = vmatpush2.msra.mxu0 %v106
    %2600 = vmatprep.subr.mxu0 0.0
    %2601 = vmatpush2.msra.mxu0 %v105
    %2602 = vmatprep.subr.mxu0 0.0
    %2603 = vmatpush2.msra.mxu0 %v104
    %2604 = vmatprep.subr.mxu0 0.0
    %2605 = vmatpush2.msra.mxu0 %v103
    %2606 = vmatprep.subr.mxu0 0.0
    %2607 = vmatpush2.msra.mxu0 %v102
    %2608 = vmatprep.subr.mxu0 0.0
    %2609 = vmatpush2.msra.mxu0 %v101
    %2610 = vmatprep.subr.mxu0 0.0
    %2611 = vmatpush2.msra.mxu0 %v100
    %2612 = vmatprep.subr.mxu0 0.0
    %2613 = vmatpush2.msra.mxu0 %v99
    %2614 = vmatprep.subr.mxu0 0.0
    %2615 = vmatpush2.msra.mxu0 %v98
    %2616 = vmatprep.mubr.f32.mxu0 %v2539
    %2617 = vmatmul.mubr.f32.gmra.mxu0 %v2538
    %v2618 = vpop.f32.mrf.mxu0
    %v2619 = vadd.f32 %v457, %v2618
    %v2620 = vpop.f32.mrf.mxu0
    %2621 = vmatprep.mubr.f32.mxu0 %v2543
    %2622 = vmatmul.mubr.f32.gmra.mxu0 %v2542
    %v2623 = vpop.f32.mrf.mxu0
    %v2624 = vadd.f32 %v457, %v2623
    %v2625 = vpop.f32.mrf.mxu0
    %2626 = vdwg.mxu0
    %2627 = vmatprep.subr.mxu0 0.0
    %2628 = vmatpush1.msra.mxu0 %v129
    %2629 = vmatprep.subr.mxu0 0.0
    %2630 = vmatpush1.msra.mxu0 %v128
    %2631 = vmatprep.subr.mxu0 0.0
    %2632 = vmatpush1.msra.mxu0 %v127
    %2633 = vmatprep.subr.mxu0 0.0
    %2634 = vmatpush1.msra.mxu0 %v126
    %2635 = vmatprep.subr.mxu0 0.0
    %2636 = vmatpush1.msra.mxu0 %v125
    %2637 = vmatprep.subr.mxu0 0.0
    %2638 = vmatpush1.msra.mxu0 %v124
    %2639 = vmatprep.subr.mxu0 0.0
    %2640 = vmatpush1.msra.mxu0 %v123
    %2641 = vmatprep.subr.mxu0 0.0
    %2642 = vmatpush1.msra.mxu0 %v122
    %2643 = vmatprep.subr.mxu0 0.0
    %2644 = vmatpush1.msra.mxu0 %v121
    %2645 = vmatprep.subr.mxu0 0.0
    %2646 = vmatpush1.msra.mxu0 %v120
    %2647 = vmatprep.subr.mxu0 0.0
    %2648 = vmatpush1.msra.mxu0 %v119
    %2649 = vmatprep.subr.mxu0 0.0
    %2650 = vmatpush1.msra.mxu0 %v118
    %2651 = vmatprep.subr.mxu0 0.0
    %2652 = vmatpush1.msra.mxu0 %v117
    %2653 = vmatprep.subr.mxu0 0.0
    %2654 = vmatpush1.msra.mxu0 %v116
    %2655 = vmatprep.subr.mxu0 0.0
    %2656 = vmatpush1.msra.mxu0 %v115
    %2657 = vmatprep.subr.mxu0 0.0
    %2658 = vmatpush1.msra.mxu0 %v114
    %2659 = vmatprep.subr.mxu0 0.0
    %2660 = vmatpush2.msra.mxu0 0.0
    %2661 = vmatprep.subr.mxu0 0.0
    %2662 = vmatpush2.msra.mxu0 0.0
    %2663 = vmatprep.subr.mxu0 0.0
    %2664 = vmatpush2.msra.mxu0 0.0
    %2665 = vmatprep.subr.mxu0 0.0
    %2666 = vmatpush2.msra.mxu0 0.0
    %2667 = vmatprep.subr.mxu0 0.0
    %2668 = vmatpush2.msra.mxu0 0.0
    %2669 = vmatprep.subr.mxu0 0.0
    %2670 = vmatpush2.msra.mxu0 0.0
    %2671 = vmatprep.subr.mxu0 0.0
    %2672 = vmatpush2.msra.mxu0 0.0
    %2673 = vmatprep.subr.mxu0 0.0
    %2674 = vmatpush2.msra.mxu0 0.0
    %2675 = vmatprep.subr.mxu0 0.0
    %2676 = vmatpush2.msra.mxu0 0.0
    %2677 = vmatprep.subr.mxu0 0.0
    %2678 = vmatpush2.msra.mxu0 0.0
    %2679 = vmatprep.subr.mxu0 0.0
    %2680 = vmatpush2.msra.mxu0 0.0
    %2681 = vmatprep.subr.mxu0 0.0
    %2682 = vmatpush2.msra.mxu0 0.0
    %2683 = vmatprep.subr.mxu0 0.0
    %2684 = vmatpush2.msra.mxu0 0.0
    %2685 = vmatprep.subr.mxu0 0.0
    %2686 = vmatpush2.msra.mxu0 0.0
    %2687 = vmatprep.subr.mxu0 0.0
    %2688 = vmatpush2.msra.mxu0 %v131
    %2689 = vmatprep.subr.mxu0 0.0
    %2690 = vmatpush2.msra.mxu0 %v130
    %2691 = vmatprep.mubr.f32.mxu0 %v2547
    %2692 = vmatmul.mubr.f32.gmra.mxu0 %v2540
    %v2693 = vpop.f32.mrf.mxu0
    %v2694 = vadd.f32 %v2619, %v2693
    %v2695 = vpop.f32.mrf.mxu0
    %2696 = vmatprep.mubr.f32.mxu0 %v2550
    %2697 = vmatmul.mubr.f32.gmra.mxu0 %v2544
    %v2698 = vpop.f32.mrf.mxu0
    %v2699 = vadd.f32 %v2624, %v2698
    %v2700 = vpop.f32.mrf.mxu0
    %2701 = vdwg.mxu0
    %v2702 = vsel %vm1087, %v2694, -inf
    %v2703 = vsel %vm1087, %v2699, -inf
    %v2704 = vmax.f32 %v2702, %v2703
    %v2705 = vrot.slane %v2704, 4
    %v2706 = vmax.f32 %v2704, %v2705
    %v2707 = vrot.slane %v2706, 2
    %v2708 = vmax.f32 %v2706, %v2707
    %v2709 = vrot.slane %v2708, 1
    %v2710 = vmax.f32 %v2708, %v2709
    %v2711 = vmax.f32 %v2710, %v600
    %v2712 = vsub.f32 %v600, %v2711
    %v2713 = vmul.f32 %v2712, 1.442695
    %v2714 = vpow.pop %v2713
    %v2715 = vlaneseq
    %v2716 = vshrl.u32 %v2715, 7
    %v2717 = vsub.s32 1, %v2716
    %v2718 = vrot.slane %v2711, %v2717
    %v2719 = vsub.f32 %v2694, %v2718
    %v2720 = vsub.f32 %v2699, %v2718
    %v2721 = vmul.f32 %v2719, 1.442695
    %v2722 = vpow.pop %v2721
    %v2723 = vmul.f32 %v2720, 1.442695
    %v2724 = vpow.pop %v2723
    %v2725 = vsel %vm1087, %v2722, 0.0
    %v2726 = vsel %vm1087, %v2724, 0.0
    %v2727 = vadd.f32 %v2725, %v2726
    %v2728 = vrot.slane %v2727, 4
    %v2729 = vadd.f32 %v2727, %v2728
    %v2730 = vrot.slane %v2729, 2
    %v2731 = vadd.f32 %v2729, %v2730
    %v2732 = vrot.slane %v2731, 1
    %v2733 = vadd.f32 %v2731, %v2732
    %v2734 = vadd.f32 %v2733, %v2714
    %v2735 = vrcp.pop %v2734
    %v2736 = vmul.f32 %v2714, %v2735
    %2738 = vset.pattern.permute.xlu0 16
    %2739 = vperm.xlu0 %2738, %v2736
    %v2740 = vpop.permute.xlu0 %2739
    %v2742 = vmul.f32 %v2740, %v267
    %v2743 = vlaneseq
    %v2744 = vshrl.u32 %v2743, 7
    %v2745 = vsub.s32 1, %v2744
    %v2746 = vrot.slane %v2735, %v2745
    %v2747 = vmul.f32 %v2722, %v2746
    %v2748 = vmul.f32 %v2724, %v2746
    %2751 = vrot.lane.b32.xlu0 %v2747, 112
    %v2752 = vpop.permute.xlu0 %2751
    %2753 = vrot.lane.b32.xlu0 %v2748, 112
    %v2754 = vpop.permute.xlu0 %2753
    %2757 = vxpose.xlu0.b32.start [1/16] %v2752, 128
    %2758 = vxpose.xlu0.b32.cont [2/16] %v2754, 128
    %2759 = vxpose.xlu0.b32.cont [3/16] 0.0, 128
    %2760 = vxpose.xlu0.b32.cont [4/16] 0.0, 128
    %2761 = vxpose.xlu0.b32.cont [5/16] 0.0, 128
    %2762 = vxpose.xlu0.b32.cont [6/16] 0.0, 128
    %2763 = vxpose.xlu0.b32.cont [7/16] 0.0, 128
    %2764 = vxpose.xlu0.b32.cont [8/16] 0.0, 128
    %2765 = vxpose.xlu0.b32.cont [9/16] 0.0, 128
    %2766 = vxpose.xlu0.b32.cont [10/16] 0.0, 128
    %2767 = vxpose.xlu0.b32.cont [11/16] 0.0, 128
    %2768 = vxpose.xlu0.b32.cont [12/16] 0.0, 128
    %2769 = vxpose.xlu0.b32.cont [13/16] 0.0, 128
    %2770 = vxpose.xlu0.b32.cont [14/16] 0.0, 128
    %2771 = vxpose.xlu0.b32.cont [15/16] 0.0, 128
    %2772 = vxpose.xlu0.b32.end [16/16] 0.0, 128
    %v2773 = vpop.trf.xlu0
    %v2774 = vpop.trf.xlu0
    %v2775 = vpop.trf.xlu0
    %v2776 = vpop.trf.xlu0
    %v2777 = vpop.trf.xlu0
    %v2778 = vpop.trf.xlu0
    %v2779 = vpop.trf.xlu0
    %v2780 = vpop.trf.xlu0
    %v2781 = vpop.trf.xlu0
    %v2782 = vpop.trf.xlu0
    %v2783 = vpop.trf.xlu0
    %v2784 = vpop.trf.xlu0
    %v2785 = vpop.trf.xlu0
    %v2786 = vpop.trf.xlu0
    %v2787 = vpop.trf.xlu0
    %v2788 = vpop.trf.xlu0
    %v2790 = vsel %vm459, %v2773, 0
    %2792 = vmatprep.subr.mxu0 0.0
    %2793 = vmatpush1.msra.mxu0 0.0
    %2794 = vmatprep.subr.mxu0 0.0
    %2795 = vmatpush1.msra.mxu0 0.0
    %2796 = vmatprep.subr.mxu0 0.0
    %2797 = vmatpush1.msra.mxu0 0.0
    %2798 = vmatprep.subr.mxu0 0.0
    %2799 = vmatpush1.msra.mxu0 0.0
    %2800 = vmatprep.subr.mxu0 0.0
    %2801 = vmatpush1.msra.mxu0 0.0
    %2802 = vmatprep.subr.mxu0 0.0
    %2803 = vmatpush1.msra.mxu0 0.0
    %2804 = vmatprep.subr.mxu0 0.0
    %2805 = vmatpush1.msra.mxu0 0.0
    %2806 = vmatprep.subr.mxu0 0.0
    %2807 = vmatpush1.msra.mxu0 0.0
    %2808 = vmatprep.subr.mxu0 0.0
    %2809 = vmatpush1.msra.mxu0 0.0
    %2810 = vmatprep.subr.mxu0 0.0
    %2811 = vmatpush1.msra.mxu0 0.0
    %2812 = vmatprep.subr.mxu0 0.0
    %2813 = vmatpush1.msra.mxu0 0.0
    %2814 = vmatprep.subr.mxu0 0.0
    %2815 = vmatpush1.msra.mxu0 0.0
    %2816 = vmatprep.subr.mxu0 0.0
    %2817 = vmatpush1.msra.mxu0 0.0
    %2818 = vmatprep.subr.mxu0 0.0
    %2819 = vmatpush1.msra.mxu0 0.0
    %2820 = vmatprep.subr.mxu0 0.0
    %2821 = vmatpush1.msra.mxu0 %v2377
    %2822 = vmatprep.subr.mxu0 0.0
    %2823 = vmatpush1.msra.mxu0 %v2376
    %2824 = vmatprep.subr.mxu0 0.0
    %2825 = vmatpush2.msra.mxu0 0.0
    %2826 = vmatprep.subr.mxu0 0.0
    %2827 = vmatpush2.msra.mxu0 0.0
    %2828 = vmatprep.subr.mxu0 0.0
    %2829 = vmatpush2.msra.mxu0 0.0
    %2830 = vmatprep.subr.mxu0 0.0
    %2831 = vmatpush2.msra.mxu0 0.0
    %2832 = vmatprep.subr.mxu0 0.0
    %2833 = vmatpush2.msra.mxu0 0.0
    %2834 = vmatprep.subr.mxu0 0.0
    %2835 = vmatpush2.msra.mxu0 0.0
    %2836 = vmatprep.subr.mxu0 0.0
    %2837 = vmatpush2.msra.mxu0 0.0
    %2838 = vmatprep.subr.mxu0 0.0
    %2839 = vmatpush2.msra.mxu0 0.0
    %2840 = vmatprep.subr.mxu0 0.0
    %2841 = vmatpush2.msra.mxu0 0.0
    %2842 = vmatprep.subr.mxu0 0.0
    %2843 = vmatpush2.msra.mxu0 0.0
    %2844 = vmatprep.subr.mxu0 0.0
    %2845 = vmatpush2.msra.mxu0 0.0
    %2846 = vmatprep.subr.mxu0 0.0
    %2847 = vmatpush2.msra.mxu0 0.0
    %2848 = vmatprep.subr.mxu0 0.0
    %2849 = vmatpush2.msra.mxu0 0.0
    %2850 = vmatprep.subr.mxu0 0.0
    %2851 = vmatpush2.msra.mxu0 0.0
    %2852 = vmatprep.subr.mxu0 0.0
    %2853 = vmatpush2.msra.mxu0 0.0
    %2854 = vmatprep.subr.mxu0 0.0
    %2855 = vmatpush2.msra.mxu0 0.0
    %2856 = vmatprep.mubr.f32.mxu0 0.0
    %2857 = vmatmul.mubr.f32.gmra.mxu0 %v2790
    %v2858 = vpop.f32.mrf.mxu0
    %v2859 = vadd.f32 0.0, %v2858
    %v2860 = vpop.f32.mrf.mxu0
    %2861 = vdwg.mxu0
    %v2863 = vrot.slane %v2859, 7
    %v2865 = vadd.f32 %v2742, %v2863
    %v2867 = vrot.slane %v2865, 1
    %v2868 = vsel %vm291, %v2867, 0
    %2870 = vmatprep.subr.mxu0 0.0
    %2871 = vmatpush1.msra.mxu0 0.0
    %2872 = vmatprep.subr.mxu0 0.0
    %2873 = vmatpush1.msra.mxu0 0.0
    %2874 = vmatprep.subr.mxu0 0.0
    %2875 = vmatpush1.msra.mxu0 0.0
    %2876 = vmatprep.subr.mxu0 0.0
    %2877 = vmatpush1.msra.mxu0 0.0
    %2878 = vmatprep.subr.mxu0 0.0
    %2879 = vmatpush1.msra.mxu0 0.0
    %2880 = vmatprep.subr.mxu0 0.0
    %2881 = vmatpush1.msra.mxu0 0.0
    %2882 = vmatprep.subr.mxu0 0.0
    %2883 = vmatpush1.msra.mxu0 0.0
    %2884 = vmatprep.subr.mxu0 0.0
    %2885 = vmatpush1.msra.mxu0 0.0
    %2886 = vmatprep.subr.mxu0 0.0
    %2887 = vmatpush1.msra.mxu0 0.0
    %2888 = vmatprep.subr.mxu0 0.0
    %2889 = vmatpush1.msra.mxu0 0.0
    %2890 = vmatprep.subr.mxu0 0.0
    %2891 = vmatpush1.msra.mxu0 0.0
    %2892 = vmatprep.subr.mxu0 0.0
    %2893 = vmatpush1.msra.mxu0 0.0
    %2894 = vmatprep.subr.mxu0 0.0
    %2895 = vmatpush1.msra.mxu0 0.0
    %2896 = vmatprep.subr.mxu0 0.0
    %2897 = vmatpush1.msra.mxu0 0.0
    %2898 = vmatprep.subr.mxu0 %v1256
    %2899 = vmatpush1.msra.mxu0 %v1253
    %2900 = vmatprep.subr.mxu0 %v134
    %2901 = vmatpush1.msra.mxu0 %v133
    %2902 = vmatprep.subr.mxu0 0.0
    %2903 = vmatpush2.msra.mxu0 0.0
    %2904 = vmatprep.subr.mxu0 0.0
    %2905 = vmatpush2.msra.mxu0 0.0
    %2906 = vmatprep.subr.mxu0 0.0
    %2907 = vmatpush2.msra.mxu0 0.0
    %2908 = vmatprep.subr.mxu0 0.0
    %2909 = vmatpush2.msra.mxu0 0.0
    %2910 = vmatprep.subr.mxu0 0.0
    %2911 = vmatpush2.msra.mxu0 0.0
    %2912 = vmatprep.subr.mxu0 0.0
    %2913 = vmatpush2.msra.mxu0 0.0
    %2914 = vmatprep.subr.mxu0 0.0
    %2915 = vmatpush2.msra.mxu0 0.0
    %2916 = vmatprep.subr.mxu0 0.0
    %2917 = vmatpush2.msra.mxu0 0.0
    %2918 = vmatprep.subr.mxu0 0.0
    %2919 = vmatpush2.msra.mxu0 0.0
    %2920 = vmatprep.subr.mxu0 0.0
    %2921 = vmatpush2.msra.mxu0 0.0
    %2922 = vmatprep.subr.mxu0 0.0
    %2923 = vmatpush2.msra.mxu0 0.0
    %2924 = vmatprep.subr.mxu0 0.0
    %2925 = vmatpush2.msra.mxu0 0.0
    %2926 = vmatprep.subr.mxu0 0.0
    %2927 = vmatpush2.msra.mxu0 0.0
    %2928 = vmatprep.subr.mxu0 0.0
    %2929 = vmatpush2.msra.mxu0 0.0
    %2930 = vmatprep.subr.mxu0 0.0
    %2931 = vmatpush2.msra.mxu0 0.0
    %2932 = vmatprep.subr.mxu0 0.0
    %2933 = vmatpush2.msra.mxu0 0.0
    %2934 = vmatprep.mubr.f32.mxu0 0.0
    %2935 = vmatmul.mubr.f32.gmra.mxu0 %v2868
    %v2936 = vpop.f32.mrf.mxu0
    %v2937 = vadd.f32 0.0, %v2936
    %v2938 = vpop.f32.mrf.mxu0
    %v2939 = vadd.f32 0.0, %v2938
    %2940 = vdwg.mxu0
    %v2943 = vrot.slane %v2937, 7
    %v2944 = vrot.slane %v2939, 7
    %v2947 = vadd.f32 %v680, %v2943
    %v2948 = vadd.f32 %v682, %v2944
    %v2949 = vadd.f32 %v2947, %v1335
    %v2950 = vadd.f32 %v2948, %v1339
    %v2951 = vmax.f32 %v2949, 0.0
    %v2952 = vmax.f32 %v2950, 0.0
    %v2955 = vrot.slane %v2951, 1
    %v2956 = vrot.slane %v2952, 1
    %v2958 = vsel %vm1346, %v2956, 0
    %2960 = vmatprep.subr.mxu0 0.0
    %2961 = vmatpush1.msra.mxu0 %v153
    %2962 = vmatprep.subr.mxu0 0.0
    %2963 = vmatpush1.msra.mxu0 %v152
    %2964 = vmatprep.subr.mxu0 0.0
    %2965 = vmatpush1.msra.mxu0 %v151
    %2966 = vmatprep.subr.mxu0 0.0
    %2967 = vmatpush1.msra.mxu0 %v150
    %2968 = vmatprep.subr.mxu0 0.0
    %2969 = vmatpush1.msra.mxu0 %v149
    %2970 = vmatprep.subr.mxu0 0.0
    %2971 = vmatpush1.msra.mxu0 %v148
    %2972 = vmatprep.subr.mxu0 0.0
    %2973 = vmatpush1.msra.mxu0 %v147
    %2974 = vmatprep.subr.mxu0 0.0
    %2975 = vmatpush1.msra.mxu0 %v146
    %2976 = vmatprep.subr.mxu0 0.0
    %2977 = vmatpush1.msra.mxu0 %v145
    %2978 = vmatprep.subr.mxu0 0.0
    %2979 = vmatpush1.msra.mxu0 %v144
    %2980 = vmatprep.subr.mxu0 0.0
    %2981 = vmatpush1.msra.mxu0 %v143
    %2982 = vmatprep.subr.mxu0 0.0
    %2983 = vmatpush1.msra.mxu0 %v142
    %2984 = vmatprep.subr.mxu0 0.0
    %2985 = vmatpush1.msra.mxu0 %v141
    %2986 = vmatprep.subr.mxu0 0.0
    %2987 = vmatpush1.msra.mxu0 %v140
    %2988 = vmatprep.subr.mxu0 0.0
    %2989 = vmatpush1.msra.mxu0 %v139
    %2990 = vmatprep.subr.mxu0 0.0
    %2991 = vmatpush1.msra.mxu0 %v138
    %2992 = vmatprep.subr.mxu0 0.0
    %2993 = vmatpush2.msra.mxu0 0.0
    %2994 = vmatprep.subr.mxu0 0.0
    %2995 = vmatpush2.msra.mxu0 0.0
    %2996 = vmatprep.subr.mxu0 0.0
    %2997 = vmatpush2.msra.mxu0 0.0
    %2998 = vmatprep.subr.mxu0 0.0
    %2999 = vmatpush2.msra.mxu0 0.0
    %3000 = vmatprep.subr.mxu0 0.0
    %3001 = vmatpush2.msra.mxu0 0.0
    %3002 = vmatprep.subr.mxu0 0.0
    %3003 = vmatpush2.msra.mxu0 0.0
    %3004 = vmatprep.subr.mxu0 0.0
    %3005 = vmatpush2.msra.mxu0 0.0
    %3006 = vmatprep.subr.mxu0 0.0
    %3007 = vmatpush2.msra.mxu0 %v162
    %3008 = vmatprep.subr.mxu0 0.0
    %3009 = vmatpush2.msra.mxu0 %v161
    %3010 = vmatprep.subr.mxu0 0.0
    %3011 = vmatpush2.msra.mxu0 %v160
    %3012 = vmatprep.subr.mxu0 0.0
    %3013 = vmatpush2.msra.mxu0 %v159
    %3014 = vmatprep.subr.mxu0 0.0
    %3015 = vmatpush2.msra.mxu0 %v158
    %3016 = vmatprep.subr.mxu0 0.0
    %3017 = vmatpush2.msra.mxu0 %v157
    %3018 = vmatprep.subr.mxu0 0.0
    %3019 = vmatpush2.msra.mxu0 %v156
    %3020 = vmatprep.subr.mxu0 0.0
    %3021 = vmatpush2.msra.mxu0 %v155
    %3022 = vmatprep.subr.mxu0 0.0
    %3023 = vmatpush2.msra.mxu0 %v154
    %3024 = vmatprep.mubr.f32.mxu0 %v2958
    %3025 = vmatmul.mubr.f32.gmra.mxu0 %v2955
    %v3026 = vpop.f32.mrf.mxu0
    %v3027 = vadd.f32 %v163, %v3026
    %v3028 = vpop.f32.mrf.mxu0
    %3029 = vdwg.mxu0
    %v3030 = vsel %vm1420, %v3027, -inf
    %3031 = vmax.xlane.f32.xlu0 %v3030
    %v3032 = vpop.xlane.xlu0 %3031
    %v3033 = vsub.f32 %v3027, %v3032
    %v3034 = vmul.f32 %v3033, 1.442695
    %v3035 = vpow.pop %v3034
    %v3036 = vsel %vm1420, %v3035, 0.0
    %3037 = vadd.xlane.f32.xlu0 %v3036
    %v3038 = vpop.xlane.xlu0 %3037
    %v3039 = vrcp.pop %v3038
    %v3040 = vmul.f32 %v3035, %v3039
    %3041 = vmatprep.subr.mxu0 0.0
    %3042 = vmatpush1.msra.mxu0 0.0
    %3043 = vmatprep.subr.mxu0 0.0
    %3044 = vmatpush1.msra.mxu0 0.0
    %3045 = vmatprep.subr.mxu0 0.0
    %3046 = vmatpush1.msra.mxu0 0.0
    %3047 = vmatprep.subr.mxu0 0.0
    %3048 = vmatpush1.msra.mxu0 0.0
    %3049 = vmatprep.subr.mxu0 0.0
    %3050 = vmatpush1.msra.mxu0 0.0
    %3051 = vmatprep.subr.mxu0 0.0
    %3052 = vmatpush1.msra.mxu0 0.0
    %3053 = vmatprep.subr.mxu0 0.0
    %3054 = vmatpush1.msra.mxu0 0.0
    %3055 = vmatprep.subr.mxu0 0.0
    %3056 = vmatpush1.msra.mxu0 0.0
    %3057 = vmatprep.subr.mxu0 0.0
    %3058 = vmatpush1.msra.mxu0 0.0
    %3059 = vmatprep.subr.mxu0 0.0
    %3060 = vmatpush1.msra.mxu0 0.0
    %3061 = vmatprep.subr.mxu0 0.0
    %3062 = vmatpush1.msra.mxu0 0.0
    %3063 = vmatprep.subr.mxu0 0.0
    %3064 = vmatpush1.msra.mxu0 0.0
    %3065 = vmatprep.subr.mxu0 0.0
    %3066 = vmatpush1.msra.mxu0 0.0
    %3067 = vmatprep.subr.mxu0 0.0
    %3068 = vmatpush1.msra.mxu0 0.0
    %3069 = vmatprep.subr.mxu0 0.0
    %3070 = vmatpush1.msra.mxu0 %v1433
    %3071 = vmatprep.subr.mxu0 0.0
    %3072 = vmatpush1.msra.mxu0 %v164
    %3073 = vmatprep.subr.mxu0 0.0
    %3074 = vmatpush2.msra.mxu0 0.0
    %3075 = vmatprep.subr.mxu0 0.0
    %3076 = vmatpush2.msra.mxu0 0.0
    %3077 = vmatprep.subr.mxu0 0.0
    %3078 = vmatpush2.msra.mxu0 0.0
    %3079 = vmatprep.subr.mxu0 0.0
    %3080 = vmatpush2.msra.mxu0 0.0
    %3081 = vmatprep.subr.mxu0 0.0
    %3082 = vmatpush2.msra.mxu0 0.0
    %3083 = vmatprep.subr.mxu0 0.0
    %3084 = vmatpush2.msra.mxu0 0.0
    %3085 = vmatprep.subr.mxu0 0.0
    %3086 = vmatpush2.msra.mxu0 0.0
    %3087 = vmatprep.subr.mxu0 0.0
    %3088 = vmatpush2.msra.mxu0 0.0
    %3089 = vmatprep.subr.mxu0 0.0
    %3090 = vmatpush2.msra.mxu0 0.0
    %3091 = vmatprep.subr.mxu0 0.0
    %3092 = vmatpush2.msra.mxu0 0.0
    %3093 = vmatprep.subr.mxu0 0.0
    %3094 = vmatpush2.msra.mxu0 0.0
    %3095 = vmatprep.subr.mxu0 0.0
    %3096 = vmatpush2.msra.mxu0 0.0
    %3097 = vmatprep.subr.mxu0 0.0
    %3098 = vmatpush2.msra.mxu0 0.0
    %3099 = vmatprep.subr.mxu0 0.0
    %3100 = vmatpush2.msra.mxu0 0.0
    %3101 = vmatprep.subr.mxu0 0.0
    %3102 = vmatpush2.msra.mxu0 0.0
    %3103 = vmatprep.subr.mxu0 0.0
    %3104 = vmatpush2.msra.mxu0 0.0
    %3105 = vmatprep.mubr.f32.mxu0 0.0
    %3106 = vmatmul.mubr.f32.gmra.mxu0 %v2868
    %v3107 = vpop.f32.mrf.mxu0
    %v3108 = vadd.f32 0.0, %v3107
    %v3109 = vpop.f32.mrf.mxu0
    %3110 = vdwg.mxu0
    %v3112 = vrot.slane %v3108, 7
    %v3114 = vadd.f32 %v756, %v3112
    %v3116 = vsel %vm1506, %v3040, 0
    %3118 = vmatprep.subr.mxu0 0.0
    %3119 = vmatpush1.msra.mxu0 0.0
    %3120 = vmatprep.subr.mxu0 0.0
    %3121 = vmatpush1.msra.mxu0 0.0
    %3122 = vmatprep.subr.mxu0 0.0
    %3123 = vmatpush1.msra.mxu0 0.0
    %3124 = vmatprep.subr.mxu0 0.0
    %3125 = vmatpush1.msra.mxu0 0.0
    %3126 = vmatprep.subr.mxu0 0.0
    %3127 = vmatpush1.msra.mxu0 0.0
    %3128 = vmatprep.subr.mxu0 0.0
    %3129 = vmatpush1.msra.mxu0 0.0
    %3130 = vmatprep.subr.mxu0 0.0
    %3131 = vmatpush1.msra.mxu0 0.0
    %3132 = vmatprep.subr.mxu0 0.0
    %3133 = vmatpush1.msra.mxu0 0.0
    %3134 = vmatprep.subr.mxu0 0.0
    %3135 = vmatpush1.msra.mxu0 0.0
    %3136 = vmatprep.subr.mxu0 0.0
    %3137 = vmatpush1.msra.mxu0 0.0
    %3138 = vmatprep.subr.mxu0 0.0
    %3139 = vmatpush1.msra.mxu0 0.0
    %3140 = vmatprep.subr.mxu0 0.0
    %3141 = vmatpush1.msra.mxu0 0.0
    %3142 = vmatprep.subr.mxu0 0.0
    %3143 = vmatpush1.msra.mxu0 0.0
    %3144 = vmatprep.subr.mxu0 0.0
    %3145 = vmatpush1.msra.mxu0 0.0
    %3146 = vmatprep.subr.mxu0 0.0
    %3147 = vmatpush1.msra.mxu0 0.0
    %3148 = vmatprep.subr.mxu0 0.0
    %3149 = vmatpush1.msra.mxu0 %v1512
    %3150 = vmatprep.subr.mxu0 0.0
    %3151 = vmatpush2.msra.mxu0 0.0
    %3152 = vmatprep.subr.mxu0 0.0
    %3153 = vmatpush2.msra.mxu0 0.0
    %3154 = vmatprep.subr.mxu0 0.0
    %3155 = vmatpush2.msra.mxu0 0.0
    %3156 = vmatprep.subr.mxu0 0.0
    %3157 = vmatpush2.msra.mxu0 0.0
    %3158 = vmatprep.subr.mxu0 0.0
    %3159 = vmatpush2.msra.mxu0 0.0
    %3160 = vmatprep.subr.mxu0 0.0
    %3161 = vmatpush2.msra.mxu0 0.0
    %3162 = vmatprep.subr.mxu0 0.0
    %3163 = vmatpush2.msra.mxu0 0.0
    %3164 = vmatprep.subr.mxu0 0.0
    %3165 = vmatpush2.msra.mxu0 0.0
    %3166 = vmatprep.subr.mxu0 0.0
    %3167 = vmatpush2.msra.mxu0 0.0
    %3168 = vmatprep.subr.mxu0 0.0
    %3169 = vmatpush2.msra.mxu0 0.0
    %3170 = vmatprep.subr.mxu0 0.0
    %3171 = vmatpush2.msra.mxu0 0.0
    %3172 = vmatprep.subr.mxu0 0.0
    %3173 = vmatpush2.msra.mxu0 0.0
    %3174 = vmatprep.subr.mxu0 0.0
    %3175 = vmatpush2.msra.mxu0 0.0
    %3176 = vmatprep.subr.mxu0 0.0
    %3177 = vmatpush2.msra.mxu0 0.0
    %3178 = vmatprep.subr.mxu0 0.0
    %3179 = vmatpush2.msra.mxu0 0.0
    %3180 = vmatprep.subr.mxu0 0.0
    %3181 = vmatpush2.msra.mxu0 0.0
    %3182 = vmatprep.mubr.f32.mxu0 0.0
    %3183 = vmatmul.mubr.f32.gmra.mxu0 %v3116
    %v3184 = vpop.f32.mrf.mxu0
    %v3185 = vadd.f32 0.0, %v3184
    %v3186 = vpop.f32.mrf.mxu0
    %3187 = vdwg.mxu0
    %v3189 = vrot.slane %v3185, 7
    %v3191 = vadd.f32 %v3114, %v3189
    %3193 = vset.pattern.permute.xlu0 5
    %3194 = vperm.xlu0 %3193, %v3027
    %v3195 = vpop.permute.xlu0 %3194
    %v3197 = vmul.f32 %v3195, %v167
    %v3199 = vrot.slane %v3197, 7
    %v3201 = vadd.f32 %v3191, %v3199
    %v3203 = vlaneseq
    %v3204 = vshrl.u32 %v3203, 7
    %v3205 = vsub.s32 0, %v3204
    %v3206 = vrot.slane %v168, %v3205
    %v3208 = vadd.f32 %v3201, %v3206
    %v3209 = vmax.f32 %v3208, 0.0
    %v3211 = vrot.slane %v3209, 1
    %v3212 = vsel %vm1594, %v3211, 0
    %3214 = vmatprep.subr.mxu0 0.0
    %3215 = vmatpush1.msra.mxu0 0.0
    %3216 = vmatprep.subr.mxu0 0.0
    %3217 = vmatpush1.msra.mxu0 0.0
    %3218 = vmatprep.subr.mxu0 0.0
    %3219 = vmatpush1.msra.mxu0 0.0
    %3220 = vmatprep.subr.mxu0 0.0
    %3221 = vmatpush1.msra.mxu0 %v1599
    %3222 = vmatprep.subr.mxu0 0.0
    %3223 = vmatpush1.msra.mxu0 %v180
    %3224 = vmatprep.subr.mxu0 0.0
    %3225 = vmatpush1.msra.mxu0 %v179
    %3226 = vmatprep.subr.mxu0 0.0
    %3227 = vmatpush1.msra.mxu0 %v178
    %3228 = vmatprep.subr.mxu0 0.0
    %3229 = vmatpush1.msra.mxu0 %v177
    %3230 = vmatprep.subr.mxu0 0.0
    %3231 = vmatpush1.msra.mxu0 %v176
    %3232 = vmatprep.subr.mxu0 0.0
    %3233 = vmatpush1.msra.mxu0 %v175
    %3234 = vmatprep.subr.mxu0 0.0
    %3235 = vmatpush1.msra.mxu0 %v174
    %3236 = vmatprep.subr.mxu0 0.0
    %3237 = vmatpush1.msra.mxu0 %v173
    %3238 = vmatprep.subr.mxu0 0.0
    %3239 = vmatpush1.msra.mxu0 %v172
    %3240 = vmatprep.subr.mxu0 0.0
    %3241 = vmatpush1.msra.mxu0 %v171
    %3242 = vmatprep.subr.mxu0 0.0
    %3243 = vmatpush1.msra.mxu0 %v170
    %3244 = vmatprep.subr.mxu0 0.0
    %3245 = vmatpush1.msra.mxu0 %v169
    %3246 = vmatprep.subr.mxu0 0.0
    %3247 = vmatpush2.msra.mxu0 0.0
    %3248 = vmatprep.subr.mxu0 0.0
    %3249 = vmatpush2.msra.mxu0 0.0
    %3250 = vmatprep.subr.mxu0 0.0
    %3251 = vmatpush2.msra.mxu0 0.0
    %3252 = vmatprep.subr.mxu0 0.0
    %3253 = vmatpush2.msra.mxu0 0.0
    %3254 = vmatprep.subr.mxu0 0.0
    %3255 = vmatpush2.msra.mxu0 0.0
    %3256 = vmatprep.subr.mxu0 0.0
    %3257 = vmatpush2.msra.mxu0 0.0
    %3258 = vmatprep.subr.mxu0 0.0
    %3259 = vmatpush2.msra.mxu0 0.0
    %3260 = vmatprep.subr.mxu0 0.0
    %3261 = vmatpush2.msra.mxu0 0.0
    %3262 = vmatprep.subr.mxu0 0.0
    %3263 = vmatpush2.msra.mxu0 0.0
    %3264 = vmatprep.subr.mxu0 0.0
    %3265 = vmatpush2.msra.mxu0 0.0
    %3266 = vmatprep.subr.mxu0 0.0
    %3267 = vmatpush2.msra.mxu0 0.0
    %3268 = vmatprep.subr.mxu0 0.0
    %3269 = vmatpush2.msra.mxu0 0.0
    %3270 = vmatprep.subr.mxu0 0.0
    %3271 = vmatpush2.msra.mxu0 0.0
    %3272 = vmatprep.subr.mxu0 0.0
    %3273 = vmatpush2.msra.mxu0 0.0
    %3274 = vmatprep.subr.mxu0 0.0
    %3275 = vmatpush2.msra.mxu0 0.0
    %3276 = vmatprep.subr.mxu0 0.0
    %3277 = vmatpush2.msra.mxu0 0.0
    %3278 = vmatprep.mubr.f32.mxu0 0.0
    %3279 = vmatmul.mubr.f32.gmra.mxu0 %v3212
    %v3280 = vpop.f32.mrf.mxu0
    %v3281 = vadd.f32 %v182, %v3280
    %v3282 = vpop.f32.mrf.mxu0
    %3283 = vdwg.mxu0
    %v3285 = vsel %vm291, %v3281, 0
    %3287 = vmatprep.subr.mxu0 0.0
    %3288 = vmatpush1.msra.mxu0 0.0
    %3289 = vmatprep.subr.mxu0 0.0
    %3290 = vmatpush1.msra.mxu0 0.0
    %3291 = vmatprep.subr.mxu0 0.0
    %3292 = vmatpush1.msra.mxu0 0.0
    %3293 = vmatprep.subr.mxu0 0.0
    %3294 = vmatpush1.msra.mxu0 0.0
    %3295 = vmatprep.subr.mxu0 0.0
    %3296 = vmatpush1.msra.mxu0 0.0
    %3297 = vmatprep.subr.mxu0 0.0
    %3298 = vmatpush1.msra.mxu0 0.0
    %3299 = vmatprep.subr.mxu0 0.0
    %3300 = vmatpush1.msra.mxu0 0.0
    %3301 = vmatprep.subr.mxu0 0.0
    %3302 = vmatpush1.msra.mxu0 0.0
    %3303 = vmatprep.subr.mxu0 0.0
    %3304 = vmatpush1.msra.mxu0 0.0
    %3305 = vmatprep.subr.mxu0 0.0
    %3306 = vmatpush1.msra.mxu0 0.0
    %3307 = vmatprep.subr.mxu0 0.0
    %3308 = vmatpush1.msra.mxu0 0.0
    %3309 = vmatprep.subr.mxu0 0.0
    %3310 = vmatpush1.msra.mxu0 0.0
    %3311 = vmatprep.subr.mxu0 0.0
    %3312 = vmatpush1.msra.mxu0 0.0
    %3313 = vmatprep.subr.mxu0 0.0
    %3314 = vmatpush1.msra.mxu0 0.0
    %3315 = vmatprep.subr.mxu0 %v299
    %3316 = vmatpush1.msra.mxu0 %v296
    %3317 = vmatprep.subr.mxu0 %v74
    %3318 = vmatpush1.msra.mxu0 %v73
    %3319 = vmatprep.subr.mxu0 0.0
    %3320 = vmatpush2.msra.mxu0 0.0
    %3321 = vmatprep.subr.mxu0 0.0
    %3322 = vmatpush2.msra.mxu0 0.0
    %3323 = vmatprep.subr.mxu0 0.0
    %3324 = vmatpush2.msra.mxu0 0.0
    %3325 = vmatprep.subr.mxu0 0.0
    %3326 = vmatpush2.msra.mxu0 0.0
    %3327 = vmatprep.subr.mxu0 0.0
    %3328 = vmatpush2.msra.mxu0 0.0
    %3329 = vmatprep.subr.mxu0 0.0
    %3330 = vmatpush2.msra.mxu0 0.0
    %3331 = vmatprep.subr.mxu0 0.0
    %3332 = vmatpush2.msra.mxu0 0.0
    %3333 = vmatprep.subr.mxu0 0.0
    %3334 = vmatpush2.msra.mxu0 0.0
    %3335 = vmatprep.subr.mxu0 0.0
    %3336 = vmatpush2.msra.mxu0 0.0
    %3337 = vmatprep.subr.mxu0 0.0
    %3338 = vmatpush2.msra.mxu0 0.0
    %3339 = vmatprep.subr.mxu0 0.0
    %3340 = vmatpush2.msra.mxu0 0.0
    %3341 = vmatprep.subr.mxu0 0.0
    %3342 = vmatpush2.msra.mxu0 0.0
    %3343 = vmatprep.subr.mxu0 0.0
    %3344 = vmatpush2.msra.mxu0 0.0
    %3345 = vmatprep.subr.mxu0 0.0
    %3346 = vmatpush2.msra.mxu0 0.0
    %3347 = vmatprep.subr.mxu0 0.0
    %3348 = vmatpush2.msra.mxu0 0.0
    %3349 = vmatprep.subr.mxu0 0.0
    %3350 = vmatpush2.msra.mxu0 0.0
    %3351 = vmatprep.mubr.f32.mxu0 0.0
    %3352 = vmatmul.mubr.f32.gmra.mxu0 %v3285
    %v3353 = vpop.f32.mrf.mxu0
    %v3354 = vadd.f32 %v274, %v3353
    %v3355 = vpop.f32.mrf.mxu0
    %v3356 = vadd.f32 %v278, %v3355
    %3357 = vdwg.mxu0
    %3358 = vmatprep.subr.mxu0 0.0
    %3359 = vmatpush1.msra.mxu0 0.0
    %3360 = vmatprep.subr.mxu0 0.0
    %3361 = vmatpush1.msra.mxu0 0.0
    %3362 = vmatprep.subr.mxu0 0.0
    %3363 = vmatpush1.msra.mxu0 0.0
    %3364 = vmatprep.subr.mxu0 0.0
    %3365 = vmatpush1.msra.mxu0 0.0
    %3366 = vmatprep.subr.mxu0 0.0
    %3367 = vmatpush1.msra.mxu0 0.0
    %3368 = vmatprep.subr.mxu0 0.0
    %3369 = vmatpush1.msra.mxu0 0.0
    %3370 = vmatprep.subr.mxu0 0.0
    %3371 = vmatpush1.msra.mxu0 0.0
    %3372 = vmatprep.subr.mxu0 0.0
    %3373 = vmatpush1.msra.mxu0 0.0
    %3374 = vmatprep.subr.mxu0 0.0
    %3375 = vmatpush1.msra.mxu0 0.0
    %3376 = vmatprep.subr.mxu0 0.0
    %3377 = vmatpush1.msra.mxu0 0.0
    %3378 = vmatprep.subr.mxu0 0.0
    %3379 = vmatpush1.msra.mxu0 0.0
    %3380 = vmatprep.subr.mxu0 0.0
    %3381 = vmatpush1.msra.mxu0 0.0
    %3382 = vmatprep.subr.mxu0 0.0
    %3383 = vmatpush1.msra.mxu0 0.0
    %3384 = vmatprep.subr.mxu0 0.0
    %3385 = vmatpush1.msra.mxu0 0.0
    %3386 = vmatprep.subr.mxu0 %v305
    %3387 = vmatpush1.msra.mxu0 %v302
    %3388 = vmatprep.subr.mxu0 %v76
    %3389 = vmatpush1.msra.mxu0 %v75
    %3390 = vmatprep.subr.mxu0 0.0
    %3391 = vmatpush2.msra.mxu0 0.0
    %3392 = vmatprep.subr.mxu0 0.0
    %3393 = vmatpush2.msra.mxu0 0.0
    %3394 = vmatprep.subr.mxu0 0.0
    %3395 = vmatpush2.msra.mxu0 0.0
    %3396 = vmatprep.subr.mxu0 0.0
    %3397 = vmatpush2.msra.mxu0 0.0
    %3398 = vmatprep.subr.mxu0 0.0
    %3399 = vmatpush2.msra.mxu0 0.0
    %3400 = vmatprep.subr.mxu0 0.0
    %3401 = vmatpush2.msra.mxu0 0.0
    %3402 = vmatprep.subr.mxu0 0.0
    %3403 = vmatpush2.msra.mxu0 0.0
    %3404 = vmatprep.subr.mxu0 0.0
    %3405 = vmatpush2.msra.mxu0 0.0
    %3406 = vmatprep.subr.mxu0 0.0
    %3407 = vmatpush2.msra.mxu0 0.0
    %3408 = vmatprep.subr.mxu0 0.0
    %3409 = vmatpush2.msra.mxu0 0.0
    %3410 = vmatprep.subr.mxu0 0.0
    %3411 = vmatpush2.msra.mxu0 0.0
    %3412 = vmatprep.subr.mxu0 0.0
    %3413 = vmatpush2.msra.mxu0 0.0
    %3414 = vmatprep.subr.mxu0 0.0
    %3415 = vmatpush2.msra.mxu0 0.0
    %3416 = vmatprep.subr.mxu0 0.0
    %3417 = vmatpush2.msra.mxu0 0.0
    %3418 = vmatprep.subr.mxu0 0.0
    %3419 = vmatpush2.msra.mxu0 0.0
    %3420 = vmatprep.subr.mxu0 0.0
    %3421 = vmatpush2.msra.mxu0 0.0
    %3422 = vmatprep.mubr.f32.mxu0 0.0
    %3423 = vmatmul.mubr.f32.gmra.mxu0 %v3285
    %v3424 = vpop.f32.mrf.mxu0
    %v3425 = vadd.f32 %v282, %v3424
    %v3426 = vpop.f32.mrf.mxu0
    %v3427 = vadd.f32 %v286, %v3426
    %3428 = vdwg.mxu0
    %v3429 = vmax.f32 %v3354, 0.0
    %v3430 = vmax.f32 %v3356, 0.0
    %v3431 = vmax.f32 %v3425, 0.0
    %v3432 = vmax.f32 %v3427, 0.0
    %v3434 = vsel %vm459, %v3432, 0
    %3436 = vmatprep.subr.mxu0 0.0
    %3437 = vmatpush1.msra.mxu0 %v97
    %3438 = vmatprep.subr.mxu0 0.0
    %3439 = vmatpush1.msra.mxu0 %v96
    %3440 = vmatprep.subr.mxu0 0.0
    %3441 = vmatpush1.msra.mxu0 %v95
    %3442 = vmatprep.subr.mxu0 0.0
    %3443 = vmatpush1.msra.mxu0 %v94
    %3444 = vmatprep.subr.mxu0 0.0
    %3445 = vmatpush1.msra.mxu0 %v93
    %3446 = vmatprep.subr.mxu0 0.0
    %3447 = vmatpush1.msra.mxu0 %v92
    %3448 = vmatprep.subr.mxu0 0.0
    %3449 = vmatpush1.msra.mxu0 %v91
    %3450 = vmatprep.subr.mxu0 0.0
    %3451 = vmatpush1.msra.mxu0 %v90
    %3452 = vmatprep.subr.mxu0 0.0
    %3453 = vmatpush1.msra.mxu0 %v89
    %3454 = vmatprep.subr.mxu0 0.0
    %3455 = vmatpush1.msra.mxu0 %v88
    %3456 = vmatprep.subr.mxu0 0.0
    %3457 = vmatpush1.msra.mxu0 %v87
    %3458 = vmatprep.subr.mxu0 0.0
    %3459 = vmatpush1.msra.mxu0 %v86
    %3460 = vmatprep.subr.mxu0 0.0
    %3461 = vmatpush1.msra.mxu0 %v85
    %3462 = vmatprep.subr.mxu0 0.0
    %3463 = vmatpush1.msra.mxu0 %v84
    %3464 = vmatprep.subr.mxu0 0.0
    %3465 = vmatpush1.msra.mxu0 %v83
    %3466 = vmatprep.subr.mxu0 0.0
    %3467 = vmatpush1.msra.mxu0 %v82
    %3468 = vmatprep.subr.mxu0 0.0
    %3469 = vmatpush2.msra.mxu0 %v113
    %3470 = vmatprep.subr.mxu0 0.0
    %3471 = vmatpush2.msra.mxu0 %v112
    %3472 = vmatprep.subr.mxu0 0.0
    %3473 = vmatpush2.msra.mxu0 %v111
    %3474 = vmatprep.subr.mxu0 0.0
    %3475 = vmatpush2.msra.mxu0 %v110
    %3476 = vmatprep.subr.mxu0 0.0
    %3477 = vmatpush2.msra.mxu0 %v109
    %3478 = vmatprep.subr.mxu0 0.0
    %3479 = vmatpush2.msra.mxu0 %v108
    %3480 = vmatprep.subr.mxu0 0.0
    %3481 = vmatpush2.msra.mxu0 %v107
    %3482 = vmatprep.subr.mxu0 0.0
    %3483 = vmatpush2.msra.mxu0 %v106
    %3484 = vmatprep.subr.mxu0 0.0
    %3485 = vmatpush2.msra.mxu0 %v105
    %3486 = vmatprep.subr.mxu0 0.0
    %3487 = vmatpush2.msra.mxu0 %v104
    %3488 = vmatprep.subr.mxu0 0.0
    %3489 = vmatpush2.msra.mxu0 %v103
    %3490 = vmatprep.subr.mxu0 0.0
    %3491 = vmatpush2.msra.mxu0 %v102
    %3492 = vmatprep.subr.mxu0 0.0
    %3493 = vmatpush2.msra.mxu0 %v101
    %3494 = vmatprep.subr.mxu0 0.0
    %3495 = vmatpush2.msra.mxu0 %v100
    %3496 = vmatprep.subr.mxu0 0.0
    %3497 = vmatpush2.msra.mxu0 %v99
    %3498 = vmatprep.subr.mxu0 0.0
    %3499 = vmatpush2.msra.mxu0 %v98
    %3500 = vmatprep.mubr.f32.mxu0 %v3430
    %3501 = vmatmul.mubr.f32.gmra.mxu0 %v3429
    %v3502 = vpop.f32.mrf.mxu0
    %v3503 = vadd.f32 %v132, %v3502
    %v3504 = vpop.f32.mrf.mxu0
    %3505 = vdwg.mxu0
    %3506 = vmatprep.subr.mxu0 0.0
    %3507 = vmatpush1.msra.mxu0 %v129
    %3508 = vmatprep.subr.mxu0 0.0
    %3509 = vmatpush1.msra.mxu0 %v128
    %3510 = vmatprep.subr.mxu0 0.0
    %3511 = vmatpush1.msra.mxu0 %v127
    %3512 = vmatprep.subr.mxu0 0.0
    %3513 = vmatpush1.msra.mxu0 %v126
    %3514 = vmatprep.subr.mxu0 0.0
    %3515 = vmatpush1.msra.mxu0 %v125
    %3516 = vmatprep.subr.mxu0 0.0
    %3517 = vmatpush1.msra.mxu0 %v124
    %3518 = vmatprep.subr.mxu0 0.0
    %3519 = vmatpush1.msra.mxu0 %v123
    %3520 = vmatprep.subr.mxu0 0.0
    %3521 = vmatpush1.msra.mxu0 %v122
    %3522 = vmatprep.subr.mxu0 0.0
    %3523 = vmatpush1.msra.mxu0 %v121
    %3524 = vmatprep.subr.mxu0 0.0
    %3525 = vmatpush1.msra.mxu0 %v120
    %3526 = vmatprep.subr.mxu0 0.0
    %3527 = vmatpush1.msra.mxu0 %v119
    %3528 = vmatprep.subr.mxu0 0.0
    %3529 = vmatpush1.msra.mxu0 %v118
    %3530 = vmatprep.subr.mxu0 0.0
    %3531 = vmatpush1.msra.mxu0 %v117
    %3532 = vmatprep.subr.mxu0 0.0
    %3533 = vmatpush1.msra.mxu0 %v116
    %3534 = vmatprep.subr.mxu0 0.0
    %3535 = vmatpush1.msra.mxu0 %v115
    %3536 = vmatprep.subr.mxu0 0.0
    %3537 = vmatpush1.msra.mxu0 %v114
    %3538 = vmatprep.subr.mxu0 0.0
    %3539 = vmatpush2.msra.mxu0 0.0
    %3540 = vmatprep.subr.mxu0 0.0
    %3541 = vmatpush2.msra.mxu0 0.0
    %3542 = vmatprep.subr.mxu0 0.0
    %3543 = vmatpush2.msra.mxu0 0.0
    %3544 = vmatprep.subr.mxu0 0.0
    %3545 = vmatpush2.msra.mxu0 0.0
    %3546 = vmatprep.subr.mxu0 0.0
    %3547 = vmatpush2.msra.mxu0 0.0
    %3548 = vmatprep.subr.mxu0 0.0
    %3549 = vmatpush2.msra.mxu0 0.0
    %3550 = vmatprep.subr.mxu0 0.0
    %3551 = vmatpush2.msra.mxu0 0.0
    %3552 = vmatprep.subr.mxu0 0.0
    %3553 = vmatpush2.msra.mxu0 0.0
    %3554 = vmatprep.subr.mxu0 0.0
    %3555 = vmatpush2.msra.mxu0 0.0
    %3556 = vmatprep.subr.mxu0 0.0
    %3557 = vmatpush2.msra.mxu0 0.0
    %3558 = vmatprep.subr.mxu0 0.0
    %3559 = vmatpush2.msra.mxu0 0.0
    %3560 = vmatprep.subr.mxu0 0.0
    %3561 = vmatpush2.msra.mxu0 0.0
    %3562 = vmatprep.subr.mxu0 0.0
    %3563 = vmatpush2.msra.mxu0 0.0
    %3564 = vmatprep.subr.mxu0 0.0
    %3565 = vmatpush2.msra.mxu0 0.0
    %3566 = vmatprep.subr.mxu0 0.0
    %3567 = vmatpush2.msra.mxu0 %v131
    %3568 = vmatprep.subr.mxu0 0.0
    %3569 = vmatpush2.msra.mxu0 %v130
    %3570 = vmatprep.mubr.f32.mxu0 %v3434
    %3571 = vmatmul.mubr.f32.gmra.mxu0 %v3431
    %v3572 = vpop.f32.mrf.mxu0
    %v3573 = vadd.f32 %v3503, %v3572
    %v3574 = vpop.f32.mrf.mxu0
    %3575 = vdwg.mxu0
    %v3576 = vsel %vm459, %v2694, -inf
    %v3577 = vsel %vm459, %v2699, -inf
    %v3578 = vmax.f32 %v3576, %v3577
    %v3579 = vrot.slane %v3578, 4
    %v3580 = vmax.f32 %v3578, %v3579
    %v3581 = vrot.slane %v3580, 2
    %v3582 = vmax.f32 %v3580, %v3581
    %v3583 = vrot.slane %v3582, 1
    %v3584 = vmax.f32 %v3582, %v3583
    %v3585 = vmax.f32 %v3584, %v600
    %v3587 = vrot.slane %v3573, 7
    %v3589 = vmax.f32 %v3585, %v3587
    %v3590 = vsub.f32 %v600, %v3589
    %v3591 = vmul.f32 %v3590, 1.442695
    %v3592 = vpow.pop %v3591
    %v3594 = vrot.slane %v3589, 1
    %v3596 = vsub.f32 %v3573, %v3594
    %v3597 = vmul.f32 %v3596, 1.442695
    %v3598 = vpow.pop %v3597
    %v3599 = vlaneseq
    %v3600 = vshrl.u32 %v3599, 7
    %v3601 = vsub.s32 1, %v3600
    %v3602 = vrot.slane %v3589, %v3601
    %v3603 = vsub.f32 %v2694, %v3602
    %v3604 = vsub.f32 %v2699, %v3602
    %v3605 = vmul.f32 %v3603, 1.442695
    %v3606 = vpow.pop %v3605
    %v3607 = vmul.f32 %v3604, 1.442695
    %v3608 = vpow.pop %v3607
    %v3609 = vsel %vm459, %v3606, 0.0
    %v3610 = vsel %vm459, %v3608, 0.0
    %v3611 = vadd.f32 %v3609, %v3610
    %v3612 = vrot.slane %v3611, 4
    %v3613 = vadd.f32 %v3611, %v3612
    %v3614 = vrot.slane %v3613, 2
    %v3615 = vadd.f32 %v3613, %v3614
    %v3616 = vrot.slane %v3615, 1
    %v3617 = vadd.f32 %v3615, %v3616
    %v3618 = vadd.f32 %v3617, %v3592
    %v3620 = vrot.slane %v3598, 7
    %v3622 = vadd.f32 %v3618, %v3620
    %v3623 = vrcp.pop %v3622
    %v3624 = vmul.f32 %v3592, %v3623
    %v3626 = vrot.slane %v3623, 1
    %v3628 = vmul.f32 %v3598, %v3626
    %3629 = vxpose.xlu0.b32.start [1/16] %v3628, 128
    %3630 = vxpose.xlu0.b32.cont [2/16] 0.0, 128
    %3631 = vxpose.xlu0.b32.cont [3/16] 0.0, 128
    %3632 = vxpose.xlu0.b32.cont [4/16] 0.0, 128
    %3633 = vxpose.xlu0.b32.cont [5/16] 0.0, 128
    %3634 = vxpose.xlu0.b32.cont [6/16] 0.0, 128
    %3635 = vxpose.xlu0.b32.cont [7/16] 0.0, 128
    %3636 = vxpose.xlu0.b32.cont [8/16] 0.0, 128
    %3637 = vxpose.xlu0.b32.cont [9/16] 0.0, 128
    %3638 = vxpose.xlu0.b32.cont [10/16] 0.0, 128
    %3639 = vxpose.xlu0.b32.cont [11/16] 0.0, 128
    %3640 = vxpose.xlu0.b32.cont [12/16] 0.0, 128
    %3641 = vxpose.xlu0.b32.cont [13/16] 0.0, 128
    %3642 = vxpose.xlu0.b32.cont [14/16] 0.0, 128
    %3643 = vxpose.xlu0.b32.cont [15/16] 0.0, 128
    %3644 = vxpose.xlu0.b32.end [16/16] 0.0, 128
    %v3645 = vpop.trf.xlu0
    %v3646 = vpop.trf.xlu0
    %v3647 = vpop.trf.xlu0
    %v3648 = vpop.trf.xlu0
    %v3649 = vpop.trf.xlu0
    %v3650 = vpop.trf.xlu0
    %v3651 = vpop.trf.xlu0
    %v3652 = vpop.trf.xlu0
    %v3653 = vpop.trf.xlu0
    %v3654 = vpop.trf.xlu0
    %v3655 = vpop.trf.xlu0
    %v3656 = vpop.trf.xlu0
    %v3657 = vpop.trf.xlu0
    %v3658 = vpop.trf.xlu0
    %v3659 = vpop.trf.xlu0
    %v3660 = vpop.trf.xlu0
    %v3662 = vsel %vm2036, %v3645, 0
    %v3665 = vsel %vm2036, %v3646, 0
    %v3667 = vsel %vm2043, %v3281, 0
    %3669 = vmatprep.subr.mxu0 0.0
    %3670 = vmatpush1.msra.mxu0 0.0
    %3671 = vmatprep.subr.mxu0 0.0
    %3672 = vmatpush1.msra.mxu0 0.0
    %3673 = vmatprep.subr.mxu0 0.0
    %3674 = vmatpush1.msra.mxu0 0.0
    %3675 = vmatprep.subr.mxu0 0.0
    %3676 = vmatpush1.msra.mxu0 0.0
    %3677 = vmatprep.subr.mxu0 0.0
    %3678 = vmatpush1.msra.mxu0 0.0
    %3679 = vmatprep.subr.mxu0 0.0
    %3680 = vmatpush1.msra.mxu0 0.0
    %3681 = vmatprep.subr.mxu0 0.0
    %3682 = vmatpush1.msra.mxu0 0.0
    %3683 = vmatprep.subr.mxu0 0.0
    %3684 = vmatpush1.msra.mxu0 0.0
    %3685 = vmatprep.subr.mxu0 0.0
    %3686 = vmatpush1.msra.mxu0 0.0
    %3687 = vmatprep.subr.mxu0 0.0
    %3688 = vmatpush1.msra.mxu0 0.0
    %3689 = vmatprep.subr.mxu0 0.0
    %3690 = vmatpush1.msra.mxu0 0.0
    %3691 = vmatprep.subr.mxu0 0.0
    %3692 = vmatpush1.msra.mxu0 0.0
    %3693 = vmatprep.subr.mxu0 0.0
    %3694 = vmatpush1.msra.mxu0 0.0
    %3695 = vmatprep.subr.mxu0 0.0
    %3696 = vmatpush1.msra.mxu0 0.0
    %3697 = vmatprep.subr.mxu0 0.0
    %3698 = vmatpush1.msra.mxu0 0.0
    %3699 = vmatprep.subr.mxu0 0.0
    %3700 = vmatpush1.msra.mxu0 %v3667
    %3701 = vmatprep.subr.mxu0 0.0
    %3702 = vmatpush2.msra.mxu0 0.0
    %3703 = vmatprep.subr.mxu0 0.0
    %3704 = vmatpush2.msra.mxu0 0.0
    %3705 = vmatprep.subr.mxu0 0.0
    %3706 = vmatpush2.msra.mxu0 0.0
    %3707 = vmatprep.subr.mxu0 0.0
    %3708 = vmatpush2.msra.mxu0 0.0
    %3709 = vmatprep.subr.mxu0 0.0
    %3710 = vmatpush2.msra.mxu0 0.0
    %3711 = vmatprep.subr.mxu0 0.0
    %3712 = vmatpush2.msra.mxu0 0.0
    %3713 = vmatprep.subr.mxu0 0.0
    %3714 = vmatpush2.msra.mxu0 0.0
    %3715 = vmatprep.subr.mxu0 0.0
    %3716 = vmatpush2.msra.mxu0 0.0
    %3717 = vmatprep.subr.mxu0 0.0
    %3718 = vmatpush2.msra.mxu0 0.0
    %3719 = vmatprep.subr.mxu0 0.0
    %3720 = vmatpush2.msra.mxu0 0.0
    %3721 = vmatprep.subr.mxu0 0.0
    %3722 = vmatpush2.msra.mxu0 0.0
    %3723 = vmatprep.subr.mxu0 0.0
    %3724 = vmatpush2.msra.mxu0 0.0
    %3725 = vmatprep.subr.mxu0 0.0
    %3726 = vmatpush2.msra.mxu0 0.0
    %3727 = vmatprep.subr.mxu0 0.0
    %3728 = vmatpush2.msra.mxu0 0.0
    %3729 = vmatprep.subr.mxu0 0.0
    %3730 = vmatpush2.msra.mxu0 0.0
    %3731 = vmatprep.subr.mxu0 0.0
    %3732 = vmatpush2.msra.mxu0 0.0
    %3733 = vmatprep.mubr.f32.mxu0 0.0
    %3734 = vmatmul.mubr.f32.gmra.mxu0 %v3662
    %v3735 = vpop.f32.mrf.mxu0
    %v3736 = vadd.f32 0.0, %v3735
    %v3737 = vpop.f32.mrf.mxu0
    %3738 = vmatprep.mubr.f32.mxu0 0.0
    %3739 = vmatmul.mubr.f32.gmra.mxu0 %v3665
    %v3740 = vpop.f32.mrf.mxu0
    %v3741 = vadd.f32 0.0, %v3740
    %v3742 = vpop.f32.mrf.mxu0
    %3743 = vdwg.mxu0
    %v3745 = vrot.slane %v3624, 1
    %3747 = vxpose.xlu0.b32.start [1/16] %v3745, 128
    %3748 = vxpose.xlu0.b32.cont [2/16] 0.0, 128
    %3749 = vxpose.xlu0.b32.cont [3/16] 0.0, 128
    %3750 = vxpose.xlu0.b32.cont [4/16] 0.0, 128
    %3751 = vxpose.xlu0.b32.cont [5/16] 0.0, 128
    %3752 = vxpose.xlu0.b32.cont [6/16] 0.0, 128
    %3753 = vxpose.xlu0.b32.cont [7/16] 0.0, 128
    %3754 = vxpose.xlu0.b32.cont [8/16] 0.0, 128
    %3755 = vxpose.xlu0.b32.cont [9/16] 0.0, 128
    %3756 = vxpose.xlu0.b32.cont [10/16] 0.0, 128
    %3757 = vxpose.xlu0.b32.cont [11/16] 0.0, 128
    %3758 = vxpose.xlu0.b32.cont [12/16] 0.0, 128
    %3759 = vxpose.xlu0.b32.cont [13/16] 0.0, 128
    %3760 = vxpose.xlu0.b32.cont [14/16] 0.0, 128
    %3761 = vxpose.xlu0.b32.cont [15/16] 0.0, 128
    %3762 = vxpose.xlu0.b32.end [16/16] 0.0, 128
    %v3763 = vpop.trf.xlu0
    %v3764 = vpop.trf.xlu0
    %v3765 = vpop.trf.xlu0
    %v3766 = vpop.trf.xlu0
    %v3767 = vpop.trf.xlu0
    %v3768 = vpop.trf.xlu0
    %v3769 = vpop.trf.xlu0
    %v3770 = vpop.trf.xlu0
    %v3771 = vpop.trf.xlu0
    %v3772 = vpop.trf.xlu0
    %v3773 = vpop.trf.xlu0
    %v3774 = vpop.trf.xlu0
    %v3775 = vpop.trf.xlu0
    %v3776 = vpop.trf.xlu0
    %v3777 = vpop.trf.xlu0
    %v3778 = vpop.trf.xlu0
    %v3779 = vrot.slane %v267, 1
    %v3781 = vsel %vm2036, %v3763, 0
    %v3784 = vsel %vm2036, %v3764, 0
    %v3786 = vsel %vm2043, %v3779, 0
    %3788 = vmatprep.subr.mxu0 0.0
    %3789 = vmatpush1.msra.mxu0 0.0
    %3790 = vmatprep.subr.mxu0 0.0
    %3791 = vmatpush1.msra.mxu0 0.0
    %3792 = vmatprep.subr.mxu0 0.0
    %3793 = vmatpush1.msra.mxu0 0.0
    %3794 = vmatprep.subr.mxu0 0.0
    %3795 = vmatpush1.msra.mxu0 0.0
    %3796 = vmatprep.subr.mxu0 0.0
    %3797 = vmatpush1.msra.mxu0 0.0
    %3798 = vmatprep.subr.mxu0 0.0
    %3799 = vmatpush1.msra.mxu0 0.0
    %3800 = vmatprep.subr.mxu0 0.0
    %3801 = vmatpush1.msra.mxu0 0.0
    %3802 = vmatprep.subr.mxu0 0.0
    %3803 = vmatpush1.msra.mxu0 0.0
    %3804 = vmatprep.subr.mxu0 0.0
    %3805 = vmatpush1.msra.mxu0 0.0
    %3806 = vmatprep.subr.mxu0 0.0
    %3807 = vmatpush1.msra.mxu0 0.0
    %3808 = vmatprep.subr.mxu0 0.0
    %3809 = vmatpush1.msra.mxu0 0.0
    %3810 = vmatprep.subr.mxu0 0.0
    %3811 = vmatpush1.msra.mxu0 0.0
    %3812 = vmatprep.subr.mxu0 0.0
    %3813 = vmatpush1.msra.mxu0 0.0
    %3814 = vmatprep.subr.mxu0 0.0
    %3815 = vmatpush1.msra.mxu0 0.0
    %3816 = vmatprep.subr.mxu0 0.0
    %3817 = vmatpush1.msra.mxu0 0.0
    %3818 = vmatprep.subr.mxu0 0.0
    %3819 = vmatpush1.msra.mxu0 %v3786
    %3820 = vmatprep.subr.mxu0 0.0
    %3821 = vmatpush2.msra.mxu0 0.0
    %3822 = vmatprep.subr.mxu0 0.0
    %3823 = vmatpush2.msra.mxu0 0.0
    %3824 = vmatprep.subr.mxu0 0.0
    %3825 = vmatpush2.msra.mxu0 0.0
    %3826 = vmatprep.subr.mxu0 0.0
    %3827 = vmatpush2.msra.mxu0 0.0
    %3828 = vmatprep.subr.mxu0 0.0
    %3829 = vmatpush2.msra.mxu0 0.0
    %3830 = vmatprep.subr.mxu0 0.0
    %3831 = vmatpush2.msra.mxu0 0.0
    %3832 = vmatprep.subr.mxu0 0.0
    %3833 = vmatpush2.msra.mxu0 0.0
    %3834 = vmatprep.subr.mxu0 0.0
    %3835 = vmatpush2.msra.mxu0 0.0
    %3836 = vmatprep.subr.mxu0 0.0
    %3837 = vmatpush2.msra.mxu0 0.0
    %3838 = vmatprep.subr.mxu0 0.0
    %3839 = vmatpush2.msra.mxu0 0.0
    %3840 = vmatprep.subr.mxu0 0.0
    %3841 = vmatpush2.msra.mxu0 0.0
    %3842 = vmatprep.subr.mxu0 0.0
    %3843 = vmatpush2.msra.mxu0 0.0
    %3844 = vmatprep.subr.mxu0 0.0
    %3845 = vmatpush2.msra.mxu0 0.0
    %3846 = vmatprep.subr.mxu0 0.0
    %3847 = vmatpush2.msra.mxu0 0.0
    %3848 = vmatprep.subr.mxu0 0.0
    %3849 = vmatpush2.msra.mxu0 0.0
    %3850 = vmatprep.subr.mxu0 0.0
    %3851 = vmatpush2.msra.mxu0 0.0
    %3852 = vmatprep.mubr.f32.mxu0 0.0
    %3853 = vmatmul.mubr.f32.gmra.mxu0 %v3781
    %v3854 = vpop.f32.mrf.mxu0
    %v3855 = vadd.f32 %v3736, %v3854
    %v3856 = vpop.f32.mrf.mxu0
    %3857 = vmatprep.mubr.f32.mxu0 0.0
    %3858 = vmatmul.mubr.f32.gmra.mxu0 %v3784
    %v3859 = vpop.f32.mrf.mxu0
    %v3860 = vadd.f32 %v3741, %v3859
    %v3861 = vpop.f32.mrf.mxu0
    %3862 = vdwg.mxu0
    %v3863 = vlaneseq
    %v3864 = vshrl.u32 %v3863, 7
    %v3865 = vsub.s32 1, %v3864
    %v3866 = vrot.slane %v3623, %v3865
    %v3867 = vmul.f32 %v3606, %v3866
    %v3868 = vmul.f32 %v3608, %v3866
    %3869 = vxpose.xlu0.b32.start [1/16] %v3867, 128
    %3870 = vxpose.xlu0.b32.cont [2/16] %v3868, 128
    %3871 = vxpose.xlu0.b32.cont [3/16] 0.0, 128
    %3872 = vxpose.xlu0.b32.cont [4/16] 0.0, 128
    %3873 = vxpose.xlu0.b32.cont [5/16] 0.0, 128
    %3874 = vxpose.xlu0.b32.cont [6/16] 0.0, 128
    %3875 = vxpose.xlu0.b32.cont [7/16] 0.0, 128
    %3876 = vxpose.xlu0.b32.cont [8/16] 0.0, 128
    %3877 = vxpose.xlu0.b32.cont [9/16] 0.0, 128
    %3878 = vxpose.xlu0.b32.cont [10/16] 0.0, 128
    %3879 = vxpose.xlu0.b32.cont [11/16] 0.0, 128
    %3880 = vxpose.xlu0.b32.cont [12/16] 0.0, 128
    %3881 = vxpose.xlu0.b32.cont [13/16] 0.0, 128
    %3882 = vxpose.xlu0.b32.cont [14/16] 0.0, 128
    %3883 = vxpose.xlu0.b32.cont [15/16] 0.0, 128
    %3884 = vxpose.xlu0.b32.end [16/16] 0.0, 128
    %v3885 = vpop.trf.xlu0
    %v3886 = vpop.trf.xlu0
    %v3887 = vpop.trf.xlu0
    %v3888 = vpop.trf.xlu0
    %v3889 = vpop.trf.xlu0
    %v3890 = vpop.trf.xlu0
    %v3891 = vpop.trf.xlu0
    %v3892 = vpop.trf.xlu0
    %v3893 = vpop.trf.xlu0
    %v3894 = vpop.trf.xlu0
    %v3895 = vpop.trf.xlu0
    %v3896 = vpop.trf.xlu0
    %v3897 = vpop.trf.xlu0
    %v3898 = vpop.trf.xlu0
    %v3899 = vpop.trf.xlu0
    %v3900 = vpop.trf.xlu0
    %v3902 = vsel %vm459, %v3885, 0
    %v3905 = vsel %vm459, %v3886, 0
    %3907 = vmatprep.subr.mxu0 0.0
    %3908 = vmatpush1.msra.mxu0 0.0
    %3909 = vmatprep.subr.mxu0 0.0
    %3910 = vmatpush1.msra.mxu0 0.0
    %3911 = vmatprep.subr.mxu0 0.0
    %3912 = vmatpush1.msra.mxu0 0.0
    %3913 = vmatprep.subr.mxu0 0.0
    %3914 = vmatpush1.msra.mxu0 0.0
    %3915 = vmatprep.subr.mxu0 0.0
    %3916 = vmatpush1.msra.mxu0 0.0
    %3917 = vmatprep.subr.mxu0 0.0
    %3918 = vmatpush1.msra.mxu0 0.0
    %3919 = vmatprep.subr.mxu0 0.0
    %3920 = vmatpush1.msra.mxu0 0.0
    %3921 = vmatprep.subr.mxu0 0.0
    %3922 = vmatpush1.msra.mxu0 0.0
    %3923 = vmatprep.subr.mxu0 0.0
    %3924 = vmatpush1.msra.mxu0 0.0
    %3925 = vmatprep.subr.mxu0 0.0
    %3926 = vmatpush1.msra.mxu0 0.0
    %3927 = vmatprep.subr.mxu0 0.0
    %3928 = vmatpush1.msra.mxu0 0.0
    %3929 = vmatprep.subr.mxu0 0.0
    %3930 = vmatpush1.msra.mxu0 0.0
    %3931 = vmatprep.subr.mxu0 0.0
    %3932 = vmatpush1.msra.mxu0 0.0
    %3933 = vmatprep.subr.mxu0 0.0
    %3934 = vmatpush1.msra.mxu0 0.0
    %3935 = vmatprep.subr.mxu0 0.0
    %3936 = vmatpush1.msra.mxu0 %v2377
    %3937 = vmatprep.subr.mxu0 0.0
    %3938 = vmatpush1.msra.mxu0 %v2376
    %3939 = vmatprep.subr.mxu0 0.0
    %3940 = vmatpush2.msra.mxu0 0.0
    %3941 = vmatprep.subr.mxu0 0.0
    %3942 = vmatpush2.msra.mxu0 0.0
    %3943 = vmatprep.subr.mxu0 0.0
    %3944 = vmatpush2.msra.mxu0 0.0
    %3945 = vmatprep.subr.mxu0 0.0
    %3946 = vmatpush2.msra.mxu0 0.0
    %3947 = vmatprep.subr.mxu0 0.0
    %3948 = vmatpush2.msra.mxu0 0.0
    %3949 = vmatprep.subr.mxu0 0.0
    %3950 = vmatpush2.msra.mxu0 0.0
    %3951 = vmatprep.subr.mxu0 0.0
    %3952 = vmatpush2.msra.mxu0 0.0
    %3953 = vmatprep.subr.mxu0 0.0
    %3954 = vmatpush2.msra.mxu0 0.0
    %3955 = vmatprep.subr.mxu0 0.0
    %3956 = vmatpush2.msra.mxu0 0.0
    %3957 = vmatprep.subr.mxu0 0.0
    %3958 = vmatpush2.msra.mxu0 0.0
    %3959 = vmatprep.subr.mxu0 0.0
    %3960 = vmatpush2.msra.mxu0 0.0
    %3961 = vmatprep.subr.mxu0 0.0
    %3962 = vmatpush2.msra.mxu0 0.0
    %3963 = vmatprep.subr.mxu0 0.0
    %3964 = vmatpush2.msra.mxu0 0.0
    %3965 = vmatprep.subr.mxu0 0.0
    %3966 = vmatpush2.msra.mxu0 0.0
    %3967 = vmatprep.subr.mxu0 0.0
    %3968 = vmatpush2.msra.mxu0 0.0
    %3969 = vmatprep.subr.mxu0 0.0
    %3970 = vmatpush2.msra.mxu0 0.0
    %3971 = vmatprep.mubr.f32.mxu0 0.0
    %3972 = vmatmul.mubr.f32.gmra.mxu0 %v3902
    %v3973 = vpop.f32.mrf.mxu0
    %v3974 = vadd.f32 0.0, %v3973
    %v3975 = vpop.f32.mrf.mxu0
    %3976 = vmatprep.mubr.f32.mxu0 0.0
    %3977 = vmatmul.mubr.f32.gmra.mxu0 %v3905
    %v3978 = vpop.f32.mrf.mxu0
    %v3979 = vadd.f32 0.0, %v3978
    %v3980 = vpop.f32.mrf.mxu0
    %3981 = vdwg.mxu0
    %v3982 = vadd.f32 %v3855, %v3974
    %v3983 = vadd.f32 %v3860, %v3979
    %v3984 = vsel %vm291, %v3982, inf
    %3985 = vmin.xlane.f32.xlu0 %v3984
    %v3986 = vpop.xlane.xlu0 %3985
    %v3987 = vsel %vm291, %v3983, inf
    %3988 = vmin.xlane.f32.xlu0 %v3987
    %v3989 = vpop.xlane.xlu0 %3988
    %v3990 = vsub.f32 %v3982, %v3986
    %v3991 = vsub.f32 %v3983, %v3989
    %v3992 = vsel %vm291, %v3990, -inf
    %3993 = vmax.xlane.f32.xlu0 %v3992
    %v3994 = vpop.xlane.xlu0 %3993
    %v3995 = vsel %vm291, %v3991, -inf
    %3996 = vmax.xlane.f32.xlu0 %v3995
    %v3997 = vpop.xlane.xlu0 %3996
    %v3998 = vrcp.pop %v3994
    %v3999 = vrcp.pop %v3997
    %v4000 = vmul.f32 %v3990, %v3998
    %v4001 = vmul.f32 %v3991, %v3999
    %v4002 = vsel %vm1506, %v3040, %v3027
    %v4004 = vrot.slane %v4002, 7
    %v4006 = vsel %vm2043, %v2375, %v4004
    %vm4007 = vcmask 41984
    %4008 = vst.msk [vmem:[%s21] sm:$0x3] %vm4007, %v4006
    %4009 = vst.msk [vmem:[#allocation2] sm:$0xff] %vm291, %v4000
    %4010 = vst.msk [vmem:[#allocation2 + $0x8] sm:$0xff] %vm291, %v4001
    // Predicated region
    $region86: #{toy_ac_mem_forward.1} parent=1 // pred_check
      _
    $region87: #{toy_ac_mem_forward.1} parent=1 // pred_check_branch
      %4012 = sbr.rel (0) target = $region89
    $region88: #{toy_ac_mem_forward.1} parent=1 // pred_region
      _
    $region89: #{toy_ac_mem_forward.1} parent=1 // pred_fallthru
      _
    // Predicated region
    $region90: #{toy_ac_mem_forward.1} parent=1 // pred_check
      _
    $region91: #{toy_ac_mem_forward.1} parent=1 // pred_check_branch
      %4014 = sbr.rel (0) target = $region93
    $region92: #{toy_ac_mem_forward.1} parent=1 // pred_region
      %s4016 = ssub.s32 256, 256
      %4017 = vsyncadd [#allocation3], %s4016
      %s4018 = sshll.u32 [#allocation2], 4
      %s4019 = int_to_ptr.vmem [resolvable:$true] %s4018
      %4024 = dma.vmem_to_hbm [thread:$0]  %s4019, 256, %s22, [#allocation3], 128, 128, 8
    $region93: #{toy_ac_mem_forward.1} parent=1 // pred_fallthru
      _
    // Predicated region
    $region94: #{toy_ac_mem_forward.1} parent=1 // pred_check
      _
    $region95: #{toy_ac_mem_forward.1} parent=1 // pred_check_branch
      %4026 = sbr.rel (0) target = $region97
    $region96: #{toy_ac_mem_forward.1} parent=1 // pred_region
      _
    $region97: #{toy_ac_mem_forward.1} parent=1 // pred_fallthru
      _
    // Predicated region
    $region98: #{toy_ac_mem_forward.1} parent=1 // pred_check
      _
    $region99: #{toy_ac_mem_forward.1} parent=1 // pred_check_branch
      %4028 = sbr.rel (0) target = $region101
    $region100: #{toy_ac_mem_forward.1} parent=1 // pred_region
      %4029 = dma.done [#allocation3], 256
    $region101: #{toy_ac_mem_forward.1} parent=1 // pred_fallthru
      _
    %4030 = vsyncpa [#allocation3], 1

</llo_original>
